<compile_context>
chip_gen: v6e
topology: v6e:2x2x1
jax: 0.10.0
libtpu: 0.0.40
codegen_flags: <defaults>
</compile_context>

<pallas_src>
import numpy as np
import jax
import jax.numpy as jnp
from jax.experimental import pallas as pl
from jax.experimental.pallas import tpu as pltpu

_LANES = 128
_PREC = jax.lax.Precision.HIGHEST


def _dot(a, b):
    return jnp.dot(a, b, precision=_PREC, preferred_element_type=jnp.float32)


# ----------------------------------------------------------------------------
# Static helpers (one-time parameter packing, no per-call cost)
# ----------------------------------------------------------------------------
def _nearest_upsample_block(h, w, factor):
    """Batch-free 0/1 selection matrix U with U @ x_flat == nearest-upsample
    of a single (h, w, C) image flattened row-major (exactly one 1.0/row)."""
    ho = np.arange(h * factor)[:, None]
    wo = np.arange(w * factor)[None, :]
    src = ((ho // factor) * w + (wo // factor)).reshape(-1)
    u = np.zeros((h * factor * w * factor, h * w), np.float32)
    u[np.arange(u.shape[0]), src] = 1.0
    return u


def _pack_static(named_arrays):
    """Pack 2-D f32 arrays (cols <= 128) row-wise into ONE lane-padded
    (R, 128) buffer.  Every segment starts at an 8-aligned row so all
    in-kernel slices are sublane-aligned.  Returns (packed, {name: row})."""
    chunks, offsets, cur = [], {}, 0
    for name, arr in named_arrays:
        a = np.asarray(arr, np.float32)
        if a.ndim == 1:
            a = a[None, :]
        r, c = a.shape
        assert c <= _LANES
        offsets[name] = cur
        pad = np.zeros((r, _LANES), np.float32)
        pad[:, :c] = a
        chunks.append(pad)
        cur += r
        fill = (-cur) % 8
        if fill:
            chunks.append(np.zeros((fill, _LANES), np.float32))
            cur += fill
    return jnp.asarray(np.concatenate(chunks, axis=0)), offsets


def prepare_generator(params, cfg, temp=1.0):
    """Fold temp/mf/lf into weights, fuse per-level matmuls, build batch-free
    upsample blocks and pack everything into one static (R,128) buffer."""
    B, Z, C = cfg["B"], cfg["Z"], cfg["C"]
    scale, level_repeat = cfg["scale"], cfg["level_repeat"]
    temp = float(temp)
    levels = params["levels"]
    n_blocks = len(levels)

    sizes, ups_after, h = [], [], scale
    for idx in range(n_blocks):
        sizes.append(h)
        up = (idx + 1) % level_repeat == 0 and idx < n_blocks - 1
        ups_after.append(up)
        if up:
            h *= 2
    # decoder consumes results[-1] == activation entering the last level, so
    # the last level's sample/block never reaches the output -> skip it.
    n_used = n_blocks - 1
    final_size = sizes[n_blocks - 1]

    f32 = lambda x: np.asarray(x, np.float32)
    named = [
        ("fm",   temp * f32(params["first_mean"])),              # temp*first_mean
        ("fstd", temp * np.exp(f32(params["first_logvar"]))),    # temp*exp(logvar)
        ("wf",   f32(params["w_first"])),
        ("bf",   f32(params["b_first"])),
    ]
    log_temp = float(np.log(temp))
    level_meta, eps_cur = [], 8          # eps row 0 = eps0; next segment 8-aligned
    for idx in range(n_used):
        lp = levels[idx]
        mf, lf = float(lp["mf"]), float(lp["lf"])
        wm, bm = f32(lp["wm"]), f32(lp["bm"])
        wl, bl = f32(lp["wl"]), f32(lp["bl"])
        wmod, bmod = f32(lp["wmod"]), f32(lp["bmod"])
        wblk, bblk = f32(lp["wblk"]), f32(lp["bblk"])
        # one head push: x @ [wm*temp*mf | wl*lf | wblk]
        w1 = np.concatenate([wm * (temp * mf), wl * lf, wblk], axis=1)
        b1 = np.concatenate([bm * (temp * mf), bl * lf + log_temp, bblk], axis=1)
        # folded residual: relu(x@wblk + bblk + smp@(wmod@wblk) + bmod@wblk)
        w2 = wmod @ wblk
        b2 = bmod @ wblk
        named += [(f"w1_{idx}", w1), (f"b1_{idx}", b1),
                  (f"w2_{idx}", w2), (f"b2_{idx}", b2)]
        if ups_after[idx]:
            named.append((f"u_{idx}",
                          _nearest_upsample_block(sizes[idx], sizes[idx], 2)))
        n = sizes[idx] * sizes[idx]
        level_meta.append(dict(idx=idx, n=n, eps=eps_cur, up=ups_after[idx]))
        eps_cur += -(-n // 8) * 8

    out_ch = int(np.asarray(params["w_dec"]).shape[1])
    wd = np.zeros((C, _LANES), np.float32); wd[:, :out_ch] = f32(params["w_dec"])
    bd = np.zeros((1, _LANES), np.float32); bd[:, :out_ch] = f32(params["b_dec"])
    named += [("wd", wd), ("bd", bd)]

    packed_w, w_off = _pack_static(named)
    for lv in level_meta:
        i = lv["idx"]
        lv.update(w1=w_off[f"w1_{i}"], b1=w_off[f"b1_{i}"],
                  w2=w_off[f"w2_{i}"], b2=w_off[f"b2_{i}"],
                  u=w_off[f"u_{i}"] if lv["up"] else None)

    return dict(B=B, Z=Z, C=C, scale=scale, n_used=n_used,
                final_size=final_size, out_ch=out_ch,
                packed_w=packed_w, w_off=w_off,
                levels=level_meta, R_eps=eps_cur)


# ----------------------------------------------------------------------------
# Fused forward: one pallas_call for the whole generator, grid over batch
# ----------------------------------------------------------------------------
def _build_kernel(prep):
    Z, C, scale = prep["Z"], prep["C"], prep["scale"]
    off, levels = prep["w_off"], prep["levels"]

    def kernel(eps_ref, w_ref, o_ref):
        # first prior sample (temp folded into fm / fstd at prep time)
        fm = w_ref[off["fm"]:off["fm"] + 1, :Z]
        fstd = w_ref[off["fstd"]:off["fstd"] + 1, :Z]
        s0 = fm + fstd * eps_ref[0:1, :]                       # (1, Z)
        # view(B,C,1,1) + nearest interpolate(scale) == sublane broadcast
        s0 = jnp.broadcast_to(s0, (scale * scale, Z))
        wf = w_ref[off["wf"]:off["wf"] + Z, :C]
        bf = w_ref[off["bf"]:off["bf"] + 1, :C]
        x = _dot(s0, wf) + bf                                  # (scale*scale, C)

        # hierarchical levels — unrolled, 2 dependent MXU pushes per level
        for lv in levels:
            n = lv["n"]
            w1 = w_ref[lv["w1"]:lv["w1"] + C, :2 * Z + C]      # [wm' | wl' | wblk]
            b1 = w_ref[lv["b1"]:lv["b1"] + 1, :2 * Z + C]
            heads = _dot(x, w1) + b1                           # (n, 2Z+C)
            eps_l = eps_ref[lv["eps"]:lv["eps"] + n, :]        # (n, Z)
            smp = heads[:, :Z] + jnp.exp(heads[:, Z:2 * Z]) * eps_l   # rsample
            w2 = w_ref[lv["w2"]:lv["w2"] + Z, :C]              # wmod @ wblk
            b2 = w_ref[lv["b2"]:lv["b2"] + 1, :C]              # bmod @ wblk
            x = jnp.maximum(heads[:, 2 * Z:] + _dot(smp, w2) + b2, 0.0)
            if lv["up"]:
                u = w_ref[lv["u"]:lv["u"] + 4 * n, :n]         # exact 0/1 2x NN up
                x = _dot(u, x)

        # decoder (lane-padded to 128 for a dense, unmasked store) + clamp
        wd = w_ref[off["wd"]:off["wd"] + C, :]
        bd = w_ref[off["bd"]:off["bd"] + 1, :]
        o_ref[...] = jnp.clip(_dot(x, wd) + bd, 0.0, 1.0)

    return kernel


def _pack_eps(prep, eps0, eps_levels):
    """Interleave eps0 + per-level eps into one per-batch (R_eps, Z) buffer
    (one DMA per grid step; every segment starts at an 8-aligned row)."""
    B, Z = prep["B"], prep["Z"]
    segs = [jnp.pad(eps0.astype(jnp.float32)[:, None, :], ((0, 0), (0, 7), (0, 0)))]
    for lv, e in zip(prep["levels"], eps_levels):
        n = lv["n"]
        seg = e.astype(jnp.float32).reshape(B, n, Z)
        fill = -(-n // 8) * 8 - n
        if fill:
            seg = jnp.pad(seg, ((0, 0), (0, fill), (0, 0)))
        segs.append(seg)
    return jnp.concatenate(segs, axis=1).reshape(B * prep["R_eps"], Z)


def generator_forward(prep, eps0, eps_levels):
    """Whole Generator.forward as ONE fused pallas_call."""
    B, Z = prep["B"], prep["Z"]
    hf = prep["final_size"]
    nf = hf * hf
    r_eps = prep["R_eps"]
    rw = prep["packed_w"].shape[0]
    eps_flat = _pack_eps(prep, eps0, eps_levels)

    out = pl.pallas_call(
        _build_kernel(prep),
        out_shape=jax.ShapeDtypeStruct((B * nf, _LANES), jnp.float32),
        grid=(B,),
        in_specs=[pl.BlockSpec((r_eps, Z), lambda b: (b, 0)),      # per-batch eps
                  pl.BlockSpec((rw, _LANES), lambda b: (0, 0))],   # resident weights
        out_specs=pl.BlockSpec((nf, _LANES), lambda b: (b, 0)),
        compiler_params=pltpu.CompilerParams(
            dimension_semantics=("parallel",),        # both TCs on v7x
            vmem_limit_bytes=32 * 1024 * 1024),
    )(eps_flat, prep["packed_w"])
    out_ch = prep["out_ch"]
    return out[:, :out_ch].reshape(B, hf, hf, out_ch)              # NHWC


# ----------------------------------------------------------------------------
# Pure-JAX reference (same math, no Pallas) for validation.
# ----------------------------------------------------------------------------
def reference_forward(params, eps0, eps_levels, cfg, temp=1.0):
    B, Z, C, scale, level_repeat = (cfg["B"], cfg["Z"], cfg["C"],
                                    cfg["scale"], cfg["level_repeat"])
    rdot = lambda a, b: jnp.dot(a, b, precision=_PREC)
    sample = temp * (params["first_mean"]
                     + jnp.exp(params["first_logvar"]) * eps0)
    out = rdot(sample, params["w_first"]) + params["b_first"]
    x = jnp.broadcast_to(out[:, None, None, :], (B, scale, scale, C))
    H = W = scale
    results = []
    n_blocks = len(params["levels"])
    for idx, lp in enumerate(params["levels"]):
        results.append(x)
        xf = x.reshape(-1, C)
        mean = (rdot(xf, lp["wm"]) + lp["bm"]) * lp["mf"]
        logv = (rdot(xf, lp["wl"]) + lp["bl"]) * lp["lf"]
        s = temp * (mean + jnp.exp(logv) * eps_levels[idx])
        h = xf + (rdot(s, lp["wmod"]) + lp["bmod"])
        y = jnp.maximum(rdot(h, lp["wblk"]) + lp["bblk"], 0.0)
        x = y.reshape(B, H, W, C)
        if (idx + 1) % level_repeat == 0 and idx < n_blocks - 1:
            x = jnp.repeat(jnp.repeat(x, 2, axis=1), 2, axis=2)
            H, W = 2 * H, 2 * W
    fin = results[-1]
    Bf, Hf, Wf, _ = fin.shape
    y = rdot(fin.reshape(-1, C), params["w_dec"]) + params["b_dec"]
    return jnp.clip(y, 0.0, 1.0).reshape(Bf, Hf, Wf, -1)


# ----------------------------------------------------------------------------
if __name__ == "__main__":
    B, Z, C = 2, 8, 32
    SCALE, LEVEL_REPEAT, NUM_BLOCKS = 4, 2, 4
    OUT_CH = 3
    TEMP = 0.9
    cfg = dict(B=B, Z=Z, C=C, scale=SCALE, level_repeat=LEVEL_REPEAT)

    key = jax.random.PRNGKey(0)

    def normal(k, shape, s=0.05):
        return (s * jax.random.normal(k, shape)).astype(jnp.float32)

    keys = jax.random.split(key, 8 + 8 * NUM_BLOCKS + NUM_BLOCKS + 2)
    ki = iter(range(len(keys)))

    params = {
        "first_mean": normal(keys[next(ki)], (1, Z), 0.1),
        "first_logvar": normal(keys[next(ki)], (1, Z), 0.1),
        "w_first": normal(keys[next(ki)], (Z, C)),
        "b_first": normal(keys[next(ki)], (1, C)),
        "w_dec": normal(keys[next(ki)], (C, OUT_CH)),
        "b_dec": normal(keys[next(ki)], (1, OUT_CH), 0.2),
        "levels": [],
    }
    for idx in range(NUM_BLOCKS):
        params["levels"].append({
            "wm": normal(keys[next(ki)], (C, Z)),
            "bm": normal(keys[next(ki)], (1, Z)),
            "wl": normal(keys[next(ki)], (C, Z)),
            "bl": normal(keys[next(ki)], (1, Z)),
            "wmod": normal(keys[next(ki)], (Z, C)),
            "bmod": normal(keys[next(ki)], (1, C)),
            "wblk": normal(keys[next(ki)], (C, C)),
            "bblk": normal(keys[next(ki)], (1, C)),
            "mf": 1.0,
            "lf": 0.1 * (idx + 1),
        })

    # spatial size seen by each level block
    sizes, H = [], SCALE
    for idx in range(NUM_BLOCKS):
        sizes.append(H)
        if (idx + 1) % LEVEL_REPEAT == 0 and idx < NUM_BLOCKS - 1:
            H *= 2

    eps0 = jax.random.normal(keys[next(ki)], (B, Z)).astype(jnp.float32)
    eps_levels = []
    for idx in range(NUM_BLOCKS):
        s = sizes[idx]
        eps_levels.append(
            jax.random.normal(keys[next(ki)], (B * s * s, Z)).astype(jnp.float32))

    prep = prepare_generator(params, cfg, temp=TEMP)
    img = generator_forward(prep, eps0, eps_levels)
    img = jax.block_until_ready(img)

    ref = reference_forward(params, eps0, eps_levels, cfg, temp=TEMP)
    np.testing.assert_allclose(np.asarray(img), np.asarray(ref),
                               rtol=1e-3, atol=1e-3)
    assert img.shape == (B, sizes[-1], sizes[-1], OUT_CH)
    assert bool(jnp.all(jnp.isfinite(img)))
    assert bool(jnp.all((img >= 0.0) & (img <= 1.0)))

    print("KERNEL_OK")
</pallas_src>

<mosaic_0001>
module attributes {stable_mosaic.version = 11 : i64} {
  func.func @kernel(%arg0: i32, %arg1: memref<104x8xf32, #tpu.memory_space<vmem>>, %arg2: memref<304x128xf32, #tpu.memory_space<vmem>>, %arg3: memref<64x128xf32, #tpu.memory_space<vmem>>) attributes {dimension_semantics = [#tpu.dimension_semantics<parallel>], iteration_bounds = array<i64: 2>, scalar_prefetch = 0 : i64, scratch_operands = 0 : i64, tpu.core_type = #tpu.core_type<tc>, window_params = [{transform_indices = @transform_0, window_bounds = array<i64: 104, 8>}, {pipeline_mode = #tpu.pipeline_mode<synchronous>, transform_indices = @transform_1, window_bounds = array<i64: 304, 128>}, {transform_indices = @transform_2, window_bounds = array<i64: 64, 128>}]} {
    %c0 = arith.constant 0 : index
    %c0_0 = arith.constant 0 : index
    %0 = vector.load %arg2[%c0, %c0_0] : memref<304x128xf32, #tpu.memory_space<vmem>>, vector<1x8xf32>
    %c8 = arith.constant 8 : index
    %c0_1 = arith.constant 0 : index
    %1 = vector.load %arg2[%c8, %c0_1] : memref<304x128xf32, #tpu.memory_space<vmem>>, vector<1x8xf32>
    %c0_2 = arith.constant 0 : index
    %c0_3 = arith.constant 0 : index
    %2 = vector.load %arg1[%c0_2, %c0_3] : memref<104x8xf32, #tpu.memory_space<vmem>>, vector<1x8xf32>
    %3 = arith.mulf %1, %2 : vector<1x8xf32>
    %4 = arith.addf %0, %3 : vector<1x8xf32>
    %5 = vector.shape_cast %4 : vector<1x8xf32> to vector<1x8xf32>
    %6 = vector.broadcast %5 : vector<1x8xf32> to vector<16x8xf32>
    %c16 = arith.constant 16 : index
    %c0_4 = arith.constant 0 : index
    %7 = vector.load %arg2[%c16, %c0_4] : memref<304x128xf32, #tpu.memory_space<vmem>>, vector<8x32xf32>
    %c24 = arith.constant 24 : index
    %c0_5 = arith.constant 0 : index
    %8 = vector.load %arg2[%c24, %c0_5] : memref<304x128xf32, #tpu.memory_space<vmem>>, vector<1x32xf32>
    %cst = arith.constant dense<0.000000e+00> : vector<16x32xf32>
    %9 = tpu.matmul %6, %7, %cst {dimension_numbers = #tpu.dot_dimension_numbers<[1], [0], [0], [1], [0, 0, 1, 1], [], []>, precision = #tpu.contract_precision<fp32>} : vector<16x8xf32>, vector<8x32xf32>, vector<16x32xf32> -> vector<16x32xf32>
    %10 = vector.broadcast %8 : vector<1x32xf32> to vector<16x32xf32>
    %11 = arith.addf %9, %10 : vector<16x32xf32>
    %c32 = arith.constant 32 : index
    %c0_6 = arith.constant 0 : index
    %12 = vector.load %arg2[%c32, %c0_6] : memref<304x128xf32, #tpu.memory_space<vmem>>, vector<32x48xf32>
    %c64 = arith.constant 64 : index
    %c0_7 = arith.constant 0 : index
    %13 = vector.load %arg2[%c64, %c0_7] : memref<304x128xf32, #tpu.memory_space<vmem>>, vector<1x48xf32>
    %cst_8 = arith.constant dense<0.000000e+00> : vector<16x48xf32>
    %14 = tpu.matmul %11, %12, %cst_8 {dimension_numbers = #tpu.dot_dimension_numbers<[1], [0], [0], [1], [0, 0, 1, 1], [], []>, precision = #tpu.contract_precision<fp32>} : vector<16x32xf32>, vector<32x48xf32>, vector<16x48xf32> -> vector<16x48xf32>
    %15 = vector.broadcast %13 : vector<1x48xf32> to vector<16x48xf32>
    %16 = arith.addf %14, %15 : vector<16x48xf32>
    %c8_9 = arith.constant 8 : index
    %c0_10 = arith.constant 0 : index
    %17 = vector.load %arg1[%c8_9, %c0_10] : memref<104x8xf32, #tpu.memory_space<vmem>>, vector<16x8xf32>
    %18 = vector.extract_strided_slice %16 {offsets = [0, 0], sizes = [16, 8], strides = [1, 1]} : vector<16x48xf32> to vector<16x8xf32>
    %19 = vector.extract_strided_slice %16 {offsets = [0, 8], sizes = [16, 8], strides = [1, 1]} : vector<16x48xf32> to vector<16x8xf32>
    %20 = math.exp %19 : vector<16x8xf32>
    %21 = arith.mulf %20, %17 : vector<16x8xf32>
    %22 = arith.addf %18, %21 : vector<16x8xf32>
    %c72 = arith.constant 72 : index
    %c0_11 = arith.constant 0 : index
    %23 = vector.load %arg2[%c72, %c0_11] : memref<304x128xf32, #tpu.memory_space<vmem>>, vector<8x32xf32>
    %c80 = arith.constant 80 : index
    %c0_12 = arith.constant 0 : index
    %24 = vector.load %arg2[%c80, %c0_12] : memref<304x128xf32, #tpu.memory_space<vmem>>, vector<1x32xf32>
    %25 = vector.extract_strided_slice %16 {offsets = [0, 16], sizes = [16, 32], strides = [1, 1]} : vector<16x48xf32> to vector<16x32xf32>
    %cst_13 = arith.constant dense<0.000000e+00> : vector<16x32xf32>
    %26 = tpu.matmul %22, %23, %cst_13 {dimension_numbers = #tpu.dot_dimension_numbers<[1], [0], [0], [1], [0, 0, 1, 1], [], []>, precision = #tpu.contract_precision<fp32>} : vector<16x8xf32>, vector<8x32xf32>, vector<16x32xf32> -> vector<16x32xf32>
    %27 = arith.addf %25, %26 : vector<16x32xf32>
    %28 = vector.broadcast %24 : vector<1x32xf32> to vector<16x32xf32>
    %29 = arith.addf %27, %28 : vector<16x32xf32>
    %cst_14 = arith.constant 0.000000e+00 : f32
    %30 = vector.broadcast %cst_14 : f32 to vector<16x32xf32>
    %31 = arith.maximumf %29, %30 : vector<16x32xf32>
    %c88 = arith.constant 88 : index
    %c0_15 = arith.constant 0 : index
    %32 = vector.load %arg2[%c88, %c0_15] : memref<304x128xf32, #tpu.memory_space<vmem>>, vector<32x48xf32>
    %c120 = arith.constant 120 : index
    %c0_16 = arith.constant 0 : index
    %33 = vector.load %arg2[%c120, %c0_16] : memref<304x128xf32, #tpu.memory_space<vmem>>, vector<1x48xf32>
    %cst_17 = arith.constant dense<0.000000e+00> : vector<16x48xf32>
    %34 = tpu.matmul %31, %32, %cst_17 {dimension_numbers = #tpu.dot_dimension_numbers<[1], [0], [0], [1], [0, 0, 1, 1], [], []>, precision = #tpu.contract_precision<fp32>} : vector<16x32xf32>, vector<32x48xf32>, vector<16x48xf32> -> vector<16x48xf32>
    %35 = vector.broadcast %33 : vector<1x48xf32> to vector<16x48xf32>
    %36 = arith.addf %34, %35 : vector<16x48xf32>
    %c24_18 = arith.constant 24 : index
    %c0_19 = arith.constant 0 : index
    %37 = vector.load %arg1[%c24_18, %c0_19] : memref<104x8xf32, #tpu.memory_space<vmem>>, vector<16x8xf32>
    %38 = vector.extract_strided_slice %36 {offsets = [0, 0], sizes = [16, 8], strides = [1, 1]} : vector<16x48xf32> to vector<16x8xf32>
    %39 = vector.extract_strided_slice %36 {offsets = [0, 8], sizes = [16, 8], strides = [1, 1]} : vector<16x48xf32> to vector<16x8xf32>
    %40 = math.exp %39 : vector<16x8xf32>
    %41 = arith.mulf %40, %37 : vector<16x8xf32>
    %42 = arith.addf %38, %41 : vector<16x8xf32>
    %c128 = arith.constant 128 : index
    %c0_20 = arith.constant 0 : index
    %43 = vector.load %arg2[%c128, %c0_20] : memref<304x128xf32, #tpu.memory_space<vmem>>, vector<8x32xf32>
    %c136 = arith.constant 136 : index
    %c0_21 = arith.constant 0 : index
    %44 = vector.load %arg2[%c136, %c0_21] : memref<304x128xf32, #tpu.memory_space<vmem>>, vector<1x32xf32>
    %45 = vector.extract_strided_slice %36 {offsets = [0, 16], sizes = [16, 32], strides = [1, 1]} : vector<16x48xf32> to vector<16x32xf32>
    %cst_22 = arith.constant dense<0.000000e+00> : vector<16x32xf32>
    %46 = tpu.matmul %42, %43, %cst_22 {dimension_numbers = #tpu.dot_dimension_numbers<[1], [0], [0], [1], [0, 0, 1, 1], [], []>, precision = #tpu.contract_precision<fp32>} : vector<16x8xf32>, vector<8x32xf32>, vector<16x32xf32> -> vector<16x32xf32>
    %47 = arith.addf %45, %46 : vector<16x32xf32>
    %48 = vector.broadcast %44 : vector<1x32xf32> to vector<16x32xf32>
    %49 = arith.addf %47, %48 : vector<16x32xf32>
    %cst_23 = arith.constant 0.000000e+00 : f32
    %50 = vector.broadcast %cst_23 : f32 to vector<16x32xf32>
    %51 = arith.maximumf %49, %50 : vector<16x32xf32>
    %c144 = arith.constant 144 : index
    %c0_24 = arith.constant 0 : index
    %52 = vector.load %arg2[%c144, %c0_24] : memref<304x128xf32, #tpu.memory_space<vmem>>, vector<64x16xf32>
    %cst_25 = arith.constant dense<0.000000e+00> : vector<64x32xf32>
    %53 = tpu.matmul %52, %51, %cst_25 {dimension_numbers = #tpu.dot_dimension_numbers<[1], [0], [0], [1], [0, 0, 1, 1], [], []>, precision = #tpu.contract_precision<fp32>} : vector<64x16xf32>, vector<16x32xf32>, vector<64x32xf32> -> vector<64x32xf32>
    %c208 = arith.constant 208 : index
    %c0_26 = arith.constant 0 : index
    %54 = vector.load %arg2[%c208, %c0_26] : memref<304x128xf32, #tpu.memory_space<vmem>>, vector<32x48xf32>
    %c240 = arith.constant 240 : index
    %c0_27 = arith.constant 0 : index
    %55 = vector.load %arg2[%c240, %c0_27] : memref<304x128xf32, #tpu.memory_space<vmem>>, vector<1x48xf32>
    %cst_28 = arith.constant dense<0.000000e+00> : vector<64x48xf32>
    %56 = tpu.matmul %53, %54, %cst_28 {dimension_numbers = #tpu.dot_dimension_numbers<[1], [0], [0], [1], [0, 0, 1, 1], [], []>, precision = #tpu.contract_precision<fp32>} : vector<64x32xf32>, vector<32x48xf32>, vector<64x48xf32> -> vector<64x48xf32>
    %57 = vector.broadcast %55 : vector<1x48xf32> to vector<64x48xf32>
    %58 = arith.addf %56, %57 : vector<64x48xf32>
    %c40 = arith.constant 40 : index
    %c0_29 = arith.constant 0 : index
    %59 = vector.load %arg1[%c40, %c0_29] : memref<104x8xf32, #tpu.memory_space<vmem>>, vector<64x8xf32>
    %60 = vector.extract_strided_slice %58 {offsets = [0, 0], sizes = [64, 8], strides = [1, 1]} : vector<64x48xf32> to vector<64x8xf32>
    %61 = vector.extract_strided_slice %58 {offsets = [0, 8], sizes = [64, 8], strides = [1, 1]} : vector<64x48xf32> to vector<64x8xf32>
    %62 = math.exp %61 : vector<64x8xf32>
    %63 = arith.mulf %62, %59 : vector<64x8xf32>
    %64 = arith.addf %60, %63 : vector<64x8xf32>
    %c248 = arith.constant 248 : index
    %c0_30 = arith.constant 0 : index
    %65 = vector.load %arg2[%c248, %c0_30] : memref<304x128xf32, #tpu.memory_space<vmem>>, vector<8x32xf32>
    %c256 = arith.constant 256 : index
    %c0_31 = arith.constant 0 : index
    %66 = vector.load %arg2[%c256, %c0_31] : memref<304x128xf32, #tpu.memory_space<vmem>>, vector<1x32xf32>
    %67 = vector.extract_strided_slice %58 {offsets = [0, 16], sizes = [64, 32], strides = [1, 1]} : vector<64x48xf32> to vector<64x32xf32>
    %cst_32 = arith.constant dense<0.000000e+00> : vector<64x32xf32>
    %68 = tpu.matmul %64, %65, %cst_32 {dimension_numbers = #tpu.dot_dimension_numbers<[1], [0], [0], [1], [0, 0, 1, 1], [], []>, precision = #tpu.contract_precision<fp32>} : vector<64x8xf32>, vector<8x32xf32>, vector<64x32xf32> -> vector<64x32xf32>
    %69 = arith.addf %67, %68 : vector<64x32xf32>
    %70 = vector.broadcast %66 : vector<1x32xf32> to vector<64x32xf32>
    %71 = arith.addf %69, %70 : vector<64x32xf32>
    %cst_33 = arith.constant 0.000000e+00 : f32
    %72 = vector.broadcast %cst_33 : f32 to vector<64x32xf32>
    %73 = arith.maximumf %71, %72 : vector<64x32xf32>
    %c264 = arith.constant 264 : index
    %c0_34 = arith.constant 0 : index
    %74 = vector.load %arg2[%c264, %c0_34] : memref<304x128xf32, #tpu.memory_space<vmem>>, vector<32x128xf32>
    %c296 = arith.constant 296 : index
    %c0_35 = arith.constant 0 : index
    %75 = vector.load %arg2[%c296, %c0_35] : memref<304x128xf32, #tpu.memory_space<vmem>>, vector<1x128xf32>
    %cst_36 = arith.constant dense<0.000000e+00> : vector<64x128xf32>
    %76 = tpu.matmul %73, %74, %cst_36 {dimension_numbers = #tpu.dot_dimension_numbers<[1], [0], [0], [1], [0, 0, 1, 1], [], []>, precision = #tpu.contract_precision<fp32>} : vector<64x32xf32>, vector<32x128xf32>, vector<64x128xf32> -> vector<64x128xf32>
    %77 = vector.broadcast %75 : vector<1x128xf32> to vector<64x128xf32>
    %78 = arith.addf %76, %77 : vector<64x128xf32>
    %cst_37 = arith.constant 0.000000e+00 : f32
    %cst_38 = arith.constant 1.000000e+00 : f32
    %79 = vector.broadcast %cst_37 : f32 to vector<64x128xf32>
    %80 = arith.maximumf %79, %78 : vector<64x128xf32>
    %81 = vector.broadcast %cst_38 : f32 to vector<64x128xf32>
    %82 = arith.minimumf %81, %80 : vector<64x128xf32>
    %c0_39 = arith.constant 0 : index
    %c0_40 = arith.constant 0 : index
    %83 = vector.load %arg3[%c0_39, %c0_40] : memref<64x128xf32, #tpu.memory_space<vmem>>, vector<64x128xf32>
    tpu.vector_store %arg3[%c0_39, %c0_40], %82 {strides = array<i32>} : memref<64x128xf32, #tpu.memory_space<vmem>>, vector<64x128xf32>,
    return
  }
  func.func @transform_0(%arg0: i32) -> (i32, i32) {
    %c0_i32 = arith.constant 0 : i32
    %c0_i32_0 = arith.constant 0 : i32
    return %arg0, %c0_i32 : i32, i32
  }
  func.func @transform_1(%arg0: i32) -> (i32, i32) {
    %c0_i32 = arith.constant 0 : i32
    %c0_i32_0 = arith.constant 0 : i32
    %c0_i32_1 = arith.constant 0 : i32
    return %c0_i32, %c0_i32_0 : i32, i32
  }
  func.func @transform_2(%arg0: i32) -> (i32, i32) {
    %c0_i32 = arith.constant 0 : i32
    %c0_i32_0 = arith.constant 0 : i32
    return %arg0, %c0_i32 : i32, i32
  }
}

</mosaic_0001>

<llo_original>
// kernel: tpu_custom_call.1
$region0: #{tpu_custom_call.1}
  #allocation0 [shape = 'u32[]', space=smem, size = 0x4, offset = 0x4, fixed_abs, tag = 'smem constant byte address 0x4 - core index']
  #allocation1 [shape = 'u32[144,128]{1,0:T(1,128)}', space=vmem, size = 0x12000, scoped, tag = 'internal scratch']
  %s0 = inlined_call_operand.vmem [shape: f32[208,8], index: 0, kind: input, shape index: {}]
  %s1 = inlined_call_operand.hbm [shape: f32[304,128], index: 1, kind: input, shape index: {}]
  %s2 = inlined_call_operand.hbm [shape: f32[128,128], index: 2, kind: output, shape index: {}]
  %s3 = sld [smem:[#allocation0]]
  $region45: #{tpu_custom_call.1} parent=0
    _
  %s5 = ssub.s32 1, %s3
  %s6 = scalar_select 0, %s5, %s3
  $region1: #{tpu_custom_call.1} parent=0
    #allocation2 [shape = 'u8[155648]{0}', space=vmem, size = 0x26000, scoped, tag = 'input window, operand 1, single buffered']
    #allocation3 [shape = 's32[2]{0}', space=sflag, size = 0x8, scoped, tag = 'scoped memory for tpu_custom_call.1']
    #allocation4 [shape = 's32[2]{0}', space=sflag, size = 0x8, scoped, tag = 'scoped memory for tpu_custom_call.1']
    #allocation5 [shape = 'u8[65536]{0}', space=vmem, size = 0x10000, scoped, tag = 'output window, operand 0']
    %7 = vsyncpa [#allocation3], 0
    %8 = vsyncpa [#allocation4], 0
    %s9 = scalar_lea.sflag [#allocation4], 1
    %10 = vsyncpa %s9, 0
    loop: start=0, step=1, limit=4
    $region2: #{tpu_custom_call.1} parent=1 // loop_pre_header
      _
    $region3: #{tpu_custom_call.1} parent=1 // loop_header
      %s12 = sphi 0, %s16
      %p13 = scmp.ge.s32.totalorder %s12, 4
      %s22 = sphi 0, %s24
      %s25 = sphi 0, %s22
      %s26 = sphi 0, %s25
      %s42 = sphi 0, %s26
      %s46 = sphi 0, %s46
      %s48 = sphi 0, %s46
      %s49 = sphi 0, %s48
      %s63 = sphi 0, %s49
      %s69 = sphi 0, %s71
      %s72 = sphi 0, %s69
      %s73 = sphi 0, %s72
      %s89 = sphi 0, %s73
    $region4: #{tpu_custom_call.1} parent=1 // loop_header_branch
      %15 = sbr.rel (%p13) target = $region8
    $region5: #{tpu_custom_call.1} parent=1 // loop_body
      %s17 = ssub.s32 %s12, 1
      %s18 = ssub.s32 %s12, 2
      %s19 = sadd.s32 %s12, 1
      %s20 = ssub.s32 %s12, %s19
      %p21 = scmp.eq.s32.totalorder %s20, 0
      %s23 = sadd.s32 %s22, 1
      %s24 = scalar_select %p21, %s22, %s23
      %p27 = pneg %p21
      %p28 = scmp.eq.s32.totalorder %s12, 1
      %p29 = por %p27, %p28
      %p30 = scmp.ne.s32.totalorder %s22, %s25
      %p31 = scmp.eq.s32.totalorder %s12, 0
      %p32 = por %p30, %p31
      %p33 = scmp.ne.s32.totalorder %s22, %s25
      %p34 = scmp.eq.s32.totalorder %s17, 1
      %p35 = por %p33, %p34
      %p36 = scmp.ne.s32.totalorder %s25, %s26
      %p37 = scmp.eq.s32.totalorder %s17, 0
      %p38 = por %p36, %p37
      %p39 = scmp.ne.s32.totalorder %s25, %s26
      %p40 = scmp.eq.s32.totalorder %s18, 1
      %p41 = por %p39, %p40
      %p43 = scmp.ne.s32.totalorder %s26, %s42
      %p44 = scmp.eq.s32.totalorder %s18, 0
      %p45 = por %p43, %p44
      %s47 = sadd.s32 %s46, 1
      %p50 = scmp.eq.s32.totalorder %s12, 1
      %p51 = scmp.ne.s32.totalorder %s46, %s48
      %p52 = scmp.eq.s32.totalorder %s12, 0
      %p53 = por %p51, %p52
      %p54 = scmp.ne.s32.totalorder %s46, %s48
      %p55 = scmp.eq.s32.totalorder %s17, 1
      %p56 = por %p54, %p55
      %p57 = scmp.ne.s32.totalorder %s48, %s49
      %p58 = scmp.eq.s32.totalorder %s17, 0
      %p59 = por %p57, %p58
      %p60 = scmp.ne.s32.totalorder %s48, %s49
      %p61 = scmp.eq.s32.totalorder %s18, 1
      %p62 = por %p60, %p61
      %p64 = scmp.ne.s32.totalorder %s49, %s63
      %p65 = scmp.eq.s32.totalorder %s18, 0
      %p66 = por %p64, %p65
      %s67 = ssub.s32 %s12, %s19
      %p68 = scmp.eq.s32.totalorder %s67, 0
      %s70 = sadd.s32 %s69, 1
      %s71 = scalar_select %p68, %s69, %s70
      %p74 = pneg %p68
      %p75 = scmp.eq.s32.totalorder %s12, 1
      %p76 = por %p74, %p75
      %p77 = scmp.ne.s32.totalorder %s69, %s72
      %p78 = scmp.eq.s32.totalorder %s12, 0
      %p79 = por %p77, %p78
      %p80 = scmp.ne.s32.totalorder %s69, %s72
      %p81 = scmp.eq.s32.totalorder %s17, 1
      %p82 = por %p80, %p81
      %p83 = scmp.ne.s32.totalorder %s72, %s73
      %p84 = scmp.eq.s32.totalorder %s17, 0
      %p85 = por %p83, %p84
      %p86 = scmp.ne.s32.totalorder %s72, %s73
      %p87 = scmp.eq.s32.totalorder %s18, 1
      %p88 = por %p86, %p87
      %p90 = scmp.ne.s32.totalorder %s73, %s89
      %p91 = scmp.eq.s32.totalorder %s18, 0
      %p92 = por %p90, %p91
      %p93 = scmp.le.s32.totalorder 1, %s12
      %p94 = scmp.lt.s32.totalorder %s12, 3
      %p95 = pnand %p93, %p94
      %p96 = pneg %p95
      // Predicated region
      $region9: #{tpu_custom_call.1} parent=5 // pred_check
        _
      $region10: #{tpu_custom_call.1} parent=5 // pred_check_branch
        %98 = sbr.rel (%p95) target = $region12
      $region11: #{tpu_custom_call.1} parent=5 // pred_region
        %s99 = ssub.s32 %s12, 1
        // Predicated region
        $region13: #{tpu_custom_call.1} parent=11 // pred_check
          %p100 = pneg %p59
        $region14: #{tpu_custom_call.1} parent=11 // pred_check_branch
          %102 = sbr.rel (%p100) target = $region16
        $region15: #{tpu_custom_call.1} parent=11 // pred_region
          %s104 = ssub.s32 4864, 4864
          %105 = vsyncadd [#allocation3], %s104
          %s106 = sshll.u32 [#allocation2], 4
          %s107 = int_to_ptr.vmem [resolvable:$true] %s106
          %112 = dma.hbm_to_vmem [thread:$0]  %s1, 4864, %s107, [#allocation3], 128, 128, 8
        $region16: #{tpu_custom_call.1} parent=11 // pred_fallthru
          _
      $region12: #{tpu_custom_call.1} parent=5 // pred_fallthru
        _
      %p113 = scmp.lt.s32.totalorder %s12, 2
      // Predicated region
      $region17: #{tpu_custom_call.1} parent=5 // pred_check
        %p114 = pneg %p113
      $region18: #{tpu_custom_call.1} parent=5 // pred_check_branch
        %116 = sbr.rel (%p114) target = $region20
      $region19: #{tpu_custom_call.1} parent=5 // pred_region
        // Predicated region
        $region21: #{tpu_custom_call.1} parent=19 // pred_check
          %p117 = pneg %p32
        $region22: #{tpu_custom_call.1} parent=19 // pred_check_branch
          %119 = sbr.rel (%p117) target = $region24
        $region23: #{tpu_custom_call.1} parent=19 // pred_region
          %s120 = smul.u32 13, %s12
          %p121 = scmp.lt.s32.totalorder %s120, 25
          %s122 = scalar_select %p121, %s120, 25
          %s123 = smul.addr %s122, 8
          %s124 = scalar_lea.vmem %s0, %s123
          %s125 = smul.u32 13, %s12
        $region24: #{tpu_custom_call.1} parent=19 // pred_fallthru
          _
      $region20: #{tpu_custom_call.1} parent=5 // pred_fallthru
        _
      %p126 = scmp.le.s32.totalorder 1, %s12
      %p127 = scmp.lt.s32.totalorder %s12, 3
      %p128 = pnand %p126, %p127
      %p129 = pneg %p128
      // Predicated region
      $region25: #{tpu_custom_call.1} parent=5 // pred_check
        _
      $region26: #{tpu_custom_call.1} parent=5 // pred_check_branch
        %131 = sbr.rel (%p128) target = $region28
      $region27: #{tpu_custom_call.1} parent=5 // pred_region
        %s132 = ssub.s32 %s12, 1
        // Predicated region
        $region29: #{tpu_custom_call.1} parent=27 // pred_check
          %p133 = pneg %p59
        $region30: #{tpu_custom_call.1} parent=27 // pred_check_branch
          %135 = sbr.rel (%p133) target = $region32
        $region31: #{tpu_custom_call.1} parent=27 // pred_region
          %136 = dma.done [#allocation3], 4864
        $region32: #{tpu_custom_call.1} parent=27 // pred_fallthru
          _
        %s137 = smul.u32 13, %s17
        %p138 = scmp.lt.s32.totalorder %s137, 25
        %s139 = scalar_select %p138, %s137, 25
        %s140 = smul.addr %s139, 8
        %s141 = scalar_lea.vmem %s0, %s140
        %p142 = pneg %p38
        %p143 = pneg %p35
        %p144 = pneg %p59
        %p145 = pneg %p56
        %p146 = pneg %p85
        %p147 = pneg %p82
        %s148 = sand.u32 %s72, 1
        %s149 = scalar_lea.sflag [#allocation4], %s148
        %s150 = sand.u32 %s72, 1
        %s151 = smul.addr %s150, 64
        %s152 = scalar_lea.vmem [#allocation5], %s151
        %s153 = smul.u32 13, %s17
        %p154 = scmp.lt.s32.totalorder %s153, 25
        %s155 = scalar_select %p154, %s153, 25
        %s156 = smul.addr %s155, 8
        %s157 = scalar_lea.vmem %s0, %s156
        %s158 = smul.u32 13, %s17
        %s159 = smul.u32 8, %s17
        %v160 = vld [vmem:[#allocation2] sm:$0x1]
        %v161 = vld [vmem:[#allocation2 + $0x8] sm:$0x1]
        %v162 = vld [vmem:[%s157] sm:$0x1]
        %v163 = vmul.f32 %v161, %v162
        %v164 = vadd.f32 %v160, %v163
        %v165 = vlaneseq
        %v166 = vshrl.u32 %v165, 7
        %v167 = vsub.s32 0, %v166
        %v168 = vrot.slane %v164, %v167
        %v169 = vld [vmem:[#allocation2 + $0x10] sm:$0xff]
        %v170 = vld [vmem:[#allocation2 + $0x18] sm:$0x1]
        %v171 = vlaneseq
        %v172 = vshrl.u32 %v171, 7
        %v173 = vsub.s32 0, %v172
        %v174 = vrot.slane %v170, %v173
        %vm176 = vcmask 64512
        %v177 = vsel %vm176, %v168, 0
        %179 = vmatprep.subr.mxu0 0.0
        %180 = vmatpush1.msra.mxu0 0.0
        %181 = vmatprep.subr.mxu0 0.0
        %182 = vmatpush1.msra.mxu0 0.0
        %183 = vmatprep.subr.mxu0 0.0
        %184 = vmatpush1.msra.mxu0 0.0
        %185 = vmatprep.subr.mxu0 0.0
        %186 = vmatpush1.msra.mxu0 0.0
        %187 = vmatprep.subr.mxu0 0.0
        %188 = vmatpush1.msra.mxu0 0.0
        %189 = vmatprep.subr.mxu0 0.0
        %190 = vmatpush1.msra.mxu0 0.0
        %191 = vmatprep.subr.mxu0 0.0
        %192 = vmatpush1.msra.mxu0 0.0
        %193 = vmatprep.subr.mxu0 0.0
        %194 = vmatpush1.msra.mxu0 0.0
        %195 = vmatprep.subr.mxu0 0.0
        %196 = vmatpush1.msra.mxu0 0.0
        %197 = vmatprep.subr.mxu0 0.0
        %198 = vmatpush1.msra.mxu0 0.0
        %199 = vmatprep.subr.mxu0 0.0
        %200 = vmatpush1.msra.mxu0 0.0
        %201 = vmatprep.subr.mxu0 0.0
        %202 = vmatpush1.msra.mxu0 0.0
        %203 = vmatprep.subr.mxu0 0.0
        %204 = vmatpush1.msra.mxu0 0.0
        %205 = vmatprep.subr.mxu0 0.0
        %206 = vmatpush1.msra.mxu0 0.0
        %207 = vmatprep.subr.mxu0 0.0
        %208 = vmatpush1.msra.mxu0 0.0
        %209 = vmatprep.subr.mxu0 0.0
        %v210 = vand.u32 %v169, 4294901760
        %211 = vmatpush1.msra.mxu0 %v210
        %212 = vmatprep.subr.mxu0 0.0
        %213 = vmatpush2.msra.mxu0 0.0
        %214 = vmatprep.subr.mxu0 0.0
        %215 = vmatpush2.msra.mxu0 0.0
        %216 = vmatprep.subr.mxu0 0.0
        %217 = vmatpush2.msra.mxu0 0.0
        %218 = vmatprep.subr.mxu0 0.0
        %219 = vmatpush2.msra.mxu0 0.0
        %220 = vmatprep.subr.mxu0 0.0
        %221 = vmatpush2.msra.mxu0 0.0
        %222 = vmatprep.subr.mxu0 0.0
        %223 = vmatpush2.msra.mxu0 0.0
        %224 = vmatprep.subr.mxu0 0.0
        %225 = vmatpush2.msra.mxu0 0.0
        %226 = vmatprep.subr.mxu0 0.0
        %227 = vmatpush2.msra.mxu0 0.0
        %228 = vmatprep.subr.mxu0 0.0
        %229 = vmatpush2.msra.mxu0 0.0
        %230 = vmatprep.subr.mxu0 0.0
        %231 = vmatpush2.msra.mxu0 0.0
        %232 = vmatprep.subr.mxu0 0.0
        %233 = vmatpush2.msra.mxu0 0.0
        %234 = vmatprep.subr.mxu0 0.0
        %235 = vmatpush2.msra.mxu0 0.0
        %236 = vmatprep.subr.mxu0 0.0
        %237 = vmatpush2.msra.mxu0 0.0
        %238 = vmatprep.subr.mxu0 0.0
        %239 = vmatpush2.msra.mxu0 0.0
        %240 = vmatprep.subr.mxu0 0.0
        %241 = vmatpush2.msra.mxu0 0.0
        %242 = vmatprep.subr.mxu0 0.0
        %243 = vmatpush2.msra.mxu0 0.0
        %244 = vmatprep.mubr.f32.mxu0 0.0
        %v245 = vand.u32 %v177, 4294901760
        %v246 = vsub.f32 %v177, %v245
        %v247 = vand.u32 %v246, 4294901760
        %v248 = vsub.f32 %v246, %v247
        %v249 = vand.u32 %v248, 4294901760
        %250 = vmatmul.mubr.f32.gmra.mxu0 %v249
        %v251 = vpop.f32.mrf.mxu0
        %v252 = vadd.f32 %v174, %v251
        %v253 = vpop.f32.mrf.mxu0
        %254 = vmatprep.mubr.f32.mxu0 0.0
        %v255 = vand.u32 %v177, 4294901760
        %v256 = vsub.f32 %v177, %v255
        %v257 = vand.u32 %v256, 4294901760
        %v258 = vsub.f32 %v256, %v257
        %v259 = vand.u32 %v258, 4294901760
        %260 = vmatmul.mubr.f32.gmra.mxu0 %v259
        %v261 = vpop.f32.mrf.mxu0
        %v262 = vadd.f32 %v174, %v261
        %v263 = vpop.f32.mrf.mxu0
        %264 = vdwg.mxu0
        %265 = vmatprep.subr.mxu0 0.0
        %266 = vmatpush1.msra.mxu0 0.0
        %267 = vmatprep.subr.mxu0 0.0
        %268 = vmatpush1.msra.mxu0 0.0
        %269 = vmatprep.subr.mxu0 0.0
        %270 = vmatpush1.msra.mxu0 0.0
        %271 = vmatprep.subr.mxu0 0.0
        %272 = vmatpush1.msra.mxu0 0.0
        %273 = vmatprep.subr.mxu0 0.0
        %274 = vmatpush1.msra.mxu0 0.0
        %275 = vmatprep.subr.mxu0 0.0
        %276 = vmatpush1.msra.mxu0 0.0
        %277 = vmatprep.subr.mxu0 0.0
        %278 = vmatpush1.msra.mxu0 0.0
        %279 = vmatprep.subr.mxu0 0.0
        %280 = vmatpush1.msra.mxu0 0.0
        %281 = vmatprep.subr.mxu0 0.0
        %282 = vmatpush1.msra.mxu0 0.0
        %283 = vmatprep.subr.mxu0 0.0
        %284 = vmatpush1.msra.mxu0 0.0
        %285 = vmatprep.subr.mxu0 0.0
        %286 = vmatpush1.msra.mxu0 0.0
        %287 = vmatprep.subr.mxu0 0.0
        %288 = vmatpush1.msra.mxu0 0.0
        %289 = vmatprep.subr.mxu0 0.0
        %290 = vmatpush1.msra.mxu0 0.0
        %291 = vmatprep.subr.mxu0 0.0
        %292 = vmatpush1.msra.mxu0 0.0
        %293 = vmatprep.subr.mxu0 0.0
        %294 = vmatpush1.msra.mxu0 0.0
        %295 = vmatprep.subr.mxu0 0.0
        %v296 = vand.u32 %v169, 4294901760
        %v297 = vsub.f32 %v169, %v296
        %v298 = vand.u32 %v297, 4294901760
        %v299 = vsub.f32 %v297, %v298
        %v300 = vand.u32 %v299, 4294901760
        %301 = vmatpush1.msra.mxu0 %v300
        %302 = vmatprep.subr.mxu0 0.0
        %303 = vmatpush2.msra.mxu0 0.0
        %304 = vmatprep.subr.mxu0 0.0
        %305 = vmatpush2.msra.mxu0 0.0
        %306 = vmatprep.subr.mxu0 0.0
        %307 = vmatpush2.msra.mxu0 0.0
        %308 = vmatprep.subr.mxu0 0.0
        %309 = vmatpush2.msra.mxu0 0.0
        %310 = vmatprep.subr.mxu0 0.0
        %311 = vmatpush2.msra.mxu0 0.0
        %312 = vmatprep.subr.mxu0 0.0
        %313 = vmatpush2.msra.mxu0 0.0
        %314 = vmatprep.subr.mxu0 0.0
        %315 = vmatpush2.msra.mxu0 0.0
        %316 = vmatprep.subr.mxu0 0.0
        %317 = vmatpush2.msra.mxu0 0.0
        %318 = vmatprep.subr.mxu0 0.0
        %319 = vmatpush2.msra.mxu0 0.0
        %320 = vmatprep.subr.mxu0 0.0
        %321 = vmatpush2.msra.mxu0 0.0
        %322 = vmatprep.subr.mxu0 0.0
        %323 = vmatpush2.msra.mxu0 0.0
        %324 = vmatprep.subr.mxu0 0.0
        %325 = vmatpush2.msra.mxu0 0.0
        %326 = vmatprep.subr.mxu0 0.0
        %327 = vmatpush2.msra.mxu0 0.0
        %328 = vmatprep.subr.mxu0 0.0
        %329 = vmatpush2.msra.mxu0 0.0
        %330 = vmatprep.subr.mxu0 0.0
        %331 = vmatpush2.msra.mxu0 0.0
        %332 = vmatprep.subr.mxu0 0.0
        %333 = vmatpush2.msra.mxu0 0.0
        %334 = vmatprep.mubr.f32.mxu0 0.0
        %v335 = vand.u32 %v177, 4294901760
        %336 = vmatmul.mubr.f32.gmra.mxu0 %v335
        %v337 = vpop.f32.mrf.mxu0
        %v338 = vadd.f32 %v252, %v337
        %v339 = vpop.f32.mrf.mxu0
        %340 = vmatprep.mubr.f32.mxu0 0.0
        %v341 = vand.u32 %v177, 4294901760
        %342 = vmatmul.mubr.f32.gmra.mxu0 %v341
        %v343 = vpop.f32.mrf.mxu0
        %v344 = vadd.f32 %v262, %v343
        %v345 = vpop.f32.mrf.mxu0
        %346 = vdwg.mxu0
        %347 = vmatprep.subr.mxu0 0.0
        %348 = vmatpush1.msra.mxu0 0.0
        %349 = vmatprep.subr.mxu0 0.0
        %350 = vmatpush1.msra.mxu0 0.0
        %351 = vmatprep.subr.mxu0 0.0
        %352 = vmatpush1.msra.mxu0 0.0
        %353 = vmatprep.subr.mxu0 0.0
        %354 = vmatpush1.msra.mxu0 0.0
        %355 = vmatprep.subr.mxu0 0.0
        %356 = vmatpush1.msra.mxu0 0.0
        %357 = vmatprep.subr.mxu0 0.0
        %358 = vmatpush1.msra.mxu0 0.0
        %359 = vmatprep.subr.mxu0 0.0
        %360 = vmatpush1.msra.mxu0 0.0
        %361 = vmatprep.subr.mxu0 0.0
        %362 = vmatpush1.msra.mxu0 0.0
        %363 = vmatprep.subr.mxu0 0.0
        %364 = vmatpush1.msra.mxu0 0.0
        %365 = vmatprep.subr.mxu0 0.0
        %366 = vmatpush1.msra.mxu0 0.0
        %367 = vmatprep.subr.mxu0 0.0
        %368 = vmatpush1.msra.mxu0 0.0
        %369 = vmatprep.subr.mxu0 0.0
        %370 = vmatpush1.msra.mxu0 0.0
        %371 = vmatprep.subr.mxu0 0.0
        %372 = vmatpush1.msra.mxu0 0.0
        %373 = vmatprep.subr.mxu0 0.0
        %374 = vmatpush1.msra.mxu0 0.0
        %375 = vmatprep.subr.mxu0 0.0
        %376 = vmatpush1.msra.mxu0 0.0
        %377 = vmatprep.subr.mxu0 0.0
        %v378 = vand.u32 %v169, 4294901760
        %v379 = vsub.f32 %v169, %v378
        %380 = vmatpush1.msra.mxu0 %v379
        %381 = vmatprep.subr.mxu0 0.0
        %382 = vmatpush2.msra.mxu0 0.0
        %383 = vmatprep.subr.mxu0 0.0
        %384 = vmatpush2.msra.mxu0 0.0
        %385 = vmatprep.subr.mxu0 0.0
        %386 = vmatpush2.msra.mxu0 0.0
        %387 = vmatprep.subr.mxu0 0.0
        %388 = vmatpush2.msra.mxu0 0.0
        %389 = vmatprep.subr.mxu0 0.0
        %390 = vmatpush2.msra.mxu0 0.0
        %391 = vmatprep.subr.mxu0 0.0
        %392 = vmatpush2.msra.mxu0 0.0
        %393 = vmatprep.subr.mxu0 0.0
        %394 = vmatpush2.msra.mxu0 0.0
        %395 = vmatprep.subr.mxu0 0.0
        %396 = vmatpush2.msra.mxu0 0.0
        %397 = vmatprep.subr.mxu0 0.0
        %398 = vmatpush2.msra.mxu0 0.0
        %399 = vmatprep.subr.mxu0 0.0
        %400 = vmatpush2.msra.mxu0 0.0
        %401 = vmatprep.subr.mxu0 0.0
        %402 = vmatpush2.msra.mxu0 0.0
        %403 = vmatprep.subr.mxu0 0.0
        %404 = vmatpush2.msra.mxu0 0.0
        %405 = vmatprep.subr.mxu0 0.0
        %406 = vmatpush2.msra.mxu0 0.0
        %407 = vmatprep.subr.mxu0 0.0
        %408 = vmatpush2.msra.mxu0 0.0
        %409 = vmatprep.subr.mxu0 0.0
        %410 = vmatpush2.msra.mxu0 0.0
        %411 = vmatprep.subr.mxu0 0.0
        %412 = vmatpush2.msra.mxu0 0.0
        %413 = vmatprep.mubr.f32.mxu0 0.0
        %v414 = vand.u32 %v177, 4294901760
        %v415 = vsub.f32 %v177, %v414
        %416 = vmatmul.mubr.f32.gmra.mxu0 %v415
        %v417 = vpop.f32.mrf.mxu0
        %v418 = vadd.f32 %v338, %v417
        %v419 = vpop.f32.mrf.mxu0
        %420 = vmatprep.mubr.f32.mxu0 0.0
        %v421 = vand.u32 %v177, 4294901760
        %v422 = vsub.f32 %v177, %v421
        %423 = vmatmul.mubr.f32.gmra.mxu0 %v422
        %v424 = vpop.f32.mrf.mxu0
        %v425 = vadd.f32 %v344, %v424
        %v426 = vpop.f32.mrf.mxu0
        %427 = vdwg.mxu0
        %428 = vmatprep.subr.mxu0 0.0
        %429 = vmatpush1.msra.mxu0 0.0
        %430 = vmatprep.subr.mxu0 0.0
        %431 = vmatpush1.msra.mxu0 0.0
        %432 = vmatprep.subr.mxu0 0.0
        %433 = vmatpush1.msra.mxu0 0.0
        %434 = vmatprep.subr.mxu0 0.0
        %435 = vmatpush1.msra.mxu0 0.0
        %436 = vmatprep.subr.mxu0 0.0
        %437 = vmatpush1.msra.mxu0 0.0
        %438 = vmatprep.subr.mxu0 0.0
        %439 = vmatpush1.msra.mxu0 0.0
        %440 = vmatprep.subr.mxu0 0.0
        %441 = vmatpush1.msra.mxu0 0.0
        %442 = vmatprep.subr.mxu0 0.0
        %443 = vmatpush1.msra.mxu0 0.0
        %444 = vmatprep.subr.mxu0 0.0
        %445 = vmatpush1.msra.mxu0 0.0
        %446 = vmatprep.subr.mxu0 0.0
        %447 = vmatpush1.msra.mxu0 0.0
        %448 = vmatprep.subr.mxu0 0.0
        %449 = vmatpush1.msra.mxu0 0.0
        %450 = vmatprep.subr.mxu0 0.0
        %451 = vmatpush1.msra.mxu0 0.0
        %452 = vmatprep.subr.mxu0 0.0
        %453 = vmatpush1.msra.mxu0 0.0
        %454 = vmatprep.subr.mxu0 0.0
        %455 = vmatpush1.msra.mxu0 0.0
        %456 = vmatprep.subr.mxu0 0.0
        %457 = vmatpush1.msra.mxu0 0.0
        %458 = vmatprep.subr.mxu0 0.0
        %v459 = vand.u32 %v169, 4294901760
        %460 = vmatpush1.msra.mxu0 %v459
        %461 = vmatprep.subr.mxu0 0.0
        %462 = vmatpush2.msra.mxu0 0.0
        %463 = vmatprep.subr.mxu0 0.0
        %464 = vmatpush2.msra.mxu0 0.0
        %465 = vmatprep.subr.mxu0 0.0
        %466 = vmatpush2.msra.mxu0 0.0
        %467 = vmatprep.subr.mxu0 0.0
        %468 = vmatpush2.msra.mxu0 0.0
        %469 = vmatprep.subr.mxu0 0.0
        %470 = vmatpush2.msra.mxu0 0.0
        %471 = vmatprep.subr.mxu0 0.0
        %472 = vmatpush2.msra.mxu0 0.0
        %473 = vmatprep.subr.mxu0 0.0
        %474 = vmatpush2.msra.mxu0 0.0
        %475 = vmatprep.subr.mxu0 0.0
        %476 = vmatpush2.msra.mxu0 0.0
        %477 = vmatprep.subr.mxu0 0.0
        %478 = vmatpush2.msra.mxu0 0.0
        %479 = vmatprep.subr.mxu0 0.0
        %480 = vmatpush2.msra.mxu0 0.0
        %481 = vmatprep.subr.mxu0 0.0
        %482 = vmatpush2.msra.mxu0 0.0
        %483 = vmatprep.subr.mxu0 0.0
        %484 = vmatpush2.msra.mxu0 0.0
        %485 = vmatprep.subr.mxu0 0.0
        %486 = vmatpush2.msra.mxu0 0.0
        %487 = vmatprep.subr.mxu0 0.0
        %488 = vmatpush2.msra.mxu0 0.0
        %489 = vmatprep.subr.mxu0 0.0
        %490 = vmatpush2.msra.mxu0 0.0
        %491 = vmatprep.subr.mxu0 0.0
        %492 = vmatpush2.msra.mxu0 0.0
        %493 = vmatprep.mubr.f32.mxu0 0.0
        %v494 = vand.u32 %v177, 4294901760
        %v495 = vsub.f32 %v177, %v494
        %v496 = vand.u32 %v495, 4294901760
        %497 = vmatmul.mubr.f32.gmra.mxu0 %v496
        %v498 = vpop.f32.mrf.mxu0
        %v499 = vadd.f32 %v418, %v498
        %v500 = vpop.f32.mrf.mxu0
        %501 = vmatprep.mubr.f32.mxu0 0.0
        %v502 = vand.u32 %v177, 4294901760
        %v503 = vsub.f32 %v177, %v502
        %v504 = vand.u32 %v503, 4294901760
        %505 = vmatmul.mubr.f32.gmra.mxu0 %v504
        %v506 = vpop.f32.mrf.mxu0
        %v507 = vadd.f32 %v425, %v506
        %v508 = vpop.f32.mrf.mxu0
        %509 = vdwg.mxu0
        %510 = vmatprep.subr.mxu0 0.0
        %511 = vmatpush1.msra.mxu0 0.0
        %512 = vmatprep.subr.mxu0 0.0
        %513 = vmatpush1.msra.mxu0 0.0
        %514 = vmatprep.subr.mxu0 0.0
        %515 = vmatpush1.msra.mxu0 0.0
        %516 = vmatprep.subr.mxu0 0.0
        %517 = vmatpush1.msra.mxu0 0.0
        %518 = vmatprep.subr.mxu0 0.0
        %519 = vmatpush1.msra.mxu0 0.0
        %520 = vmatprep.subr.mxu0 0.0
        %521 = vmatpush1.msra.mxu0 0.0
        %522 = vmatprep.subr.mxu0 0.0
        %523 = vmatpush1.msra.mxu0 0.0
        %524 = vmatprep.subr.mxu0 0.0
        %525 = vmatpush1.msra.mxu0 0.0
        %526 = vmatprep.subr.mxu0 0.0
        %527 = vmatpush1.msra.mxu0 0.0
        %528 = vmatprep.subr.mxu0 0.0
        %529 = vmatpush1.msra.mxu0 0.0
        %530 = vmatprep.subr.mxu0 0.0
        %531 = vmatpush1.msra.mxu0 0.0
        %532 = vmatprep.subr.mxu0 0.0
        %533 = vmatpush1.msra.mxu0 0.0
        %534 = vmatprep.subr.mxu0 0.0
        %535 = vmatpush1.msra.mxu0 0.0
        %536 = vmatprep.subr.mxu0 0.0
        %537 = vmatpush1.msra.mxu0 0.0
        %538 = vmatprep.subr.mxu0 0.0
        %539 = vmatpush1.msra.mxu0 0.0
        %540 = vmatprep.subr.mxu0 0.0
        %v541 = vand.u32 %v169, 4294901760
        %v542 = vsub.f32 %v169, %v541
        %v543 = vand.u32 %v542, 4294901760
        %544 = vmatpush1.msra.mxu0 %v543
        %545 = vmatprep.subr.mxu0 0.0
        %546 = vmatpush2.msra.mxu0 0.0
        %547 = vmatprep.subr.mxu0 0.0
        %548 = vmatpush2.msra.mxu0 0.0
        %549 = vmatprep.subr.mxu0 0.0
        %550 = vmatpush2.msra.mxu0 0.0
        %551 = vmatprep.subr.mxu0 0.0
        %552 = vmatpush2.msra.mxu0 0.0
        %553 = vmatprep.subr.mxu0 0.0
        %554 = vmatpush2.msra.mxu0 0.0
        %555 = vmatprep.subr.mxu0 0.0
        %556 = vmatpush2.msra.mxu0 0.0
        %557 = vmatprep.subr.mxu0 0.0
        %558 = vmatpush2.msra.mxu0 0.0
        %559 = vmatprep.subr.mxu0 0.0
        %560 = vmatpush2.msra.mxu0 0.0
        %561 = vmatprep.subr.mxu0 0.0
        %562 = vmatpush2.msra.mxu0 0.0
        %563 = vmatprep.subr.mxu0 0.0
        %564 = vmatpush2.msra.mxu0 0.0
        %565 = vmatprep.subr.mxu0 0.0
        %566 = vmatpush2.msra.mxu0 0.0
        %567 = vmatprep.subr.mxu0 0.0
        %568 = vmatpush2.msra.mxu0 0.0
        %569 = vmatprep.subr.mxu0 0.0
        %570 = vmatpush2.msra.mxu0 0.0
        %571 = vmatprep.subr.mxu0 0.0
        %572 = vmatpush2.msra.mxu0 0.0
        %573 = vmatprep.subr.mxu0 0.0
        %574 = vmatpush2.msra.mxu0 0.0
        %575 = vmatprep.subr.mxu0 0.0
        %576 = vmatpush2.msra.mxu0 0.0
        %577 = vmatprep.mubr.f32.mxu0 0.0
        %v578 = vand.u32 %v177, 4294901760
        %579 = vmatmul.mubr.f32.gmra.mxu0 %v578
        %v580 = vpop.f32.mrf.mxu0
        %v581 = vadd.f32 %v499, %v580
        %v582 = vpop.f32.mrf.mxu0
        %583 = vmatprep.mubr.f32.mxu0 0.0
        %v584 = vand.u32 %v177, 4294901760
        %585 = vmatmul.mubr.f32.gmra.mxu0 %v584
        %v586 = vpop.f32.mrf.mxu0
        %v587 = vadd.f32 %v507, %v586
        %v588 = vpop.f32.mrf.mxu0
        %589 = vdwg.mxu0
        %590 = vmatprep.subr.mxu0 0.0
        %591 = vmatpush1.msra.mxu0 0.0
        %592 = vmatprep.subr.mxu0 0.0
        %593 = vmatpush1.msra.mxu0 0.0
        %594 = vmatprep.subr.mxu0 0.0
        %595 = vmatpush1.msra.mxu0 0.0
        %596 = vmatprep.subr.mxu0 0.0
        %597 = vmatpush1.msra.mxu0 0.0
        %598 = vmatprep.subr.mxu0 0.0
        %599 = vmatpush1.msra.mxu0 0.0
        %600 = vmatprep.subr.mxu0 0.0
        %601 = vmatpush1.msra.mxu0 0.0
        %602 = vmatprep.subr.mxu0 0.0
        %603 = vmatpush1.msra.mxu0 0.0
        %604 = vmatprep.subr.mxu0 0.0
        %605 = vmatpush1.msra.mxu0 0.0
        %606 = vmatprep.subr.mxu0 0.0
        %607 = vmatpush1.msra.mxu0 0.0
        %608 = vmatprep.subr.mxu0 0.0
        %609 = vmatpush1.msra.mxu0 0.0
        %610 = vmatprep.subr.mxu0 0.0
        %611 = vmatpush1.msra.mxu0 0.0
        %612 = vmatprep.subr.mxu0 0.0
        %613 = vmatpush1.msra.mxu0 0.0
        %614 = vmatprep.subr.mxu0 0.0
        %615 = vmatpush1.msra.mxu0 0.0
        %616 = vmatprep.subr.mxu0 0.0
        %617 = vmatpush1.msra.mxu0 0.0
        %618 = vmatprep.subr.mxu0 0.0
        %619 = vmatpush1.msra.mxu0 0.0
        %620 = vmatprep.subr.mxu0 0.0
        %v621 = vand.u32 %v169, 4294901760
        %622 = vmatpush1.msra.mxu0 %v621
        %623 = vmatprep.subr.mxu0 0.0
        %624 = vmatpush2.msra.mxu0 0.0
        %625 = vmatprep.subr.mxu0 0.0
        %626 = vmatpush2.msra.mxu0 0.0
        %627 = vmatprep.subr.mxu0 0.0
        %628 = vmatpush2.msra.mxu0 0.0
        %629 = vmatprep.subr.mxu0 0.0
        %630 = vmatpush2.msra.mxu0 0.0
        %631 = vmatprep.subr.mxu0 0.0
        %632 = vmatpush2.msra.mxu0 0.0
        %633 = vmatprep.subr.mxu0 0.0
        %634 = vmatpush2.msra.mxu0 0.0
        %635 = vmatprep.subr.mxu0 0.0
        %636 = vmatpush2.msra.mxu0 0.0
        %637 = vmatprep.subr.mxu0 0.0
        %638 = vmatpush2.msra.mxu0 0.0
        %639 = vmatprep.subr.mxu0 0.0
        %640 = vmatpush2.msra.mxu0 0.0
        %641 = vmatprep.subr.mxu0 0.0
        %642 = vmatpush2.msra.mxu0 0.0
        %643 = vmatprep.subr.mxu0 0.0
        %644 = vmatpush2.msra.mxu0 0.0
        %645 = vmatprep.subr.mxu0 0.0
        %646 = vmatpush2.msra.mxu0 0.0
        %647 = vmatprep.subr.mxu0 0.0
        %648 = vmatpush2.msra.mxu0 0.0
        %649 = vmatprep.subr.mxu0 0.0
        %650 = vmatpush2.msra.mxu0 0.0
        %651 = vmatprep.subr.mxu0 0.0
        %652 = vmatpush2.msra.mxu0 0.0
        %653 = vmatprep.subr.mxu0 0.0
        %654 = vmatpush2.msra.mxu0 0.0
        %655 = vmatprep.mubr.f32.mxu0 0.0
        %v656 = vand.u32 %v177, 4294901760
        %657 = vmatmul.mubr.f32.gmra.mxu0 %v656
        %v658 = vpop.f32.mrf.mxu0
        %v659 = vadd.f32 %v581, %v658
        %v660 = vpop.f32.mrf.mxu0
        %661 = vmatprep.mubr.f32.mxu0 0.0
        %v662 = vand.u32 %v177, 4294901760
        %663 = vmatmul.mubr.f32.gmra.mxu0 %v662
        %v664 = vpop.f32.mrf.mxu0
        %v665 = vadd.f32 %v587, %v664
        %v666 = vpop.f32.mrf.mxu0
        %667 = vdwg.mxu0
        %v668 = vld [vmem:[#allocation2 + $0x20] sm:$0xff]
        %v669 = vld [vmem:[#allocation2 + $0x28] sm:$0xff]
        %v670 = vld [vmem:[#allocation2 + $0x30] sm:$0xff]
        %v671 = vld [vmem:[#allocation2 + $0x38] sm:$0xff]
        %v672 = vld [vmem:[#allocation2 + $0x40] sm:$0x1]
        %v673 = vlaneseq
        %v674 = vshrl.u32 %v673, 7
        %v675 = vsub.s32 0, %v674
        %v676 = vrot.slane %v672, %v675
        %vm677 = vcmask 261120
        %v679 = vsel %vm677, %v659, 0
        %v682 = vsel %vm677, %v665, 0
        %684 = vmatprep.subr.mxu0 0.0
        %685 = vmatpush1.msra.mxu0 0.0
        %686 = vmatprep.subr.mxu0 0.0
        %687 = vmatpush1.msra.mxu0 0.0
        %688 = vmatprep.subr.mxu0 0.0
        %689 = vmatpush1.msra.mxu0 0.0
        %690 = vmatprep.subr.mxu0 0.0
        %691 = vmatpush1.msra.mxu0 0.0
        %692 = vmatprep.subr.mxu0 0.0
        %693 = vmatpush1.msra.mxu0 0.0
        %694 = vmatprep.subr.mxu0 0.0
        %695 = vmatpush1.msra.mxu0 0.0
        %696 = vmatprep.subr.mxu0 0.0
        %697 = vmatpush1.msra.mxu0 0.0
        %698 = vmatprep.subr.mxu0 0.0
        %699 = vmatpush1.msra.mxu0 0.0
        %700 = vmatprep.subr.mxu0 0.0
        %701 = vmatpush1.msra.mxu0 0.0
        %702 = vmatprep.subr.mxu0 0.0
        %703 = vmatpush1.msra.mxu0 0.0
        %704 = vmatprep.subr.mxu0 0.0
        %705 = vmatpush1.msra.mxu0 0.0
        %706 = vmatprep.subr.mxu0 0.0
        %707 = vmatpush1.msra.mxu0 0.0
        %708 = vmatprep.subr.mxu0 0.0
        %v709 = vand.u32 %v671, 4294901760
        %710 = vmatpush1.msra.mxu0 %v709
        %711 = vmatprep.subr.mxu0 0.0
        %v712 = vand.u32 %v670, 4294901760
        %713 = vmatpush1.msra.mxu0 %v712
        %714 = vmatprep.subr.mxu0 0.0
        %v715 = vand.u32 %v669, 4294901760
        %716 = vmatpush1.msra.mxu0 %v715
        %717 = vmatprep.subr.mxu0 0.0
        %v718 = vand.u32 %v668, 4294901760
        %719 = vmatpush1.msra.mxu0 %v718
        %720 = vmatprep.subr.mxu0 0.0
        %721 = vmatpush2.msra.mxu0 0.0
        %722 = vmatprep.subr.mxu0 0.0
        %723 = vmatpush2.msra.mxu0 0.0
        %724 = vmatprep.subr.mxu0 0.0
        %725 = vmatpush2.msra.mxu0 0.0
        %726 = vmatprep.subr.mxu0 0.0
        %727 = vmatpush2.msra.mxu0 0.0
        %728 = vmatprep.subr.mxu0 0.0
        %729 = vmatpush2.msra.mxu0 0.0
        %730 = vmatprep.subr.mxu0 0.0
        %731 = vmatpush2.msra.mxu0 0.0
        %732 = vmatprep.subr.mxu0 0.0
        %733 = vmatpush2.msra.mxu0 0.0
        %734 = vmatprep.subr.mxu0 0.0
        %735 = vmatpush2.msra.mxu0 0.0
        %736 = vmatprep.subr.mxu0 0.0
        %737 = vmatpush2.msra.mxu0 0.0
        %738 = vmatprep.subr.mxu0 0.0
        %739 = vmatpush2.msra.mxu0 0.0
        %740 = vmatprep.subr.mxu0 0.0
        %741 = vmatpush2.msra.mxu0 0.0
        %742 = vmatprep.subr.mxu0 0.0
        %743 = vmatpush2.msra.mxu0 0.0
        %744 = vmatprep.subr.mxu0 0.0
        %745 = vmatpush2.msra.mxu0 0.0
        %746 = vmatprep.subr.mxu0 0.0
        %747 = vmatpush2.msra.mxu0 0.0
        %748 = vmatprep.subr.mxu0 0.0
        %749 = vmatpush2.msra.mxu0 0.0
        %750 = vmatprep.subr.mxu0 0.0
        %751 = vmatpush2.msra.mxu0 0.0
        %752 = vmatprep.mubr.f32.mxu0 0.0
        %v753 = vand.u32 %v679, 4294901760
        %v754 = vsub.f32 %v679, %v753
        %v755 = vand.u32 %v754, 4294901760
        %v756 = vsub.f32 %v754, %v755
        %v757 = vand.u32 %v756, 4294901760
        %758 = vmatmul.mubr.f32.gmra.mxu0 %v757
        %v759 = vpop.f32.mrf.mxu0
        %v760 = vadd.f32 %v676, %v759
        %v761 = vpop.f32.mrf.mxu0
        %762 = vmatprep.mubr.f32.mxu0 0.0
        %v763 = vand.u32 %v682, 4294901760
        %v764 = vsub.f32 %v682, %v763
        %v765 = vand.u32 %v764, 4294901760
        %v766 = vsub.f32 %v764, %v765
        %v767 = vand.u32 %v766, 4294901760
        %768 = vmatmul.mubr.f32.gmra.mxu0 %v767
        %v769 = vpop.f32.mrf.mxu0
        %v770 = vadd.f32 %v676, %v769
        %v771 = vpop.f32.mrf.mxu0
        %772 = vdwg.mxu0
        %773 = vmatprep.subr.mxu0 0.0
        %774 = vmatpush1.msra.mxu0 0.0
        %775 = vmatprep.subr.mxu0 0.0
        %776 = vmatpush1.msra.mxu0 0.0
        %777 = vmatprep.subr.mxu0 0.0
        %778 = vmatpush1.msra.mxu0 0.0
        %779 = vmatprep.subr.mxu0 0.0
        %780 = vmatpush1.msra.mxu0 0.0
        %781 = vmatprep.subr.mxu0 0.0
        %782 = vmatpush1.msra.mxu0 0.0
        %783 = vmatprep.subr.mxu0 0.0
        %784 = vmatpush1.msra.mxu0 0.0
        %785 = vmatprep.subr.mxu0 0.0
        %786 = vmatpush1.msra.mxu0 0.0
        %787 = vmatprep.subr.mxu0 0.0
        %788 = vmatpush1.msra.mxu0 0.0
        %789 = vmatprep.subr.mxu0 0.0
        %790 = vmatpush1.msra.mxu0 0.0
        %791 = vmatprep.subr.mxu0 0.0
        %792 = vmatpush1.msra.mxu0 0.0
        %793 = vmatprep.subr.mxu0 0.0
        %794 = vmatpush1.msra.mxu0 0.0
        %795 = vmatprep.subr.mxu0 0.0
        %796 = vmatpush1.msra.mxu0 0.0
        %797 = vmatprep.subr.mxu0 0.0
        %v798 = vand.u32 %v671, 4294901760
        %v799 = vsub.f32 %v671, %v798
        %v800 = vand.u32 %v799, 4294901760
        %v801 = vsub.f32 %v799, %v800
        %v802 = vand.u32 %v801, 4294901760
        %803 = vmatpush1.msra.mxu0 %v802
        %804 = vmatprep.subr.mxu0 0.0
        %v805 = vand.u32 %v670, 4294901760
        %v806 = vsub.f32 %v670, %v805
        %v807 = vand.u32 %v806, 4294901760
        %v808 = vsub.f32 %v806, %v807
        %v809 = vand.u32 %v808, 4294901760
        %810 = vmatpush1.msra.mxu0 %v809
        %811 = vmatprep.subr.mxu0 0.0
        %v812 = vand.u32 %v669, 4294901760
        %v813 = vsub.f32 %v669, %v812
        %v814 = vand.u32 %v813, 4294901760
        %v815 = vsub.f32 %v813, %v814
        %v816 = vand.u32 %v815, 4294901760
        %817 = vmatpush1.msra.mxu0 %v816
        %818 = vmatprep.subr.mxu0 0.0
        %v819 = vand.u32 %v668, 4294901760
        %v820 = vsub.f32 %v668, %v819
        %v821 = vand.u32 %v820, 4294901760
        %v822 = vsub.f32 %v820, %v821
        %v823 = vand.u32 %v822, 4294901760
        %824 = vmatpush1.msra.mxu0 %v823
        %825 = vmatprep.subr.mxu0 0.0
        %826 = vmatpush2.msra.mxu0 0.0
        %827 = vmatprep.subr.mxu0 0.0
        %828 = vmatpush2.msra.mxu0 0.0
        %829 = vmatprep.subr.mxu0 0.0
        %830 = vmatpush2.msra.mxu0 0.0
        %831 = vmatprep.subr.mxu0 0.0
        %832 = vmatpush2.msra.mxu0 0.0
        %833 = vmatprep.subr.mxu0 0.0
        %834 = vmatpush2.msra.mxu0 0.0
        %835 = vmatprep.subr.mxu0 0.0
        %836 = vmatpush2.msra.mxu0 0.0
        %837 = vmatprep.subr.mxu0 0.0
        %838 = vmatpush2.msra.mxu0 0.0
        %839 = vmatprep.subr.mxu0 0.0
        %840 = vmatpush2.msra.mxu0 0.0
        %841 = vmatprep.subr.mxu0 0.0
        %842 = vmatpush2.msra.mxu0 0.0
        %843 = vmatprep.subr.mxu0 0.0
        %844 = vmatpush2.msra.mxu0 0.0
        %845 = vmatprep.subr.mxu0 0.0
        %846 = vmatpush2.msra.mxu0 0.0
        %847 = vmatprep.subr.mxu0 0.0
        %848 = vmatpush2.msra.mxu0 0.0
        %849 = vmatprep.subr.mxu0 0.0
        %850 = vmatpush2.msra.mxu0 0.0
        %851 = vmatprep.subr.mxu0 0.0
        %852 = vmatpush2.msra.mxu0 0.0
        %853 = vmatprep.subr.mxu0 0.0
        %854 = vmatpush2.msra.mxu0 0.0
        %855 = vmatprep.subr.mxu0 0.0
        %856 = vmatpush2.msra.mxu0 0.0
        %857 = vmatprep.mubr.f32.mxu0 0.0
        %v858 = vand.u32 %v679, 4294901760
        %859 = vmatmul.mubr.f32.gmra.mxu0 %v858
        %v860 = vpop.f32.mrf.mxu0
        %v861 = vadd.f32 %v760, %v860
        %v862 = vpop.f32.mrf.mxu0
        %863 = vmatprep.mubr.f32.mxu0 0.0
        %v864 = vand.u32 %v682, 4294901760
        %865 = vmatmul.mubr.f32.gmra.mxu0 %v864
        %v866 = vpop.f32.mrf.mxu0
        %v867 = vadd.f32 %v770, %v866
        %v868 = vpop.f32.mrf.mxu0
        %869 = vdwg.mxu0
        %870 = vmatprep.subr.mxu0 0.0
        %871 = vmatpush1.msra.mxu0 0.0
        %872 = vmatprep.subr.mxu0 0.0
        %873 = vmatpush1.msra.mxu0 0.0
        %874 = vmatprep.subr.mxu0 0.0
        %875 = vmatpush1.msra.mxu0 0.0
        %876 = vmatprep.subr.mxu0 0.0
        %877 = vmatpush1.msra.mxu0 0.0
        %878 = vmatprep.subr.mxu0 0.0
        %879 = vmatpush1.msra.mxu0 0.0
        %880 = vmatprep.subr.mxu0 0.0
        %881 = vmatpush1.msra.mxu0 0.0
        %882 = vmatprep.subr.mxu0 0.0
        %883 = vmatpush1.msra.mxu0 0.0
        %884 = vmatprep.subr.mxu0 0.0
        %885 = vmatpush1.msra.mxu0 0.0
        %886 = vmatprep.subr.mxu0 0.0
        %887 = vmatpush1.msra.mxu0 0.0
        %888 = vmatprep.subr.mxu0 0.0
        %889 = vmatpush1.msra.mxu0 0.0
        %890 = vmatprep.subr.mxu0 0.0
        %891 = vmatpush1.msra.mxu0 0.0
        %892 = vmatprep.subr.mxu0 0.0
        %893 = vmatpush1.msra.mxu0 0.0
        %894 = vmatprep.subr.mxu0 0.0
        %v895 = vand.u32 %v671, 4294901760
        %v896 = vsub.f32 %v671, %v895
        %897 = vmatpush1.msra.mxu0 %v896
        %898 = vmatprep.subr.mxu0 0.0
        %v899 = vand.u32 %v670, 4294901760
        %v900 = vsub.f32 %v670, %v899
        %901 = vmatpush1.msra.mxu0 %v900
        %902 = vmatprep.subr.mxu0 0.0
        %v903 = vand.u32 %v669, 4294901760
        %v904 = vsub.f32 %v669, %v903
        %905 = vmatpush1.msra.mxu0 %v904
        %906 = vmatprep.subr.mxu0 0.0
        %v907 = vand.u32 %v668, 4294901760
        %v908 = vsub.f32 %v668, %v907
        %909 = vmatpush1.msra.mxu0 %v908
        %910 = vmatprep.subr.mxu0 0.0
        %911 = vmatpush2.msra.mxu0 0.0
        %912 = vmatprep.subr.mxu0 0.0
        %913 = vmatpush2.msra.mxu0 0.0
        %914 = vmatprep.subr.mxu0 0.0
        %915 = vmatpush2.msra.mxu0 0.0
        %916 = vmatprep.subr.mxu0 0.0
        %917 = vmatpush2.msra.mxu0 0.0
        %918 = vmatprep.subr.mxu0 0.0
        %919 = vmatpush2.msra.mxu0 0.0
        %920 = vmatprep.subr.mxu0 0.0
        %921 = vmatpush2.msra.mxu0 0.0
        %922 = vmatprep.subr.mxu0 0.0
        %923 = vmatpush2.msra.mxu0 0.0
        %924 = vmatprep.subr.mxu0 0.0
        %925 = vmatpush2.msra.mxu0 0.0
        %926 = vmatprep.subr.mxu0 0.0
        %927 = vmatpush2.msra.mxu0 0.0
        %928 = vmatprep.subr.mxu0 0.0
        %929 = vmatpush2.msra.mxu0 0.0
        %930 = vmatprep.subr.mxu0 0.0
        %931 = vmatpush2.msra.mxu0 0.0
        %932 = vmatprep.subr.mxu0 0.0
        %933 = vmatpush2.msra.mxu0 0.0
        %934 = vmatprep.subr.mxu0 0.0
        %935 = vmatpush2.msra.mxu0 0.0
        %936 = vmatprep.subr.mxu0 0.0
        %937 = vmatpush2.msra.mxu0 0.0
        %938 = vmatprep.subr.mxu0 0.0
        %939 = vmatpush2.msra.mxu0 0.0
        %940 = vmatprep.subr.mxu0 0.0
        %941 = vmatpush2.msra.mxu0 0.0
        %942 = vmatprep.mubr.f32.mxu0 0.0
        %v943 = vand.u32 %v679, 4294901760
        %v944 = vsub.f32 %v679, %v943
        %945 = vmatmul.mubr.f32.gmra.mxu0 %v944
        %v946 = vpop.f32.mrf.mxu0
        %v947 = vadd.f32 %v861, %v946
        %v948 = vpop.f32.mrf.mxu0
        %949 = vmatprep.mubr.f32.mxu0 0.0
        %v950 = vand.u32 %v682, 4294901760
        %v951 = vsub.f32 %v682, %v950
        %952 = vmatmul.mubr.f32.gmra.mxu0 %v951
        %v953 = vpop.f32.mrf.mxu0
        %v954 = vadd.f32 %v867, %v953
        %v955 = vpop.f32.mrf.mxu0
        %956 = vdwg.mxu0
        %957 = vmatprep.subr.mxu0 0.0
        %958 = vmatpush1.msra.mxu0 0.0
        %959 = vmatprep.subr.mxu0 0.0
        %960 = vmatpush1.msra.mxu0 0.0
        %961 = vmatprep.subr.mxu0 0.0
        %962 = vmatpush1.msra.mxu0 0.0
        %963 = vmatprep.subr.mxu0 0.0
        %964 = vmatpush1.msra.mxu0 0.0
        %965 = vmatprep.subr.mxu0 0.0
        %966 = vmatpush1.msra.mxu0 0.0
        %967 = vmatprep.subr.mxu0 0.0
        %968 = vmatpush1.msra.mxu0 0.0
        %969 = vmatprep.subr.mxu0 0.0
        %970 = vmatpush1.msra.mxu0 0.0
        %971 = vmatprep.subr.mxu0 0.0
        %972 = vmatpush1.msra.mxu0 0.0
        %973 = vmatprep.subr.mxu0 0.0
        %974 = vmatpush1.msra.mxu0 0.0
        %975 = vmatprep.subr.mxu0 0.0
        %976 = vmatpush1.msra.mxu0 0.0
        %977 = vmatprep.subr.mxu0 0.0
        %978 = vmatpush1.msra.mxu0 0.0
        %979 = vmatprep.subr.mxu0 0.0
        %980 = vmatpush1.msra.mxu0 0.0
        %981 = vmatprep.subr.mxu0 0.0
        %v982 = vand.u32 %v671, 4294901760
        %983 = vmatpush1.msra.mxu0 %v982
        %984 = vmatprep.subr.mxu0 0.0
        %v985 = vand.u32 %v670, 4294901760
        %986 = vmatpush1.msra.mxu0 %v985
        %987 = vmatprep.subr.mxu0 0.0
        %v988 = vand.u32 %v669, 4294901760
        %989 = vmatpush1.msra.mxu0 %v988
        %990 = vmatprep.subr.mxu0 0.0
        %v991 = vand.u32 %v668, 4294901760
        %992 = vmatpush1.msra.mxu0 %v991
        %993 = vmatprep.subr.mxu0 0.0
        %994 = vmatpush2.msra.mxu0 0.0
        %995 = vmatprep.subr.mxu0 0.0
        %996 = vmatpush2.msra.mxu0 0.0
        %997 = vmatprep.subr.mxu0 0.0
        %998 = vmatpush2.msra.mxu0 0.0
        %999 = vmatprep.subr.mxu0 0.0
        %1000 = vmatpush2.msra.mxu0 0.0
        %1001 = vmatprep.subr.mxu0 0.0
        %1002 = vmatpush2.msra.mxu0 0.0
        %1003 = vmatprep.subr.mxu0 0.0
        %1004 = vmatpush2.msra.mxu0 0.0
        %1005 = vmatprep.subr.mxu0 0.0
        %1006 = vmatpush2.msra.mxu0 0.0
        %1007 = vmatprep.subr.mxu0 0.0
        %1008 = vmatpush2.msra.mxu0 0.0
        %1009 = vmatprep.subr.mxu0 0.0
        %1010 = vmatpush2.msra.mxu0 0.0
        %1011 = vmatprep.subr.mxu0 0.0
        %1012 = vmatpush2.msra.mxu0 0.0
        %1013 = vmatprep.subr.mxu0 0.0
        %1014 = vmatpush2.msra.mxu0 0.0
        %1015 = vmatprep.subr.mxu0 0.0
        %1016 = vmatpush2.msra.mxu0 0.0
        %1017 = vmatprep.subr.mxu0 0.0
        %1018 = vmatpush2.msra.mxu0 0.0
        %1019 = vmatprep.subr.mxu0 0.0
        %1020 = vmatpush2.msra.mxu0 0.0
        %1021 = vmatprep.subr.mxu0 0.0
        %1022 = vmatpush2.msra.mxu0 0.0
        %1023 = vmatprep.subr.mxu0 0.0
        %1024 = vmatpush2.msra.mxu0 0.0
        %1025 = vmatprep.mubr.f32.mxu0 0.0
        %v1026 = vand.u32 %v679, 4294901760
        %v1027 = vsub.f32 %v679, %v1026
        %v1028 = vand.u32 %v1027, 4294901760
        %1029 = vmatmul.mubr.f32.gmra.mxu0 %v1028
        %v1030 = vpop.f32.mrf.mxu0
        %v1031 = vadd.f32 %v947, %v1030
        %v1032 = vpop.f32.mrf.mxu0
        %1033 = vmatprep.mubr.f32.mxu0 0.0
        %v1034 = vand.u32 %v682, 4294901760
        %v1035 = vsub.f32 %v682, %v1034
        %v1036 = vand.u32 %v1035, 4294901760
        %1037 = vmatmul.mubr.f32.gmra.mxu0 %v1036
        %v1038 = vpop.f32.mrf.mxu0
        %v1039 = vadd.f32 %v954, %v1038
        %v1040 = vpop.f32.mrf.mxu0
        %1041 = vdwg.mxu0
        %1042 = vmatprep.subr.mxu0 0.0
        %1043 = vmatpush1.msra.mxu0 0.0
        %1044 = vmatprep.subr.mxu0 0.0
        %1045 = vmatpush1.msra.mxu0 0.0
        %1046 = vmatprep.subr.mxu0 0.0
        %1047 = vmatpush1.msra.mxu0 0.0
        %1048 = vmatprep.subr.mxu0 0.0
        %1049 = vmatpush1.msra.mxu0 0.0
        %1050 = vmatprep.subr.mxu0 0.0
        %1051 = vmatpush1.msra.mxu0 0.0
        %1052 = vmatprep.subr.mxu0 0.0
        %1053 = vmatpush1.msra.mxu0 0.0
        %1054 = vmatprep.subr.mxu0 0.0
        %1055 = vmatpush1.msra.mxu0 0.0
        %1056 = vmatprep.subr.mxu0 0.0
        %1057 = vmatpush1.msra.mxu0 0.0
        %1058 = vmatprep.subr.mxu0 0.0
        %1059 = vmatpush1.msra.mxu0 0.0
        %1060 = vmatprep.subr.mxu0 0.0
        %1061 = vmatpush1.msra.mxu0 0.0
        %1062 = vmatprep.subr.mxu0 0.0
        %1063 = vmatpush1.msra.mxu0 0.0
        %1064 = vmatprep.subr.mxu0 0.0
        %1065 = vmatpush1.msra.mxu0 0.0
        %1066 = vmatprep.subr.mxu0 0.0
        %v1067 = vand.u32 %v671, 4294901760
        %v1068 = vsub.f32 %v671, %v1067
        %v1069 = vand.u32 %v1068, 4294901760
        %1070 = vmatpush1.msra.mxu0 %v1069
        %1071 = vmatprep.subr.mxu0 0.0
        %v1072 = vand.u32 %v670, 4294901760
        %v1073 = vsub.f32 %v670, %v1072
        %v1074 = vand.u32 %v1073, 4294901760
        %1075 = vmatpush1.msra.mxu0 %v1074
        %1076 = vmatprep.subr.mxu0 0.0
        %v1077 = vand.u32 %v669, 4294901760
        %v1078 = vsub.f32 %v669, %v1077
        %v1079 = vand.u32 %v1078, 4294901760
        %1080 = vmatpush1.msra.mxu0 %v1079
        %1081 = vmatprep.subr.mxu0 0.0
        %v1082 = vand.u32 %v668, 4294901760
        %v1083 = vsub.f32 %v668, %v1082
        %v1084 = vand.u32 %v1083, 4294901760
        %1085 = vmatpush1.msra.mxu0 %v1084
        %1086 = vmatprep.subr.mxu0 0.0
        %1087 = vmatpush2.msra.mxu0 0.0
        %1088 = vmatprep.subr.mxu0 0.0
        %1089 = vmatpush2.msra.mxu0 0.0
        %1090 = vmatprep.subr.mxu0 0.0
        %1091 = vmatpush2.msra.mxu0 0.0
        %1092 = vmatprep.subr.mxu0 0.0
        %1093 = vmatpush2.msra.mxu0 0.0
        %1094 = vmatprep.subr.mxu0 0.0
        %1095 = vmatpush2.msra.mxu0 0.0
        %1096 = vmatprep.subr.mxu0 0.0
        %1097 = vmatpush2.msra.mxu0 0.0
        %1098 = vmatprep.subr.mxu0 0.0
        %1099 = vmatpush2.msra.mxu0 0.0
        %1100 = vmatprep.subr.mxu0 0.0
        %1101 = vmatpush2.msra.mxu0 0.0
        %1102 = vmatprep.subr.mxu0 0.0
        %1103 = vmatpush2.msra.mxu0 0.0
        %1104 = vmatprep.subr.mxu0 0.0
        %1105 = vmatpush2.msra.mxu0 0.0
        %1106 = vmatprep.subr.mxu0 0.0
        %1107 = vmatpush2.msra.mxu0 0.0
        %1108 = vmatprep.subr.mxu0 0.0
        %1109 = vmatpush2.msra.mxu0 0.0
        %1110 = vmatprep.subr.mxu0 0.0
        %1111 = vmatpush2.msra.mxu0 0.0
        %1112 = vmatprep.subr.mxu0 0.0
        %1113 = vmatpush2.msra.mxu0 0.0
        %1114 = vmatprep.subr.mxu0 0.0
        %1115 = vmatpush2.msra.mxu0 0.0
        %1116 = vmatprep.subr.mxu0 0.0
        %1117 = vmatpush2.msra.mxu0 0.0
        %1118 = vmatprep.mubr.f32.mxu0 0.0
        %v1119 = vand.u32 %v679, 4294901760
        %1120 = vmatmul.mubr.f32.gmra.mxu0 %v1119
        %v1121 = vpop.f32.mrf.mxu0
        %v1122 = vadd.f32 %v1031, %v1121
        %v1123 = vpop.f32.mrf.mxu0
        %1124 = vmatprep.mubr.f32.mxu0 0.0
        %v1125 = vand.u32 %v682, 4294901760
        %1126 = vmatmul.mubr.f32.gmra.mxu0 %v1125
        %v1127 = vpop.f32.mrf.mxu0
        %v1128 = vadd.f32 %v1039, %v1127
        %v1129 = vpop.f32.mrf.mxu0
        %1130 = vdwg.mxu0
        %1131 = vmatprep.subr.mxu0 0.0
        %1132 = vmatpush1.msra.mxu0 0.0
        %1133 = vmatprep.subr.mxu0 0.0
        %1134 = vmatpush1.msra.mxu0 0.0
        %1135 = vmatprep.subr.mxu0 0.0
        %1136 = vmatpush1.msra.mxu0 0.0
        %1137 = vmatprep.subr.mxu0 0.0
        %1138 = vmatpush1.msra.mxu0 0.0
        %1139 = vmatprep.subr.mxu0 0.0
        %1140 = vmatpush1.msra.mxu0 0.0
        %1141 = vmatprep.subr.mxu0 0.0
        %1142 = vmatpush1.msra.mxu0 0.0
        %1143 = vmatprep.subr.mxu0 0.0
        %1144 = vmatpush1.msra.mxu0 0.0
        %1145 = vmatprep.subr.mxu0 0.0
        %1146 = vmatpush1.msra.mxu0 0.0
        %1147 = vmatprep.subr.mxu0 0.0
        %1148 = vmatpush1.msra.mxu0 0.0
        %1149 = vmatprep.subr.mxu0 0.0
        %1150 = vmatpush1.msra.mxu0 0.0
        %1151 = vmatprep.subr.mxu0 0.0
        %1152 = vmatpush1.msra.mxu0 0.0
        %1153 = vmatprep.subr.mxu0 0.0
        %1154 = vmatpush1.msra.mxu0 0.0
        %1155 = vmatprep.subr.mxu0 0.0
        %v1156 = vand.u32 %v671, 4294901760
        %1157 = vmatpush1.msra.mxu0 %v1156
        %1158 = vmatprep.subr.mxu0 0.0
        %v1159 = vand.u32 %v670, 4294901760
        %1160 = vmatpush1.msra.mxu0 %v1159
        %1161 = vmatprep.subr.mxu0 0.0
        %v1162 = vand.u32 %v669, 4294901760
        %1163 = vmatpush1.msra.mxu0 %v1162
        %1164 = vmatprep.subr.mxu0 0.0
        %v1165 = vand.u32 %v668, 4294901760
        %1166 = vmatpush1.msra.mxu0 %v1165
        %1167 = vmatprep.subr.mxu0 0.0
        %1168 = vmatpush2.msra.mxu0 0.0
        %1169 = vmatprep.subr.mxu0 0.0
        %1170 = vmatpush2.msra.mxu0 0.0
        %1171 = vmatprep.subr.mxu0 0.0
        %1172 = vmatpush2.msra.mxu0 0.0
        %1173 = vmatprep.subr.mxu0 0.0
        %1174 = vmatpush2.msra.mxu0 0.0
        %1175 = vmatprep.subr.mxu0 0.0
        %1176 = vmatpush2.msra.mxu0 0.0
        %1177 = vmatprep.subr.mxu0 0.0
        %1178 = vmatpush2.msra.mxu0 0.0
        %1179 = vmatprep.subr.mxu0 0.0
        %1180 = vmatpush2.msra.mxu0 0.0
        %1181 = vmatprep.subr.mxu0 0.0
        %1182 = vmatpush2.msra.mxu0 0.0
        %1183 = vmatprep.subr.mxu0 0.0
        %1184 = vmatpush2.msra.mxu0 0.0
        %1185 = vmatprep.subr.mxu0 0.0
        %1186 = vmatpush2.msra.mxu0 0.0
        %1187 = vmatprep.subr.mxu0 0.0
        %1188 = vmatpush2.msra.mxu0 0.0
        %1189 = vmatprep.subr.mxu0 0.0
        %1190 = vmatpush2.msra.mxu0 0.0
        %1191 = vmatprep.subr.mxu0 0.0
        %1192 = vmatpush2.msra.mxu0 0.0
        %1193 = vmatprep.subr.mxu0 0.0
        %1194 = vmatpush2.msra.mxu0 0.0
        %1195 = vmatprep.subr.mxu0 0.0
        %1196 = vmatpush2.msra.mxu0 0.0
        %1197 = vmatprep.subr.mxu0 0.0
        %1198 = vmatpush2.msra.mxu0 0.0
        %1199 = vmatprep.mubr.f32.mxu0 0.0
        %v1200 = vand.u32 %v679, 4294901760
        %1201 = vmatmul.mubr.f32.gmra.mxu0 %v1200
        %v1202 = vpop.f32.mrf.mxu0
        %v1203 = vadd.f32 %v1122, %v1202
        %v1204 = vpop.f32.mrf.mxu0
        %1205 = vmatprep.mubr.f32.mxu0 0.0
        %v1206 = vand.u32 %v682, 4294901760
        %1207 = vmatmul.mubr.f32.gmra.mxu0 %v1206
        %v1208 = vpop.f32.mrf.mxu0
        %v1209 = vadd.f32 %v1128, %v1208
        %v1210 = vpop.f32.mrf.mxu0
        %1211 = vdwg.mxu0
        %v1212 = vld [vmem:[%s157 + $0x8] sm:$0xff]
        %v1213 = vld [vmem:[%s157 + $0x10] sm:$0xff]
        %v1214 = vmul.f32 %v1203, 1.442695
        %v1215 = vpow.pop %v1214
        %v1216 = vmul.f32 %v1209, 1.442695
        %v1217 = vpow.pop %v1216
        %1220 = vrot.lane.b32.xlu0 %v1212, 8
        %v1221 = vpop.permute.xlu0 %1220
        %1222 = vrot.lane.b32.xlu0 %v1213, 8
        %v1223 = vpop.permute.xlu0 %1222
        %v1226 = vmul.f32 %v1215, %v1221
        %v1227 = vmul.f32 %v1217, %v1223
        %1230 = vrot.lane.b32.xlu0 %v1226, 120
        %v1231 = vpop.permute.xlu0 %1230
        %1232 = vrot.lane.b32.xlu0 %v1227, 120
        %v1233 = vpop.permute.xlu0 %1232
        %v1236 = vadd.f32 %v1203, %v1231
        %v1237 = vadd.f32 %v1209, %v1233
        %v1238 = vld [vmem:[#allocation2 + $0x48] sm:$0xff]
        %v1239 = vld [vmem:[#allocation2 + $0x50] sm:$0x1]
        %v1241 = vsel %vm176, %v1236, 0
        %v1244 = vsel %vm176, %v1237, 0
        %1246 = vmatprep.subr.mxu0 0.0
        %1247 = vmatpush1.msra.mxu0 0.0
        %1248 = vmatprep.subr.mxu0 0.0
        %1249 = vmatpush1.msra.mxu0 0.0
        %1250 = vmatprep.subr.mxu0 0.0
        %1251 = vmatpush1.msra.mxu0 0.0
        %1252 = vmatprep.subr.mxu0 0.0
        %1253 = vmatpush1.msra.mxu0 0.0
        %1254 = vmatprep.subr.mxu0 0.0
        %1255 = vmatpush1.msra.mxu0 0.0
        %1256 = vmatprep.subr.mxu0 0.0
        %1257 = vmatpush1.msra.mxu0 0.0
        %1258 = vmatprep.subr.mxu0 0.0
        %1259 = vmatpush1.msra.mxu0 0.0
        %1260 = vmatprep.subr.mxu0 0.0
        %1261 = vmatpush1.msra.mxu0 0.0
        %1262 = vmatprep.subr.mxu0 0.0
        %1263 = vmatpush1.msra.mxu0 0.0
        %1264 = vmatprep.subr.mxu0 0.0
        %1265 = vmatpush1.msra.mxu0 0.0
        %1266 = vmatprep.subr.mxu0 0.0
        %1267 = vmatpush1.msra.mxu0 0.0
        %1268 = vmatprep.subr.mxu0 0.0
        %1269 = vmatpush1.msra.mxu0 0.0
        %1270 = vmatprep.subr.mxu0 0.0
        %1271 = vmatpush1.msra.mxu0 0.0
        %1272 = vmatprep.subr.mxu0 0.0
        %1273 = vmatpush1.msra.mxu0 0.0
        %1274 = vmatprep.subr.mxu0 0.0
        %1275 = vmatpush1.msra.mxu0 0.0
        %1276 = vmatprep.subr.mxu0 0.0
        %v1277 = vand.u32 %v1238, 4294901760
        %1278 = vmatpush1.msra.mxu0 %v1277
        %1279 = vmatprep.subr.mxu0 0.0
        %1280 = vmatpush2.msra.mxu0 0.0
        %1281 = vmatprep.subr.mxu0 0.0
        %1282 = vmatpush2.msra.mxu0 0.0
        %1283 = vmatprep.subr.mxu0 0.0
        %1284 = vmatpush2.msra.mxu0 0.0
        %1285 = vmatprep.subr.mxu0 0.0
        %1286 = vmatpush2.msra.mxu0 0.0
        %1287 = vmatprep.subr.mxu0 0.0
        %1288 = vmatpush2.msra.mxu0 0.0
        %1289 = vmatprep.subr.mxu0 0.0
        %1290 = vmatpush2.msra.mxu0 0.0
        %1291 = vmatprep.subr.mxu0 0.0
        %1292 = vmatpush2.msra.mxu0 0.0
        %1293 = vmatprep.subr.mxu0 0.0
        %1294 = vmatpush2.msra.mxu0 0.0
        %1295 = vmatprep.subr.mxu0 0.0
        %1296 = vmatpush2.msra.mxu0 0.0
        %1297 = vmatprep.subr.mxu0 0.0
        %1298 = vmatpush2.msra.mxu0 0.0
        %1299 = vmatprep.subr.mxu0 0.0
        %1300 = vmatpush2.msra.mxu0 0.0
        %1301 = vmatprep.subr.mxu0 0.0
        %1302 = vmatpush2.msra.mxu0 0.0
        %1303 = vmatprep.subr.mxu0 0.0
        %1304 = vmatpush2.msra.mxu0 0.0
        %1305 = vmatprep.subr.mxu0 0.0
        %1306 = vmatpush2.msra.mxu0 0.0
        %1307 = vmatprep.subr.mxu0 0.0
        %1308 = vmatpush2.msra.mxu0 0.0
        %1309 = vmatprep.subr.mxu0 0.0
        %1310 = vmatpush2.msra.mxu0 0.0
        %1311 = vmatprep.mubr.f32.mxu0 0.0
        %v1312 = vand.u32 %v1241, 4294901760
        %v1313 = vsub.f32 %v1241, %v1312
        %v1314 = vand.u32 %v1313, 4294901760
        %v1315 = vsub.f32 %v1313, %v1314
        %v1316 = vand.u32 %v1315, 4294901760
        %1317 = vmatmul.mubr.f32.gmra.mxu0 %v1316
        %v1318 = vpop.f32.mrf.mxu0
        %v1319 = vadd.f32 0.0, %v1318
        %v1320 = vpop.f32.mrf.mxu0
        %1321 = vmatprep.mubr.f32.mxu0 0.0
        %v1322 = vand.u32 %v1244, 4294901760
        %v1323 = vsub.f32 %v1244, %v1322
        %v1324 = vand.u32 %v1323, 4294901760
        %v1325 = vsub.f32 %v1323, %v1324
        %v1326 = vand.u32 %v1325, 4294901760
        %1327 = vmatmul.mubr.f32.gmra.mxu0 %v1326
        %v1328 = vpop.f32.mrf.mxu0
        %v1329 = vadd.f32 0.0, %v1328
        %v1330 = vpop.f32.mrf.mxu0
        %1331 = vdwg.mxu0
        %1332 = vmatprep.subr.mxu0 0.0
        %1333 = vmatpush1.msra.mxu0 0.0
        %1334 = vmatprep.subr.mxu0 0.0
        %1335 = vmatpush1.msra.mxu0 0.0
        %1336 = vmatprep.subr.mxu0 0.0
        %1337 = vmatpush1.msra.mxu0 0.0
        %1338 = vmatprep.subr.mxu0 0.0
        %1339 = vmatpush1.msra.mxu0 0.0
        %1340 = vmatprep.subr.mxu0 0.0
        %1341 = vmatpush1.msra.mxu0 0.0
        %1342 = vmatprep.subr.mxu0 0.0
        %1343 = vmatpush1.msra.mxu0 0.0
        %1344 = vmatprep.subr.mxu0 0.0
        %1345 = vmatpush1.msra.mxu0 0.0
        %1346 = vmatprep.subr.mxu0 0.0
        %1347 = vmatpush1.msra.mxu0 0.0
        %1348 = vmatprep.subr.mxu0 0.0
        %1349 = vmatpush1.msra.mxu0 0.0
        %1350 = vmatprep.subr.mxu0 0.0
        %1351 = vmatpush1.msra.mxu0 0.0
        %1352 = vmatprep.subr.mxu0 0.0
        %1353 = vmatpush1.msra.mxu0 0.0
        %1354 = vmatprep.subr.mxu0 0.0
        %1355 = vmatpush1.msra.mxu0 0.0
        %1356 = vmatprep.subr.mxu0 0.0
        %1357 = vmatpush1.msra.mxu0 0.0
        %1358 = vmatprep.subr.mxu0 0.0
        %1359 = vmatpush1.msra.mxu0 0.0
        %1360 = vmatprep.subr.mxu0 0.0
        %1361 = vmatpush1.msra.mxu0 0.0
        %1362 = vmatprep.subr.mxu0 0.0
        %v1363 = vand.u32 %v1238, 4294901760
        %v1364 = vsub.f32 %v1238, %v1363
        %v1365 = vand.u32 %v1364, 4294901760
        %v1366 = vsub.f32 %v1364, %v1365
        %v1367 = vand.u32 %v1366, 4294901760
        %1368 = vmatpush1.msra.mxu0 %v1367
        %1369 = vmatprep.subr.mxu0 0.0
        %1370 = vmatpush2.msra.mxu0 0.0
        %1371 = vmatprep.subr.mxu0 0.0
        %1372 = vmatpush2.msra.mxu0 0.0
        %1373 = vmatprep.subr.mxu0 0.0
        %1374 = vmatpush2.msra.mxu0 0.0
        %1375 = vmatprep.subr.mxu0 0.0
        %1376 = vmatpush2.msra.mxu0 0.0
        %1377 = vmatprep.subr.mxu0 0.0
        %1378 = vmatpush2.msra.mxu0 0.0
        %1379 = vmatprep.subr.mxu0 0.0
        %1380 = vmatpush2.msra.mxu0 0.0
        %1381 = vmatprep.subr.mxu0 0.0
        %1382 = vmatpush2.msra.mxu0 0.0
        %1383 = vmatprep.subr.mxu0 0.0
        %1384 = vmatpush2.msra.mxu0 0.0
        %1385 = vmatprep.subr.mxu0 0.0
        %1386 = vmatpush2.msra.mxu0 0.0
        %1387 = vmatprep.subr.mxu0 0.0
        %1388 = vmatpush2.msra.mxu0 0.0
        %1389 = vmatprep.subr.mxu0 0.0
        %1390 = vmatpush2.msra.mxu0 0.0
        %1391 = vmatprep.subr.mxu0 0.0
        %1392 = vmatpush2.msra.mxu0 0.0
        %1393 = vmatprep.subr.mxu0 0.0
        %1394 = vmatpush2.msra.mxu0 0.0
        %1395 = vmatprep.subr.mxu0 0.0
        %1396 = vmatpush2.msra.mxu0 0.0
        %1397 = vmatprep.subr.mxu0 0.0
        %1398 = vmatpush2.msra.mxu0 0.0
        %1399 = vmatprep.subr.mxu0 0.0
        %1400 = vmatpush2.msra.mxu0 0.0
        %1401 = vmatprep.mubr.f32.mxu0 0.0
        %v1402 = vand.u32 %v1241, 4294901760
        %1403 = vmatmul.mubr.f32.gmra.mxu0 %v1402
        %v1404 = vpop.f32.mrf.mxu0
        %v1405 = vadd.f32 %v1319, %v1404
        %v1406 = vpop.f32.mrf.mxu0
        %1407 = vmatprep.mubr.f32.mxu0 0.0
        %v1408 = vand.u32 %v1244, 4294901760
        %1409 = vmatmul.mubr.f32.gmra.mxu0 %v1408
        %v1410 = vpop.f32.mrf.mxu0
        %v1411 = vadd.f32 %v1329, %v1410
        %v1412 = vpop.f32.mrf.mxu0
        %1413 = vdwg.mxu0
        %1414 = vmatprep.subr.mxu0 0.0
        %1415 = vmatpush1.msra.mxu0 0.0
        %1416 = vmatprep.subr.mxu0 0.0
        %1417 = vmatpush1.msra.mxu0 0.0
        %1418 = vmatprep.subr.mxu0 0.0
        %1419 = vmatpush1.msra.mxu0 0.0
        %1420 = vmatprep.subr.mxu0 0.0
        %1421 = vmatpush1.msra.mxu0 0.0
        %1422 = vmatprep.subr.mxu0 0.0
        %1423 = vmatpush1.msra.mxu0 0.0
        %1424 = vmatprep.subr.mxu0 0.0
        %1425 = vmatpush1.msra.mxu0 0.0
        %1426 = vmatprep.subr.mxu0 0.0
        %1427 = vmatpush1.msra.mxu0 0.0
        %1428 = vmatprep.subr.mxu0 0.0
        %1429 = vmatpush1.msra.mxu0 0.0
        %1430 = vmatprep.subr.mxu0 0.0
        %1431 = vmatpush1.msra.mxu0 0.0
        %1432 = vmatprep.subr.mxu0 0.0
        %1433 = vmatpush1.msra.mxu0 0.0
        %1434 = vmatprep.subr.mxu0 0.0
        %1435 = vmatpush1.msra.mxu0 0.0
        %1436 = vmatprep.subr.mxu0 0.0
        %1437 = vmatpush1.msra.mxu0 0.0
        %1438 = vmatprep.subr.mxu0 0.0
        %1439 = vmatpush1.msra.mxu0 0.0
        %1440 = vmatprep.subr.mxu0 0.0
        %1441 = vmatpush1.msra.mxu0 0.0
        %1442 = vmatprep.subr.mxu0 0.0
        %1443 = vmatpush1.msra.mxu0 0.0
        %1444 = vmatprep.subr.mxu0 0.0
        %v1445 = vand.u32 %v1238, 4294901760
        %v1446 = vsub.f32 %v1238, %v1445
        %1447 = vmatpush1.msra.mxu0 %v1446
        %1448 = vmatprep.subr.mxu0 0.0
        %1449 = vmatpush2.msra.mxu0 0.0
        %1450 = vmatprep.subr.mxu0 0.0
        %1451 = vmatpush2.msra.mxu0 0.0
        %1452 = vmatprep.subr.mxu0 0.0
        %1453 = vmatpush2.msra.mxu0 0.0
        %1454 = vmatprep.subr.mxu0 0.0
        %1455 = vmatpush2.msra.mxu0 0.0
        %1456 = vmatprep.subr.mxu0 0.0
        %1457 = vmatpush2.msra.mxu0 0.0
        %1458 = vmatprep.subr.mxu0 0.0
        %1459 = vmatpush2.msra.mxu0 0.0
        %1460 = vmatprep.subr.mxu0 0.0
        %1461 = vmatpush2.msra.mxu0 0.0
        %1462 = vmatprep.subr.mxu0 0.0
        %1463 = vmatpush2.msra.mxu0 0.0
        %1464 = vmatprep.subr.mxu0 0.0
        %1465 = vmatpush2.msra.mxu0 0.0
        %1466 = vmatprep.subr.mxu0 0.0
        %1467 = vmatpush2.msra.mxu0 0.0
        %1468 = vmatprep.subr.mxu0 0.0
        %1469 = vmatpush2.msra.mxu0 0.0
        %1470 = vmatprep.subr.mxu0 0.0
        %1471 = vmatpush2.msra.mxu0 0.0
        %1472 = vmatprep.subr.mxu0 0.0
        %1473 = vmatpush2.msra.mxu0 0.0
        %1474 = vmatprep.subr.mxu0 0.0
        %1475 = vmatpush2.msra.mxu0 0.0
        %1476 = vmatprep.subr.mxu0 0.0
        %1477 = vmatpush2.msra.mxu0 0.0
        %1478 = vmatprep.subr.mxu0 0.0
        %1479 = vmatpush2.msra.mxu0 0.0
        %1480 = vmatprep.mubr.f32.mxu0 0.0
        %v1481 = vand.u32 %v1241, 4294901760
        %v1482 = vsub.f32 %v1241, %v1481
        %1483 = vmatmul.mubr.f32.gmra.mxu0 %v1482
        %v1484 = vpop.f32.mrf.mxu0
        %v1485 = vadd.f32 %v1405, %v1484
        %v1486 = vpop.f32.mrf.mxu0
        %1487 = vmatprep.mubr.f32.mxu0 0.0
        %v1488 = vand.u32 %v1244, 4294901760
        %v1489 = vsub.f32 %v1244, %v1488
        %1490 = vmatmul.mubr.f32.gmra.mxu0 %v1489
        %v1491 = vpop.f32.mrf.mxu0
        %v1492 = vadd.f32 %v1411, %v1491
        %v1493 = vpop.f32.mrf.mxu0
        %1494 = vdwg.mxu0
        %1495 = vmatprep.subr.mxu0 0.0
        %1496 = vmatpush1.msra.mxu0 0.0
        %1497 = vmatprep.subr.mxu0 0.0
        %1498 = vmatpush1.msra.mxu0 0.0
        %1499 = vmatprep.subr.mxu0 0.0
        %1500 = vmatpush1.msra.mxu0 0.0
        %1501 = vmatprep.subr.mxu0 0.0
        %1502 = vmatpush1.msra.mxu0 0.0
        %1503 = vmatprep.subr.mxu0 0.0
        %1504 = vmatpush1.msra.mxu0 0.0
        %1505 = vmatprep.subr.mxu0 0.0
        %1506 = vmatpush1.msra.mxu0 0.0
        %1507 = vmatprep.subr.mxu0 0.0
        %1508 = vmatpush1.msra.mxu0 0.0
        %1509 = vmatprep.subr.mxu0 0.0
        %1510 = vmatpush1.msra.mxu0 0.0
        %1511 = vmatprep.subr.mxu0 0.0
        %1512 = vmatpush1.msra.mxu0 0.0
        %1513 = vmatprep.subr.mxu0 0.0
        %1514 = vmatpush1.msra.mxu0 0.0
        %1515 = vmatprep.subr.mxu0 0.0
        %1516 = vmatpush1.msra.mxu0 0.0
        %1517 = vmatprep.subr.mxu0 0.0
        %1518 = vmatpush1.msra.mxu0 0.0
        %1519 = vmatprep.subr.mxu0 0.0
        %1520 = vmatpush1.msra.mxu0 0.0
        %1521 = vmatprep.subr.mxu0 0.0
        %1522 = vmatpush1.msra.mxu0 0.0
        %1523 = vmatprep.subr.mxu0 0.0
        %1524 = vmatpush1.msra.mxu0 0.0
        %1525 = vmatprep.subr.mxu0 0.0
        %v1526 = vand.u32 %v1238, 4294901760
        %1527 = vmatpush1.msra.mxu0 %v1526
        %1528 = vmatprep.subr.mxu0 0.0
        %1529 = vmatpush2.msra.mxu0 0.0
        %1530 = vmatprep.subr.mxu0 0.0
        %1531 = vmatpush2.msra.mxu0 0.0
        %1532 = vmatprep.subr.mxu0 0.0
        %1533 = vmatpush2.msra.mxu0 0.0
        %1534 = vmatprep.subr.mxu0 0.0
        %1535 = vmatpush2.msra.mxu0 0.0
        %1536 = vmatprep.subr.mxu0 0.0
        %1537 = vmatpush2.msra.mxu0 0.0
        %1538 = vmatprep.subr.mxu0 0.0
        %1539 = vmatpush2.msra.mxu0 0.0
        %1540 = vmatprep.subr.mxu0 0.0
        %1541 = vmatpush2.msra.mxu0 0.0
        %1542 = vmatprep.subr.mxu0 0.0
        %1543 = vmatpush2.msra.mxu0 0.0
        %1544 = vmatprep.subr.mxu0 0.0
        %1545 = vmatpush2.msra.mxu0 0.0
        %1546 = vmatprep.subr.mxu0 0.0
        %1547 = vmatpush2.msra.mxu0 0.0
        %1548 = vmatprep.subr.mxu0 0.0
        %1549 = vmatpush2.msra.mxu0 0.0
        %1550 = vmatprep.subr.mxu0 0.0
        %1551 = vmatpush2.msra.mxu0 0.0
        %1552 = vmatprep.subr.mxu0 0.0
        %1553 = vmatpush2.msra.mxu0 0.0
        %1554 = vmatprep.subr.mxu0 0.0
        %1555 = vmatpush2.msra.mxu0 0.0
        %1556 = vmatprep.subr.mxu0 0.0
        %1557 = vmatpush2.msra.mxu0 0.0
        %1558 = vmatprep.subr.mxu0 0.0
        %1559 = vmatpush2.msra.mxu0 0.0
        %1560 = vmatprep.mubr.f32.mxu0 0.0
        %v1561 = vand.u32 %v1241, 4294901760
        %v1562 = vsub.f32 %v1241, %v1561
        %v1563 = vand.u32 %v1562, 4294901760
        %1564 = vmatmul.mubr.f32.gmra.mxu0 %v1563
        %v1565 = vpop.f32.mrf.mxu0
        %v1566 = vadd.f32 %v1485, %v1565
        %v1567 = vpop.f32.mrf.mxu0
        %1568 = vmatprep.mubr.f32.mxu0 0.0
        %v1569 = vand.u32 %v1244, 4294901760
        %v1570 = vsub.f32 %v1244, %v1569
        %v1571 = vand.u32 %v1570, 4294901760
        %1572 = vmatmul.mubr.f32.gmra.mxu0 %v1571
        %v1573 = vpop.f32.mrf.mxu0
        %v1574 = vadd.f32 %v1492, %v1573
        %v1575 = vpop.f32.mrf.mxu0
        %1576 = vdwg.mxu0
        %1577 = vmatprep.subr.mxu0 0.0
        %1578 = vmatpush1.msra.mxu0 0.0
        %1579 = vmatprep.subr.mxu0 0.0
        %1580 = vmatpush1.msra.mxu0 0.0
        %1581 = vmatprep.subr.mxu0 0.0
        %1582 = vmatpush1.msra.mxu0 0.0
        %1583 = vmatprep.subr.mxu0 0.0
        %1584 = vmatpush1.msra.mxu0 0.0
        %1585 = vmatprep.subr.mxu0 0.0
        %1586 = vmatpush1.msra.mxu0 0.0
        %1587 = vmatprep.subr.mxu0 0.0
        %1588 = vmatpush1.msra.mxu0 0.0
        %1589 = vmatprep.subr.mxu0 0.0
        %1590 = vmatpush1.msra.mxu0 0.0
        %1591 = vmatprep.subr.mxu0 0.0
        %1592 = vmatpush1.msra.mxu0 0.0
        %1593 = vmatprep.subr.mxu0 0.0
        %1594 = vmatpush1.msra.mxu0 0.0
        %1595 = vmatprep.subr.mxu0 0.0
        %1596 = vmatpush1.msra.mxu0 0.0
        %1597 = vmatprep.subr.mxu0 0.0
        %1598 = vmatpush1.msra.mxu0 0.0
        %1599 = vmatprep.subr.mxu0 0.0
        %1600 = vmatpush1.msra.mxu0 0.0
        %1601 = vmatprep.subr.mxu0 0.0
        %1602 = vmatpush1.msra.mxu0 0.0
        %1603 = vmatprep.subr.mxu0 0.0
        %1604 = vmatpush1.msra.mxu0 0.0
        %1605 = vmatprep.subr.mxu0 0.0
        %1606 = vmatpush1.msra.mxu0 0.0
        %1607 = vmatprep.subr.mxu0 0.0
        %v1608 = vand.u32 %v1238, 4294901760
        %v1609 = vsub.f32 %v1238, %v1608
        %v1610 = vand.u32 %v1609, 4294901760
        %1611 = vmatpush1.msra.mxu0 %v1610
        %1612 = vmatprep.subr.mxu0 0.0
        %1613 = vmatpush2.msra.mxu0 0.0
        %1614 = vmatprep.subr.mxu0 0.0
        %1615 = vmatpush2.msra.mxu0 0.0
        %1616 = vmatprep.subr.mxu0 0.0
        %1617 = vmatpush2.msra.mxu0 0.0
        %1618 = vmatprep.subr.mxu0 0.0
        %1619 = vmatpush2.msra.mxu0 0.0
        %1620 = vmatprep.subr.mxu0 0.0
        %1621 = vmatpush2.msra.mxu0 0.0
        %1622 = vmatprep.subr.mxu0 0.0
        %1623 = vmatpush2.msra.mxu0 0.0
        %1624 = vmatprep.subr.mxu0 0.0
        %1625 = vmatpush2.msra.mxu0 0.0
        %1626 = vmatprep.subr.mxu0 0.0
        %1627 = vmatpush2.msra.mxu0 0.0
        %1628 = vmatprep.subr.mxu0 0.0
        %1629 = vmatpush2.msra.mxu0 0.0
        %1630 = vmatprep.subr.mxu0 0.0
        %1631 = vmatpush2.msra.mxu0 0.0
        %1632 = vmatprep.subr.mxu0 0.0
        %1633 = vmatpush2.msra.mxu0 0.0
        %1634 = vmatprep.subr.mxu0 0.0
        %1635 = vmatpush2.msra.mxu0 0.0
        %1636 = vmatprep.subr.mxu0 0.0
        %1637 = vmatpush2.msra.mxu0 0.0
        %1638 = vmatprep.subr.mxu0 0.0
        %1639 = vmatpush2.msra.mxu0 0.0
        %1640 = vmatprep.subr.mxu0 0.0
        %1641 = vmatpush2.msra.mxu0 0.0
        %1642 = vmatprep.subr.mxu0 0.0
        %1643 = vmatpush2.msra.mxu0 0.0
        %1644 = vmatprep.mubr.f32.mxu0 0.0
        %v1645 = vand.u32 %v1241, 4294901760
        %1646 = vmatmul.mubr.f32.gmra.mxu0 %v1645
        %v1647 = vpop.f32.mrf.mxu0
        %v1648 = vadd.f32 %v1566, %v1647
        %v1649 = vpop.f32.mrf.mxu0
        %1650 = vmatprep.mubr.f32.mxu0 0.0
        %v1651 = vand.u32 %v1244, 4294901760
        %1652 = vmatmul.mubr.f32.gmra.mxu0 %v1651
        %v1653 = vpop.f32.mrf.mxu0
        %v1654 = vadd.f32 %v1574, %v1653
        %v1655 = vpop.f32.mrf.mxu0
        %1656 = vdwg.mxu0
        %1657 = vmatprep.subr.mxu0 0.0
        %1658 = vmatpush1.msra.mxu0 0.0
        %1659 = vmatprep.subr.mxu0 0.0
        %1660 = vmatpush1.msra.mxu0 0.0
        %1661 = vmatprep.subr.mxu0 0.0
        %1662 = vmatpush1.msra.mxu0 0.0
        %1663 = vmatprep.subr.mxu0 0.0
        %1664 = vmatpush1.msra.mxu0 0.0
        %1665 = vmatprep.subr.mxu0 0.0
        %1666 = vmatpush1.msra.mxu0 0.0
        %1667 = vmatprep.subr.mxu0 0.0
        %1668 = vmatpush1.msra.mxu0 0.0
        %1669 = vmatprep.subr.mxu0 0.0
        %1670 = vmatpush1.msra.mxu0 0.0
        %1671 = vmatprep.subr.mxu0 0.0
        %1672 = vmatpush1.msra.mxu0 0.0
        %1673 = vmatprep.subr.mxu0 0.0
        %1674 = vmatpush1.msra.mxu0 0.0
        %1675 = vmatprep.subr.mxu0 0.0
        %1676 = vmatpush1.msra.mxu0 0.0
        %1677 = vmatprep.subr.mxu0 0.0
        %1678 = vmatpush1.msra.mxu0 0.0
        %1679 = vmatprep.subr.mxu0 0.0
        %1680 = vmatpush1.msra.mxu0 0.0
        %1681 = vmatprep.subr.mxu0 0.0
        %1682 = vmatpush1.msra.mxu0 0.0
        %1683 = vmatprep.subr.mxu0 0.0
        %1684 = vmatpush1.msra.mxu0 0.0
        %1685 = vmatprep.subr.mxu0 0.0
        %1686 = vmatpush1.msra.mxu0 0.0
        %1687 = vmatprep.subr.mxu0 0.0
        %v1688 = vand.u32 %v1238, 4294901760
        %1689 = vmatpush1.msra.mxu0 %v1688
        %1690 = vmatprep.subr.mxu0 0.0
        %1691 = vmatpush2.msra.mxu0 0.0
        %1692 = vmatprep.subr.mxu0 0.0
        %1693 = vmatpush2.msra.mxu0 0.0
        %1694 = vmatprep.subr.mxu0 0.0
        %1695 = vmatpush2.msra.mxu0 0.0
        %1696 = vmatprep.subr.mxu0 0.0
        %1697 = vmatpush2.msra.mxu0 0.0
        %1698 = vmatprep.subr.mxu0 0.0
        %1699 = vmatpush2.msra.mxu0 0.0
        %1700 = vmatprep.subr.mxu0 0.0
        %1701 = vmatpush2.msra.mxu0 0.0
        %1702 = vmatprep.subr.mxu0 0.0
        %1703 = vmatpush2.msra.mxu0 0.0
        %1704 = vmatprep.subr.mxu0 0.0
        %1705 = vmatpush2.msra.mxu0 0.0
        %1706 = vmatprep.subr.mxu0 0.0
        %1707 = vmatpush2.msra.mxu0 0.0
        %1708 = vmatprep.subr.mxu0 0.0
        %1709 = vmatpush2.msra.mxu0 0.0
        %1710 = vmatprep.subr.mxu0 0.0
        %1711 = vmatpush2.msra.mxu0 0.0
        %1712 = vmatprep.subr.mxu0 0.0
        %1713 = vmatpush2.msra.mxu0 0.0
        %1714 = vmatprep.subr.mxu0 0.0
        %1715 = vmatpush2.msra.mxu0 0.0
        %1716 = vmatprep.subr.mxu0 0.0
        %1717 = vmatpush2.msra.mxu0 0.0
        %1718 = vmatprep.subr.mxu0 0.0
        %1719 = vmatpush2.msra.mxu0 0.0
        %1720 = vmatprep.subr.mxu0 0.0
        %1721 = vmatpush2.msra.mxu0 0.0
        %1722 = vmatprep.mubr.f32.mxu0 0.0
        %v1723 = vand.u32 %v1241, 4294901760
        %1724 = vmatmul.mubr.f32.gmra.mxu0 %v1723
        %v1725 = vpop.f32.mrf.mxu0
        %v1726 = vadd.f32 %v1648, %v1725
        %v1727 = vpop.f32.mrf.mxu0
        %1728 = vmatprep.mubr.f32.mxu0 0.0
        %v1729 = vand.u32 %v1244, 4294901760
        %1730 = vmatmul.mubr.f32.gmra.mxu0 %v1729
        %v1731 = vpop.f32.mrf.mxu0
        %v1732 = vadd.f32 %v1654, %v1731
        %v1733 = vpop.f32.mrf.mxu0
        %1734 = vdwg.mxu0
        %1737 = vrot.lane.b32.xlu0 %v1726, 16
        %v1738 = vpop.permute.xlu0 %1737
        %1739 = vrot.lane.b32.xlu0 %v1732, 16
        %v1740 = vpop.permute.xlu0 %1739
        %v1743 = vadd.f32 %v1203, %v1738
        %v1744 = vadd.f32 %v1209, %v1740
        %v1745 = vlaneseq
        %v1746 = vshrl.u32 %v1745, 7
        %v1747 = vsub.s32 0, %v1746
        %v1748 = vrot.slane %v1239, %v1747
        %1750 = vrot.lane.b32.xlu0 %v1748, 16
        %v1751 = vpop.permute.xlu0 %1750
        %v1753 = vadd.f32 %v1743, %v1751
        %v1754 = vadd.f32 %v1744, %v1751
        %v1755 = vmax.f32 %v1753, 0.0
        %v1756 = vmax.f32 %v1754, 0.0
        %v1757 = vld [vmem:[#allocation2 + $0x58] sm:$0xff]
        %v1758 = vld [vmem:[#allocation2 + $0x60] sm:$0xff]
        %v1759 = vld [vmem:[#allocation2 + $0x68] sm:$0xff]
        %v1760 = vld [vmem:[#allocation2 + $0x70] sm:$0xff]
        %v1761 = vld [vmem:[#allocation2 + $0x78] sm:$0x1]
        %v1762 = vlaneseq
        %v1763 = vshrl.u32 %v1762, 7
        %v1764 = vsub.s32 0, %v1763
        %v1765 = vrot.slane %v1761, %v1764
        %1768 = vrot.lane.b32.xlu0 %v1755, 112
        %v1769 = vpop.permute.xlu0 %1768
        %1770 = vrot.lane.b32.xlu0 %v1756, 112
        %v1771 = vpop.permute.xlu0 %1770
        %v1772 = vsel %vm677, %v1769, 0
        %v1774 = vsel %vm677, %v1771, 0
        %1776 = vmatprep.subr.mxu0 0.0
        %1777 = vmatpush1.msra.mxu0 0.0
        %1778 = vmatprep.subr.mxu0 0.0
        %1779 = vmatpush1.msra.mxu0 0.0
        %1780 = vmatprep.subr.mxu0 0.0
        %1781 = vmatpush1.msra.mxu0 0.0
        %1782 = vmatprep.subr.mxu0 0.0
        %1783 = vmatpush1.msra.mxu0 0.0
        %1784 = vmatprep.subr.mxu0 0.0
        %1785 = vmatpush1.msra.mxu0 0.0
        %1786 = vmatprep.subr.mxu0 0.0
        %1787 = vmatpush1.msra.mxu0 0.0
        %1788 = vmatprep.subr.mxu0 0.0
        %1789 = vmatpush1.msra.mxu0 0.0
        %1790 = vmatprep.subr.mxu0 0.0
        %1791 = vmatpush1.msra.mxu0 0.0
        %1792 = vmatprep.subr.mxu0 0.0
        %1793 = vmatpush1.msra.mxu0 0.0
        %1794 = vmatprep.subr.mxu0 0.0
        %1795 = vmatpush1.msra.mxu0 0.0
        %1796 = vmatprep.subr.mxu0 0.0
        %1797 = vmatpush1.msra.mxu0 0.0
        %1798 = vmatprep.subr.mxu0 0.0
        %1799 = vmatpush1.msra.mxu0 0.0
        %1800 = vmatprep.subr.mxu0 0.0
        %v1801 = vand.u32 %v1760, 4294901760
        %1802 = vmatpush1.msra.mxu0 %v1801
        %1803 = vmatprep.subr.mxu0 0.0
        %v1804 = vand.u32 %v1759, 4294901760
        %1805 = vmatpush1.msra.mxu0 %v1804
        %1806 = vmatprep.subr.mxu0 0.0
        %v1807 = vand.u32 %v1758, 4294901760
        %1808 = vmatpush1.msra.mxu0 %v1807
        %1809 = vmatprep.subr.mxu0 0.0
        %v1810 = vand.u32 %v1757, 4294901760
        %1811 = vmatpush1.msra.mxu0 %v1810
        %1812 = vmatprep.subr.mxu0 0.0
        %1813 = vmatpush2.msra.mxu0 0.0
        %1814 = vmatprep.subr.mxu0 0.0
        %1815 = vmatpush2.msra.mxu0 0.0
        %1816 = vmatprep.subr.mxu0 0.0
        %1817 = vmatpush2.msra.mxu0 0.0
        %1818 = vmatprep.subr.mxu0 0.0
        %1819 = vmatpush2.msra.mxu0 0.0
        %1820 = vmatprep.subr.mxu0 0.0
        %1821 = vmatpush2.msra.mxu0 0.0
        %1822 = vmatprep.subr.mxu0 0.0
        %1823 = vmatpush2.msra.mxu0 0.0
        %1824 = vmatprep.subr.mxu0 0.0
        %1825 = vmatpush2.msra.mxu0 0.0
        %1826 = vmatprep.subr.mxu0 0.0
        %1827 = vmatpush2.msra.mxu0 0.0
        %1828 = vmatprep.subr.mxu0 0.0
        %1829 = vmatpush2.msra.mxu0 0.0
        %1830 = vmatprep.subr.mxu0 0.0
        %1831 = vmatpush2.msra.mxu0 0.0
        %1832 = vmatprep.subr.mxu0 0.0
        %1833 = vmatpush2.msra.mxu0 0.0
        %1834 = vmatprep.subr.mxu0 0.0
        %1835 = vmatpush2.msra.mxu0 0.0
        %1836 = vmatprep.subr.mxu0 0.0
        %1837 = vmatpush2.msra.mxu0 0.0
        %1838 = vmatprep.subr.mxu0 0.0
        %1839 = vmatpush2.msra.mxu0 0.0
        %1840 = vmatprep.subr.mxu0 0.0
        %1841 = vmatpush2.msra.mxu0 0.0
        %1842 = vmatprep.subr.mxu0 0.0
        %1843 = vmatpush2.msra.mxu0 0.0
        %1844 = vmatprep.mubr.f32.mxu0 0.0
        %v1845 = vand.u32 %v1772, 4294901760
        %v1846 = vsub.f32 %v1772, %v1845
        %v1847 = vand.u32 %v1846, 4294901760
        %v1848 = vsub.f32 %v1846, %v1847
        %v1849 = vand.u32 %v1848, 4294901760
        %1850 = vmatmul.mubr.f32.gmra.mxu0 %v1849
        %v1851 = vpop.f32.mrf.mxu0
        %v1852 = vadd.f32 %v1765, %v1851
        %v1853 = vpop.f32.mrf.mxu0
        %1854 = vmatprep.mubr.f32.mxu0 0.0
        %v1855 = vand.u32 %v1774, 4294901760
        %v1856 = vsub.f32 %v1774, %v1855
        %v1857 = vand.u32 %v1856, 4294901760
        %v1858 = vsub.f32 %v1856, %v1857
        %v1859 = vand.u32 %v1858, 4294901760
        %1860 = vmatmul.mubr.f32.gmra.mxu0 %v1859
        %v1861 = vpop.f32.mrf.mxu0
        %v1862 = vadd.f32 %v1765, %v1861
        %v1863 = vpop.f32.mrf.mxu0
        %1864 = vdwg.mxu0
        %1865 = vmatprep.subr.mxu0 0.0
        %1866 = vmatpush1.msra.mxu0 0.0
        %1867 = vmatprep.subr.mxu0 0.0
        %1868 = vmatpush1.msra.mxu0 0.0
        %1869 = vmatprep.subr.mxu0 0.0
        %1870 = vmatpush1.msra.mxu0 0.0
        %1871 = vmatprep.subr.mxu0 0.0
        %1872 = vmatpush1.msra.mxu0 0.0
        %1873 = vmatprep.subr.mxu0 0.0
        %1874 = vmatpush1.msra.mxu0 0.0
        %1875 = vmatprep.subr.mxu0 0.0
        %1876 = vmatpush1.msra.mxu0 0.0
        %1877 = vmatprep.subr.mxu0 0.0
        %1878 = vmatpush1.msra.mxu0 0.0
        %1879 = vmatprep.subr.mxu0 0.0
        %1880 = vmatpush1.msra.mxu0 0.0
        %1881 = vmatprep.subr.mxu0 0.0
        %1882 = vmatpush1.msra.mxu0 0.0
        %1883 = vmatprep.subr.mxu0 0.0
        %1884 = vmatpush1.msra.mxu0 0.0
        %1885 = vmatprep.subr.mxu0 0.0
        %1886 = vmatpush1.msra.mxu0 0.0
        %1887 = vmatprep.subr.mxu0 0.0
        %1888 = vmatpush1.msra.mxu0 0.0
        %1889 = vmatprep.subr.mxu0 0.0
        %v1890 = vand.u32 %v1760, 4294901760
        %v1891 = vsub.f32 %v1760, %v1890
        %v1892 = vand.u32 %v1891, 4294901760
        %v1893 = vsub.f32 %v1891, %v1892
        %v1894 = vand.u32 %v1893, 4294901760
        %1895 = vmatpush1.msra.mxu0 %v1894
        %1896 = vmatprep.subr.mxu0 0.0
        %v1897 = vand.u32 %v1759, 4294901760
        %v1898 = vsub.f32 %v1759, %v1897
        %v1899 = vand.u32 %v1898, 4294901760
        %v1900 = vsub.f32 %v1898, %v1899
        %v1901 = vand.u32 %v1900, 4294901760
        %1902 = vmatpush1.msra.mxu0 %v1901
        %1903 = vmatprep.subr.mxu0 0.0
        %v1904 = vand.u32 %v1758, 4294901760
        %v1905 = vsub.f32 %v1758, %v1904
        %v1906 = vand.u32 %v1905, 4294901760
        %v1907 = vsub.f32 %v1905, %v1906
        %v1908 = vand.u32 %v1907, 4294901760
        %1909 = vmatpush1.msra.mxu0 %v1908
        %1910 = vmatprep.subr.mxu0 0.0
        %v1911 = vand.u32 %v1757, 4294901760
        %v1912 = vsub.f32 %v1757, %v1911
        %v1913 = vand.u32 %v1912, 4294901760
        %v1914 = vsub.f32 %v1912, %v1913
        %v1915 = vand.u32 %v1914, 4294901760
        %1916 = vmatpush1.msra.mxu0 %v1915
        %1917 = vmatprep.subr.mxu0 0.0
        %1918 = vmatpush2.msra.mxu0 0.0
        %1919 = vmatprep.subr.mxu0 0.0
        %1920 = vmatpush2.msra.mxu0 0.0
        %1921 = vmatprep.subr.mxu0 0.0
        %1922 = vmatpush2.msra.mxu0 0.0
        %1923 = vmatprep.subr.mxu0 0.0
        %1924 = vmatpush2.msra.mxu0 0.0
        %1925 = vmatprep.subr.mxu0 0.0
        %1926 = vmatpush2.msra.mxu0 0.0
        %1927 = vmatprep.subr.mxu0 0.0
        %1928 = vmatpush2.msra.mxu0 0.0
        %1929 = vmatprep.subr.mxu0 0.0
        %1930 = vmatpush2.msra.mxu0 0.0
        %1931 = vmatprep.subr.mxu0 0.0
        %1932 = vmatpush2.msra.mxu0 0.0
        %1933 = vmatprep.subr.mxu0 0.0
        %1934 = vmatpush2.msra.mxu0 0.0
        %1935 = vmatprep.subr.mxu0 0.0
        %1936 = vmatpush2.msra.mxu0 0.0
        %1937 = vmatprep.subr.mxu0 0.0
        %1938 = vmatpush2.msra.mxu0 0.0
        %1939 = vmatprep.subr.mxu0 0.0
        %1940 = vmatpush2.msra.mxu0 0.0
        %1941 = vmatprep.subr.mxu0 0.0
        %1942 = vmatpush2.msra.mxu0 0.0
        %1943 = vmatprep.subr.mxu0 0.0
        %1944 = vmatpush2.msra.mxu0 0.0
        %1945 = vmatprep.subr.mxu0 0.0
        %1946 = vmatpush2.msra.mxu0 0.0
        %1947 = vmatprep.subr.mxu0 0.0
        %1948 = vmatpush2.msra.mxu0 0.0
        %1949 = vmatprep.mubr.f32.mxu0 0.0
        %v1950 = vand.u32 %v1772, 4294901760
        %1951 = vmatmul.mubr.f32.gmra.mxu0 %v1950
        %v1952 = vpop.f32.mrf.mxu0
        %v1953 = vadd.f32 %v1852, %v1952
        %v1954 = vpop.f32.mrf.mxu0
        %1955 = vmatprep.mubr.f32.mxu0 0.0
        %v1956 = vand.u32 %v1774, 4294901760
        %1957 = vmatmul.mubr.f32.gmra.mxu0 %v1956
        %v1958 = vpop.f32.mrf.mxu0
        %v1959 = vadd.f32 %v1862, %v1958
        %v1960 = vpop.f32.mrf.mxu0
        %1961 = vdwg.mxu0
        %1962 = vmatprep.subr.mxu0 0.0
        %1963 = vmatpush1.msra.mxu0 0.0
        %1964 = vmatprep.subr.mxu0 0.0
        %1965 = vmatpush1.msra.mxu0 0.0
        %1966 = vmatprep.subr.mxu0 0.0
        %1967 = vmatpush1.msra.mxu0 0.0
        %1968 = vmatprep.subr.mxu0 0.0
        %1969 = vmatpush1.msra.mxu0 0.0
        %1970 = vmatprep.subr.mxu0 0.0
        %1971 = vmatpush1.msra.mxu0 0.0
        %1972 = vmatprep.subr.mxu0 0.0
        %1973 = vmatpush1.msra.mxu0 0.0
        %1974 = vmatprep.subr.mxu0 0.0
        %1975 = vmatpush1.msra.mxu0 0.0
        %1976 = vmatprep.subr.mxu0 0.0
        %1977 = vmatpush1.msra.mxu0 0.0
        %1978 = vmatprep.subr.mxu0 0.0
        %1979 = vmatpush1.msra.mxu0 0.0
        %1980 = vmatprep.subr.mxu0 0.0
        %1981 = vmatpush1.msra.mxu0 0.0
        %1982 = vmatprep.subr.mxu0 0.0
        %1983 = vmatpush1.msra.mxu0 0.0
        %1984 = vmatprep.subr.mxu0 0.0
        %1985 = vmatpush1.msra.mxu0 0.0
        %1986 = vmatprep.subr.mxu0 0.0
        %v1987 = vand.u32 %v1760, 4294901760
        %v1988 = vsub.f32 %v1760, %v1987
        %1989 = vmatpush1.msra.mxu0 %v1988
        %1990 = vmatprep.subr.mxu0 0.0
        %v1991 = vand.u32 %v1759, 4294901760
        %v1992 = vsub.f32 %v1759, %v1991
        %1993 = vmatpush1.msra.mxu0 %v1992
        %1994 = vmatprep.subr.mxu0 0.0
        %v1995 = vand.u32 %v1758, 4294901760
        %v1996 = vsub.f32 %v1758, %v1995
        %1997 = vmatpush1.msra.mxu0 %v1996
        %1998 = vmatprep.subr.mxu0 0.0
        %v1999 = vand.u32 %v1757, 4294901760
        %v2000 = vsub.f32 %v1757, %v1999
        %2001 = vmatpush1.msra.mxu0 %v2000
        %2002 = vmatprep.subr.mxu0 0.0
        %2003 = vmatpush2.msra.mxu0 0.0
        %2004 = vmatprep.subr.mxu0 0.0
        %2005 = vmatpush2.msra.mxu0 0.0
        %2006 = vmatprep.subr.mxu0 0.0
        %2007 = vmatpush2.msra.mxu0 0.0
        %2008 = vmatprep.subr.mxu0 0.0
        %2009 = vmatpush2.msra.mxu0 0.0
        %2010 = vmatprep.subr.mxu0 0.0
        %2011 = vmatpush2.msra.mxu0 0.0
        %2012 = vmatprep.subr.mxu0 0.0
        %2013 = vmatpush2.msra.mxu0 0.0
        %2014 = vmatprep.subr.mxu0 0.0
        %2015 = vmatpush2.msra.mxu0 0.0
        %2016 = vmatprep.subr.mxu0 0.0
        %2017 = vmatpush2.msra.mxu0 0.0
        %2018 = vmatprep.subr.mxu0 0.0
        %2019 = vmatpush2.msra.mxu0 0.0
        %2020 = vmatprep.subr.mxu0 0.0
        %2021 = vmatpush2.msra.mxu0 0.0
        %2022 = vmatprep.subr.mxu0 0.0
        %2023 = vmatpush2.msra.mxu0 0.0
        %2024 = vmatprep.subr.mxu0 0.0
        %2025 = vmatpush2.msra.mxu0 0.0
        %2026 = vmatprep.subr.mxu0 0.0
        %2027 = vmatpush2.msra.mxu0 0.0
        %2028 = vmatprep.subr.mxu0 0.0
        %2029 = vmatpush2.msra.mxu0 0.0
        %2030 = vmatprep.subr.mxu0 0.0
        %2031 = vmatpush2.msra.mxu0 0.0
        %2032 = vmatprep.subr.mxu0 0.0
        %2033 = vmatpush2.msra.mxu0 0.0
        %2034 = vmatprep.mubr.f32.mxu0 0.0
        %v2035 = vand.u32 %v1772, 4294901760
        %v2036 = vsub.f32 %v1772, %v2035
        %2037 = vmatmul.mubr.f32.gmra.mxu0 %v2036
        %v2038 = vpop.f32.mrf.mxu0
        %v2039 = vadd.f32 %v1953, %v2038
        %v2040 = vpop.f32.mrf.mxu0
        %2041 = vmatprep.mubr.f32.mxu0 0.0
        %v2042 = vand.u32 %v1774, 4294901760
        %v2043 = vsub.f32 %v1774, %v2042
        %2044 = vmatmul.mubr.f32.gmra.mxu0 %v2043
        %v2045 = vpop.f32.mrf.mxu0
        %v2046 = vadd.f32 %v1959, %v2045
        %v2047 = vpop.f32.mrf.mxu0
        %2048 = vdwg.mxu0
        %2049 = vmatprep.subr.mxu0 0.0
        %2050 = vmatpush1.msra.mxu0 0.0
        %2051 = vmatprep.subr.mxu0 0.0
        %2052 = vmatpush1.msra.mxu0 0.0
        %2053 = vmatprep.subr.mxu0 0.0
        %2054 = vmatpush1.msra.mxu0 0.0
        %2055 = vmatprep.subr.mxu0 0.0
        %2056 = vmatpush1.msra.mxu0 0.0
        %2057 = vmatprep.subr.mxu0 0.0
        %2058 = vmatpush1.msra.mxu0 0.0
        %2059 = vmatprep.subr.mxu0 0.0
        %2060 = vmatpush1.msra.mxu0 0.0
        %2061 = vmatprep.subr.mxu0 0.0
        %2062 = vmatpush1.msra.mxu0 0.0
        %2063 = vmatprep.subr.mxu0 0.0
        %2064 = vmatpush1.msra.mxu0 0.0
        %2065 = vmatprep.subr.mxu0 0.0
        %2066 = vmatpush1.msra.mxu0 0.0
        %2067 = vmatprep.subr.mxu0 0.0
        %2068 = vmatpush1.msra.mxu0 0.0
        %2069 = vmatprep.subr.mxu0 0.0
        %2070 = vmatpush1.msra.mxu0 0.0
        %2071 = vmatprep.subr.mxu0 0.0
        %2072 = vmatpush1.msra.mxu0 0.0
        %2073 = vmatprep.subr.mxu0 0.0
        %v2074 = vand.u32 %v1760, 4294901760
        %2075 = vmatpush1.msra.mxu0 %v2074
        %2076 = vmatprep.subr.mxu0 0.0
        %v2077 = vand.u32 %v1759, 4294901760
        %2078 = vmatpush1.msra.mxu0 %v2077
        %2079 = vmatprep.subr.mxu0 0.0
        %v2080 = vand.u32 %v1758, 4294901760
        %2081 = vmatpush1.msra.mxu0 %v2080
        %2082 = vmatprep.subr.mxu0 0.0
        %v2083 = vand.u32 %v1757, 4294901760
        %2084 = vmatpush1.msra.mxu0 %v2083
        %2085 = vmatprep.subr.mxu0 0.0
        %2086 = vmatpush2.msra.mxu0 0.0
        %2087 = vmatprep.subr.mxu0 0.0
        %2088 = vmatpush2.msra.mxu0 0.0
        %2089 = vmatprep.subr.mxu0 0.0
        %2090 = vmatpush2.msra.mxu0 0.0
        %2091 = vmatprep.subr.mxu0 0.0
        %2092 = vmatpush2.msra.mxu0 0.0
        %2093 = vmatprep.subr.mxu0 0.0
        %2094 = vmatpush2.msra.mxu0 0.0
        %2095 = vmatprep.subr.mxu0 0.0
        %2096 = vmatpush2.msra.mxu0 0.0
        %2097 = vmatprep.subr.mxu0 0.0
        %2098 = vmatpush2.msra.mxu0 0.0
        %2099 = vmatprep.subr.mxu0 0.0
        %2100 = vmatpush2.msra.mxu0 0.0
        %2101 = vmatprep.subr.mxu0 0.0
        %2102 = vmatpush2.msra.mxu0 0.0
        %2103 = vmatprep.subr.mxu0 0.0
        %2104 = vmatpush2.msra.mxu0 0.0
        %2105 = vmatprep.subr.mxu0 0.0
        %2106 = vmatpush2.msra.mxu0 0.0
        %2107 = vmatprep.subr.mxu0 0.0
        %2108 = vmatpush2.msra.mxu0 0.0
        %2109 = vmatprep.subr.mxu0 0.0
        %2110 = vmatpush2.msra.mxu0 0.0
        %2111 = vmatprep.subr.mxu0 0.0
        %2112 = vmatpush2.msra.mxu0 0.0
        %2113 = vmatprep.subr.mxu0 0.0
        %2114 = vmatpush2.msra.mxu0 0.0
        %2115 = vmatprep.subr.mxu0 0.0
        %2116 = vmatpush2.msra.mxu0 0.0
        %2117 = vmatprep.mubr.f32.mxu0 0.0
        %v2118 = vand.u32 %v1772, 4294901760
        %v2119 = vsub.f32 %v1772, %v2118
        %v2120 = vand.u32 %v2119, 4294901760
        %2121 = vmatmul.mubr.f32.gmra.mxu0 %v2120
        %v2122 = vpop.f32.mrf.mxu0
        %v2123 = vadd.f32 %v2039, %v2122
        %v2124 = vpop.f32.mrf.mxu0
        %2125 = vmatprep.mubr.f32.mxu0 0.0
        %v2126 = vand.u32 %v1774, 4294901760
        %v2127 = vsub.f32 %v1774, %v2126
        %v2128 = vand.u32 %v2127, 4294901760
        %2129 = vmatmul.mubr.f32.gmra.mxu0 %v2128
        %v2130 = vpop.f32.mrf.mxu0
        %v2131 = vadd.f32 %v2046, %v2130
        %v2132 = vpop.f32.mrf.mxu0
        %2133 = vdwg.mxu0
        %2134 = vmatprep.subr.mxu0 0.0
        %2135 = vmatpush1.msra.mxu0 0.0
        %2136 = vmatprep.subr.mxu0 0.0
        %2137 = vmatpush1.msra.mxu0 0.0
        %2138 = vmatprep.subr.mxu0 0.0
        %2139 = vmatpush1.msra.mxu0 0.0
        %2140 = vmatprep.subr.mxu0 0.0
        %2141 = vmatpush1.msra.mxu0 0.0
        %2142 = vmatprep.subr.mxu0 0.0
        %2143 = vmatpush1.msra.mxu0 0.0
        %2144 = vmatprep.subr.mxu0 0.0
        %2145 = vmatpush1.msra.mxu0 0.0
        %2146 = vmatprep.subr.mxu0 0.0
        %2147 = vmatpush1.msra.mxu0 0.0
        %2148 = vmatprep.subr.mxu0 0.0
        %2149 = vmatpush1.msra.mxu0 0.0
        %2150 = vmatprep.subr.mxu0 0.0
        %2151 = vmatpush1.msra.mxu0 0.0
        %2152 = vmatprep.subr.mxu0 0.0
        %2153 = vmatpush1.msra.mxu0 0.0
        %2154 = vmatprep.subr.mxu0 0.0
        %2155 = vmatpush1.msra.mxu0 0.0
        %2156 = vmatprep.subr.mxu0 0.0
        %2157 = vmatpush1.msra.mxu0 0.0
        %2158 = vmatprep.subr.mxu0 0.0
        %v2159 = vand.u32 %v1760, 4294901760
        %v2160 = vsub.f32 %v1760, %v2159
        %v2161 = vand.u32 %v2160, 4294901760
        %2162 = vmatpush1.msra.mxu0 %v2161
        %2163 = vmatprep.subr.mxu0 0.0
        %v2164 = vand.u32 %v1759, 4294901760
        %v2165 = vsub.f32 %v1759, %v2164
        %v2166 = vand.u32 %v2165, 4294901760
        %2167 = vmatpush1.msra.mxu0 %v2166
        %2168 = vmatprep.subr.mxu0 0.0
        %v2169 = vand.u32 %v1758, 4294901760
        %v2170 = vsub.f32 %v1758, %v2169
        %v2171 = vand.u32 %v2170, 4294901760
        %2172 = vmatpush1.msra.mxu0 %v2171
        %2173 = vmatprep.subr.mxu0 0.0
        %v2174 = vand.u32 %v1757, 4294901760
        %v2175 = vsub.f32 %v1757, %v2174
        %v2176 = vand.u32 %v2175, 4294901760
        %2177 = vmatpush1.msra.mxu0 %v2176
        %2178 = vmatprep.subr.mxu0 0.0
        %2179 = vmatpush2.msra.mxu0 0.0
        %2180 = vmatprep.subr.mxu0 0.0
        %2181 = vmatpush2.msra.mxu0 0.0
        %2182 = vmatprep.subr.mxu0 0.0
        %2183 = vmatpush2.msra.mxu0 0.0
        %2184 = vmatprep.subr.mxu0 0.0
        %2185 = vmatpush2.msra.mxu0 0.0
        %2186 = vmatprep.subr.mxu0 0.0
        %2187 = vmatpush2.msra.mxu0 0.0
        %2188 = vmatprep.subr.mxu0 0.0
        %2189 = vmatpush2.msra.mxu0 0.0
        %2190 = vmatprep.subr.mxu0 0.0
        %2191 = vmatpush2.msra.mxu0 0.0
        %2192 = vmatprep.subr.mxu0 0.0
        %2193 = vmatpush2.msra.mxu0 0.0
        %2194 = vmatprep.subr.mxu0 0.0
        %2195 = vmatpush2.msra.mxu0 0.0
        %2196 = vmatprep.subr.mxu0 0.0
        %2197 = vmatpush2.msra.mxu0 0.0
        %2198 = vmatprep.subr.mxu0 0.0
        %2199 = vmatpush2.msra.mxu0 0.0
        %2200 = vmatprep.subr.mxu0 0.0
        %2201 = vmatpush2.msra.mxu0 0.0
        %2202 = vmatprep.subr.mxu0 0.0
        %2203 = vmatpush2.msra.mxu0 0.0
        %2204 = vmatprep.subr.mxu0 0.0
        %2205 = vmatpush2.msra.mxu0 0.0
        %2206 = vmatprep.subr.mxu0 0.0
        %2207 = vmatpush2.msra.mxu0 0.0
        %2208 = vmatprep.subr.mxu0 0.0
        %2209 = vmatpush2.msra.mxu0 0.0
        %2210 = vmatprep.mubr.f32.mxu0 0.0
        %v2211 = vand.u32 %v1772, 4294901760
        %2212 = vmatmul.mubr.f32.gmra.mxu0 %v2211
        %v2213 = vpop.f32.mrf.mxu0
        %v2214 = vadd.f32 %v2123, %v2213
        %v2215 = vpop.f32.mrf.mxu0
        %2216 = vmatprep.mubr.f32.mxu0 0.0
        %v2217 = vand.u32 %v1774, 4294901760
        %2218 = vmatmul.mubr.f32.gmra.mxu0 %v2217
        %v2219 = vpop.f32.mrf.mxu0
        %v2220 = vadd.f32 %v2131, %v2219
        %v2221 = vpop.f32.mrf.mxu0
        %2222 = vdwg.mxu0
        %2223 = vmatprep.subr.mxu0 0.0
        %2224 = vmatpush1.msra.mxu0 0.0
        %2225 = vmatprep.subr.mxu0 0.0
        %2226 = vmatpush1.msra.mxu0 0.0
        %2227 = vmatprep.subr.mxu0 0.0
        %2228 = vmatpush1.msra.mxu0 0.0
        %2229 = vmatprep.subr.mxu0 0.0
        %2230 = vmatpush1.msra.mxu0 0.0
        %2231 = vmatprep.subr.mxu0 0.0
        %2232 = vmatpush1.msra.mxu0 0.0
        %2233 = vmatprep.subr.mxu0 0.0
        %2234 = vmatpush1.msra.mxu0 0.0
        %2235 = vmatprep.subr.mxu0 0.0
        %2236 = vmatpush1.msra.mxu0 0.0
        %2237 = vmatprep.subr.mxu0 0.0
        %2238 = vmatpush1.msra.mxu0 0.0
        %2239 = vmatprep.subr.mxu0 0.0
        %2240 = vmatpush1.msra.mxu0 0.0
        %2241 = vmatprep.subr.mxu0 0.0
        %2242 = vmatpush1.msra.mxu0 0.0
        %2243 = vmatprep.subr.mxu0 0.0
        %2244 = vmatpush1.msra.mxu0 0.0
        %2245 = vmatprep.subr.mxu0 0.0
        %2246 = vmatpush1.msra.mxu0 0.0
        %2247 = vmatprep.subr.mxu0 0.0
        %v2248 = vand.u32 %v1760, 4294901760
        %2249 = vmatpush1.msra.mxu0 %v2248
        %2250 = vmatprep.subr.mxu0 0.0
        %v2251 = vand.u32 %v1759, 4294901760
        %2252 = vmatpush1.msra.mxu0 %v2251
        %2253 = vmatprep.subr.mxu0 0.0
        %v2254 = vand.u32 %v1758, 4294901760
        %2255 = vmatpush1.msra.mxu0 %v2254
        %2256 = vmatprep.subr.mxu0 0.0
        %v2257 = vand.u32 %v1757, 4294901760
        %2258 = vmatpush1.msra.mxu0 %v2257
        %2259 = vmatprep.subr.mxu0 0.0
        %2260 = vmatpush2.msra.mxu0 0.0
        %2261 = vmatprep.subr.mxu0 0.0
        %2262 = vmatpush2.msra.mxu0 0.0
        %2263 = vmatprep.subr.mxu0 0.0
        %2264 = vmatpush2.msra.mxu0 0.0
        %2265 = vmatprep.subr.mxu0 0.0
        %2266 = vmatpush2.msra.mxu0 0.0
        %2267 = vmatprep.subr.mxu0 0.0
        %2268 = vmatpush2.msra.mxu0 0.0
        %2269 = vmatprep.subr.mxu0 0.0
        %2270 = vmatpush2.msra.mxu0 0.0
        %2271 = vmatprep.subr.mxu0 0.0
        %2272 = vmatpush2.msra.mxu0 0.0
        %2273 = vmatprep.subr.mxu0 0.0
        %2274 = vmatpush2.msra.mxu0 0.0
        %2275 = vmatprep.subr.mxu0 0.0
        %2276 = vmatpush2.msra.mxu0 0.0
        %2277 = vmatprep.subr.mxu0 0.0
        %2278 = vmatpush2.msra.mxu0 0.0
        %2279 = vmatprep.subr.mxu0 0.0
        %2280 = vmatpush2.msra.mxu0 0.0
        %2281 = vmatprep.subr.mxu0 0.0
        %2282 = vmatpush2.msra.mxu0 0.0
        %2283 = vmatprep.subr.mxu0 0.0
        %2284 = vmatpush2.msra.mxu0 0.0
        %2285 = vmatprep.subr.mxu0 0.0
        %2286 = vmatpush2.msra.mxu0 0.0
        %2287 = vmatprep.subr.mxu0 0.0
        %2288 = vmatpush2.msra.mxu0 0.0
        %2289 = vmatprep.subr.mxu0 0.0
        %2290 = vmatpush2.msra.mxu0 0.0
        %2291 = vmatprep.mubr.f32.mxu0 0.0
        %v2292 = vand.u32 %v1772, 4294901760
        %2293 = vmatmul.mubr.f32.gmra.mxu0 %v2292
        %v2294 = vpop.f32.mrf.mxu0
        %v2295 = vadd.f32 %v2214, %v2294
        %v2296 = vpop.f32.mrf.mxu0
        %2297 = vmatprep.mubr.f32.mxu0 0.0
        %v2298 = vand.u32 %v1774, 4294901760
        %2299 = vmatmul.mubr.f32.gmra.mxu0 %v2298
        %v2300 = vpop.f32.mrf.mxu0
        %v2301 = vadd.f32 %v2220, %v2300
        %v2302 = vpop.f32.mrf.mxu0
        %2303 = vdwg.mxu0
        %v2304 = vld [vmem:[%s157 + $0x18] sm:$0xff]
        %v2305 = vld [vmem:[%s157 + $0x20] sm:$0xff]
        %v2306 = vmul.f32 %v2295, 1.442695
        %v2307 = vpow.pop %v2306
        %v2308 = vmul.f32 %v2301, 1.442695
        %v2309 = vpow.pop %v2308
        %2312 = vrot.lane.b32.xlu0 %v2304, 8
        %v2313 = vpop.permute.xlu0 %2312
        %2314 = vrot.lane.b32.xlu0 %v2305, 8
        %v2315 = vpop.permute.xlu0 %2314
        %v2318 = vmul.f32 %v2307, %v2313
        %v2319 = vmul.f32 %v2309, %v2315
        %2322 = vrot.lane.b32.xlu0 %v2318, 120
        %v2323 = vpop.permute.xlu0 %2322
        %2324 = vrot.lane.b32.xlu0 %v2319, 120
        %v2325 = vpop.permute.xlu0 %2324
        %v2328 = vadd.f32 %v2295, %v2323
        %v2329 = vadd.f32 %v2301, %v2325
        %v2330 = vld [vmem:[#allocation2 + $0x80] sm:$0xff]
        %v2331 = vld [vmem:[#allocation2 + $0x88] sm:$0x1]
        %v2333 = vsel %vm176, %v2328, 0
        %v2336 = vsel %vm176, %v2329, 0
        %2338 = vmatprep.subr.mxu0 0.0
        %2339 = vmatpush1.msra.mxu0 0.0
        %2340 = vmatprep.subr.mxu0 0.0
        %2341 = vmatpush1.msra.mxu0 0.0
        %2342 = vmatprep.subr.mxu0 0.0
        %2343 = vmatpush1.msra.mxu0 0.0
        %2344 = vmatprep.subr.mxu0 0.0
        %2345 = vmatpush1.msra.mxu0 0.0
        %2346 = vmatprep.subr.mxu0 0.0
        %2347 = vmatpush1.msra.mxu0 0.0
        %2348 = vmatprep.subr.mxu0 0.0
        %2349 = vmatpush1.msra.mxu0 0.0
        %2350 = vmatprep.subr.mxu0 0.0
        %2351 = vmatpush1.msra.mxu0 0.0
        %2352 = vmatprep.subr.mxu0 0.0
        %2353 = vmatpush1.msra.mxu0 0.0
        %2354 = vmatprep.subr.mxu0 0.0
        %2355 = vmatpush1.msra.mxu0 0.0
        %2356 = vmatprep.subr.mxu0 0.0
        %2357 = vmatpush1.msra.mxu0 0.0
        %2358 = vmatprep.subr.mxu0 0.0
        %2359 = vmatpush1.msra.mxu0 0.0
        %2360 = vmatprep.subr.mxu0 0.0
        %2361 = vmatpush1.msra.mxu0 0.0
        %2362 = vmatprep.subr.mxu0 0.0
        %2363 = vmatpush1.msra.mxu0 0.0
        %2364 = vmatprep.subr.mxu0 0.0
        %2365 = vmatpush1.msra.mxu0 0.0
        %2366 = vmatprep.subr.mxu0 0.0
        %2367 = vmatpush1.msra.mxu0 0.0
        %2368 = vmatprep.subr.mxu0 0.0
        %v2369 = vand.u32 %v2330, 4294901760
        %2370 = vmatpush1.msra.mxu0 %v2369
        %2371 = vmatprep.subr.mxu0 0.0
        %2372 = vmatpush2.msra.mxu0 0.0
        %2373 = vmatprep.subr.mxu0 0.0
        %2374 = vmatpush2.msra.mxu0 0.0
        %2375 = vmatprep.subr.mxu0 0.0
        %2376 = vmatpush2.msra.mxu0 0.0
        %2377 = vmatprep.subr.mxu0 0.0
        %2378 = vmatpush2.msra.mxu0 0.0
        %2379 = vmatprep.subr.mxu0 0.0
        %2380 = vmatpush2.msra.mxu0 0.0
        %2381 = vmatprep.subr.mxu0 0.0
        %2382 = vmatpush2.msra.mxu0 0.0
        %2383 = vmatprep.subr.mxu0 0.0
        %2384 = vmatpush2.msra.mxu0 0.0
        %2385 = vmatprep.subr.mxu0 0.0
        %2386 = vmatpush2.msra.mxu0 0.0
        %2387 = vmatprep.subr.mxu0 0.0
        %2388 = vmatpush2.msra.mxu0 0.0
        %2389 = vmatprep.subr.mxu0 0.0
        %2390 = vmatpush2.msra.mxu0 0.0
        %2391 = vmatprep.subr.mxu0 0.0
        %2392 = vmatpush2.msra.mxu0 0.0
        %2393 = vmatprep.subr.mxu0 0.0
        %2394 = vmatpush2.msra.mxu0 0.0
        %2395 = vmatprep.subr.mxu0 0.0
        %2396 = vmatpush2.msra.mxu0 0.0
        %2397 = vmatprep.subr.mxu0 0.0
        %2398 = vmatpush2.msra.mxu0 0.0
        %2399 = vmatprep.subr.mxu0 0.0
        %2400 = vmatpush2.msra.mxu0 0.0
        %2401 = vmatprep.subr.mxu0 0.0
        %2402 = vmatpush2.msra.mxu0 0.0
        %2403 = vmatprep.mubr.f32.mxu0 0.0
        %v2404 = vand.u32 %v2333, 4294901760
        %v2405 = vsub.f32 %v2333, %v2404
        %v2406 = vand.u32 %v2405, 4294901760
        %v2407 = vsub.f32 %v2405, %v2406
        %v2408 = vand.u32 %v2407, 4294901760
        %2409 = vmatmul.mubr.f32.gmra.mxu0 %v2408
        %v2410 = vpop.f32.mrf.mxu0
        %v2411 = vadd.f32 0.0, %v2410
        %v2412 = vpop.f32.mrf.mxu0
        %2413 = vmatprep.mubr.f32.mxu0 0.0
        %v2414 = vand.u32 %v2336, 4294901760
        %v2415 = vsub.f32 %v2336, %v2414
        %v2416 = vand.u32 %v2415, 4294901760
        %v2417 = vsub.f32 %v2415, %v2416
        %v2418 = vand.u32 %v2417, 4294901760
        %2419 = vmatmul.mubr.f32.gmra.mxu0 %v2418
        %v2420 = vpop.f32.mrf.mxu0
        %v2421 = vadd.f32 0.0, %v2420
        %v2422 = vpop.f32.mrf.mxu0
        %2423 = vdwg.mxu0
        %2424 = vmatprep.subr.mxu0 0.0
        %2425 = vmatpush1.msra.mxu0 0.0
        %2426 = vmatprep.subr.mxu0 0.0
        %2427 = vmatpush1.msra.mxu0 0.0
        %2428 = vmatprep.subr.mxu0 0.0
        %2429 = vmatpush1.msra.mxu0 0.0
        %2430 = vmatprep.subr.mxu0 0.0
        %2431 = vmatpush1.msra.mxu0 0.0
        %2432 = vmatprep.subr.mxu0 0.0
        %2433 = vmatpush1.msra.mxu0 0.0
        %2434 = vmatprep.subr.mxu0 0.0
        %2435 = vmatpush1.msra.mxu0 0.0
        %2436 = vmatprep.subr.mxu0 0.0
        %2437 = vmatpush1.msra.mxu0 0.0
        %2438 = vmatprep.subr.mxu0 0.0
        %2439 = vmatpush1.msra.mxu0 0.0
        %2440 = vmatprep.subr.mxu0 0.0
        %2441 = vmatpush1.msra.mxu0 0.0
        %2442 = vmatprep.subr.mxu0 0.0
        %2443 = vmatpush1.msra.mxu0 0.0
        %2444 = vmatprep.subr.mxu0 0.0
        %2445 = vmatpush1.msra.mxu0 0.0
        %2446 = vmatprep.subr.mxu0 0.0
        %2447 = vmatpush1.msra.mxu0 0.0
        %2448 = vmatprep.subr.mxu0 0.0
        %2449 = vmatpush1.msra.mxu0 0.0
        %2450 = vmatprep.subr.mxu0 0.0
        %2451 = vmatpush1.msra.mxu0 0.0
        %2452 = vmatprep.subr.mxu0 0.0
        %2453 = vmatpush1.msra.mxu0 0.0
        %2454 = vmatprep.subr.mxu0 0.0
        %v2455 = vand.u32 %v2330, 4294901760
        %v2456 = vsub.f32 %v2330, %v2455
        %v2457 = vand.u32 %v2456, 4294901760
        %v2458 = vsub.f32 %v2456, %v2457
        %v2459 = vand.u32 %v2458, 4294901760
        %2460 = vmatpush1.msra.mxu0 %v2459
        %2461 = vmatprep.subr.mxu0 0.0
        %2462 = vmatpush2.msra.mxu0 0.0
        %2463 = vmatprep.subr.mxu0 0.0
        %2464 = vmatpush2.msra.mxu0 0.0
        %2465 = vmatprep.subr.mxu0 0.0
        %2466 = vmatpush2.msra.mxu0 0.0
        %2467 = vmatprep.subr.mxu0 0.0
        %2468 = vmatpush2.msra.mxu0 0.0
        %2469 = vmatprep.subr.mxu0 0.0
        %2470 = vmatpush2.msra.mxu0 0.0
        %2471 = vmatprep.subr.mxu0 0.0
        %2472 = vmatpush2.msra.mxu0 0.0
        %2473 = vmatprep.subr.mxu0 0.0
        %2474 = vmatpush2.msra.mxu0 0.0
        %2475 = vmatprep.subr.mxu0 0.0
        %2476 = vmatpush2.msra.mxu0 0.0
        %2477 = vmatprep.subr.mxu0 0.0
        %2478 = vmatpush2.msra.mxu0 0.0
        %2479 = vmatprep.subr.mxu0 0.0
        %2480 = vmatpush2.msra.mxu0 0.0
        %2481 = vmatprep.subr.mxu0 0.0
        %2482 = vmatpush2.msra.mxu0 0.0
        %2483 = vmatprep.subr.mxu0 0.0
        %2484 = vmatpush2.msra.mxu0 0.0
        %2485 = vmatprep.subr.mxu0 0.0
        %2486 = vmatpush2.msra.mxu0 0.0
        %2487 = vmatprep.subr.mxu0 0.0
        %2488 = vmatpush2.msra.mxu0 0.0
        %2489 = vmatprep.subr.mxu0 0.0
        %2490 = vmatpush2.msra.mxu0 0.0
        %2491 = vmatprep.subr.mxu0 0.0
        %2492 = vmatpush2.msra.mxu0 0.0
        %2493 = vmatprep.mubr.f32.mxu0 0.0
        %v2494 = vand.u32 %v2333, 4294901760
        %2495 = vmatmul.mubr.f32.gmra.mxu0 %v2494
        %v2496 = vpop.f32.mrf.mxu0
        %v2497 = vadd.f32 %v2411, %v2496
        %v2498 = vpop.f32.mrf.mxu0
        %2499 = vmatprep.mubr.f32.mxu0 0.0
        %v2500 = vand.u32 %v2336, 4294901760
        %2501 = vmatmul.mubr.f32.gmra.mxu0 %v2500
        %v2502 = vpop.f32.mrf.mxu0
        %v2503 = vadd.f32 %v2421, %v2502
        %v2504 = vpop.f32.mrf.mxu0
        %2505 = vdwg.mxu0
        %2506 = vmatprep.subr.mxu0 0.0
        %2507 = vmatpush1.msra.mxu0 0.0
        %2508 = vmatprep.subr.mxu0 0.0
        %2509 = vmatpush1.msra.mxu0 0.0
        %2510 = vmatprep.subr.mxu0 0.0
        %2511 = vmatpush1.msra.mxu0 0.0
        %2512 = vmatprep.subr.mxu0 0.0
        %2513 = vmatpush1.msra.mxu0 0.0
        %2514 = vmatprep.subr.mxu0 0.0
        %2515 = vmatpush1.msra.mxu0 0.0
        %2516 = vmatprep.subr.mxu0 0.0
        %2517 = vmatpush1.msra.mxu0 0.0
        %2518 = vmatprep.subr.mxu0 0.0
        %2519 = vmatpush1.msra.mxu0 0.0
        %2520 = vmatprep.subr.mxu0 0.0
        %2521 = vmatpush1.msra.mxu0 0.0
        %2522 = vmatprep.subr.mxu0 0.0
        %2523 = vmatpush1.msra.mxu0 0.0
        %2524 = vmatprep.subr.mxu0 0.0
        %2525 = vmatpush1.msra.mxu0 0.0
        %2526 = vmatprep.subr.mxu0 0.0
        %2527 = vmatpush1.msra.mxu0 0.0
        %2528 = vmatprep.subr.mxu0 0.0
        %2529 = vmatpush1.msra.mxu0 0.0
        %2530 = vmatprep.subr.mxu0 0.0
        %2531 = vmatpush1.msra.mxu0 0.0
        %2532 = vmatprep.subr.mxu0 0.0
        %2533 = vmatpush1.msra.mxu0 0.0
        %2534 = vmatprep.subr.mxu0 0.0
        %2535 = vmatpush1.msra.mxu0 0.0
        %2536 = vmatprep.subr.mxu0 0.0
        %v2537 = vand.u32 %v2330, 4294901760
        %v2538 = vsub.f32 %v2330, %v2537
        %2539 = vmatpush1.msra.mxu0 %v2538
        %2540 = vmatprep.subr.mxu0 0.0
        %2541 = vmatpush2.msra.mxu0 0.0
        %2542 = vmatprep.subr.mxu0 0.0
        %2543 = vmatpush2.msra.mxu0 0.0
        %2544 = vmatprep.subr.mxu0 0.0
        %2545 = vmatpush2.msra.mxu0 0.0
        %2546 = vmatprep.subr.mxu0 0.0
        %2547 = vmatpush2.msra.mxu0 0.0
        %2548 = vmatprep.subr.mxu0 0.0
        %2549 = vmatpush2.msra.mxu0 0.0
        %2550 = vmatprep.subr.mxu0 0.0
        %2551 = vmatpush2.msra.mxu0 0.0
        %2552 = vmatprep.subr.mxu0 0.0
        %2553 = vmatpush2.msra.mxu0 0.0
        %2554 = vmatprep.subr.mxu0 0.0
        %2555 = vmatpush2.msra.mxu0 0.0
        %2556 = vmatprep.subr.mxu0 0.0
        %2557 = vmatpush2.msra.mxu0 0.0
        %2558 = vmatprep.subr.mxu0 0.0
        %2559 = vmatpush2.msra.mxu0 0.0
        %2560 = vmatprep.subr.mxu0 0.0
        %2561 = vmatpush2.msra.mxu0 0.0
        %2562 = vmatprep.subr.mxu0 0.0
        %2563 = vmatpush2.msra.mxu0 0.0
        %2564 = vmatprep.subr.mxu0 0.0
        %2565 = vmatpush2.msra.mxu0 0.0
        %2566 = vmatprep.subr.mxu0 0.0
        %2567 = vmatpush2.msra.mxu0 0.0
        %2568 = vmatprep.subr.mxu0 0.0
        %2569 = vmatpush2.msra.mxu0 0.0
        %2570 = vmatprep.subr.mxu0 0.0
        %2571 = vmatpush2.msra.mxu0 0.0
        %2572 = vmatprep.mubr.f32.mxu0 0.0
        %v2573 = vand.u32 %v2333, 4294901760
        %v2574 = vsub.f32 %v2333, %v2573
        %2575 = vmatmul.mubr.f32.gmra.mxu0 %v2574
        %v2576 = vpop.f32.mrf.mxu0
        %v2577 = vadd.f32 %v2497, %v2576
        %v2578 = vpop.f32.mrf.mxu0
        %2579 = vmatprep.mubr.f32.mxu0 0.0
        %v2580 = vand.u32 %v2336, 4294901760
        %v2581 = vsub.f32 %v2336, %v2580
        %2582 = vmatmul.mubr.f32.gmra.mxu0 %v2581
        %v2583 = vpop.f32.mrf.mxu0
        %v2584 = vadd.f32 %v2503, %v2583
        %v2585 = vpop.f32.mrf.mxu0
        %2586 = vdwg.mxu0
        %2587 = vmatprep.subr.mxu0 0.0
        %2588 = vmatpush1.msra.mxu0 0.0
        %2589 = vmatprep.subr.mxu0 0.0
        %2590 = vmatpush1.msra.mxu0 0.0
        %2591 = vmatprep.subr.mxu0 0.0
        %2592 = vmatpush1.msra.mxu0 0.0
        %2593 = vmatprep.subr.mxu0 0.0
        %2594 = vmatpush1.msra.mxu0 0.0
        %2595 = vmatprep.subr.mxu0 0.0
        %2596 = vmatpush1.msra.mxu0 0.0
        %2597 = vmatprep.subr.mxu0 0.0
        %2598 = vmatpush1.msra.mxu0 0.0
        %2599 = vmatprep.subr.mxu0 0.0
        %2600 = vmatpush1.msra.mxu0 0.0
        %2601 = vmatprep.subr.mxu0 0.0
        %2602 = vmatpush1.msra.mxu0 0.0
        %2603 = vmatprep.subr.mxu0 0.0
        %2604 = vmatpush1.msra.mxu0 0.0
        %2605 = vmatprep.subr.mxu0 0.0
        %2606 = vmatpush1.msra.mxu0 0.0
        %2607 = vmatprep.subr.mxu0 0.0
        %2608 = vmatpush1.msra.mxu0 0.0
        %2609 = vmatprep.subr.mxu0 0.0
        %2610 = vmatpush1.msra.mxu0 0.0
        %2611 = vmatprep.subr.mxu0 0.0
        %2612 = vmatpush1.msra.mxu0 0.0
        %2613 = vmatprep.subr.mxu0 0.0
        %2614 = vmatpush1.msra.mxu0 0.0
        %2615 = vmatprep.subr.mxu0 0.0
        %2616 = vmatpush1.msra.mxu0 0.0
        %2617 = vmatprep.subr.mxu0 0.0
        %v2618 = vand.u32 %v2330, 4294901760
        %2619 = vmatpush1.msra.mxu0 %v2618
        %2620 = vmatprep.subr.mxu0 0.0
        %2621 = vmatpush2.msra.mxu0 0.0
        %2622 = vmatprep.subr.mxu0 0.0
        %2623 = vmatpush2.msra.mxu0 0.0
        %2624 = vmatprep.subr.mxu0 0.0
        %2625 = vmatpush2.msra.mxu0 0.0
        %2626 = vmatprep.subr.mxu0 0.0
        %2627 = vmatpush2.msra.mxu0 0.0
        %2628 = vmatprep.subr.mxu0 0.0
        %2629 = vmatpush2.msra.mxu0 0.0
        %2630 = vmatprep.subr.mxu0 0.0
        %2631 = vmatpush2.msra.mxu0 0.0
        %2632 = vmatprep.subr.mxu0 0.0
        %2633 = vmatpush2.msra.mxu0 0.0
        %2634 = vmatprep.subr.mxu0 0.0
        %2635 = vmatpush2.msra.mxu0 0.0
        %2636 = vmatprep.subr.mxu0 0.0
        %2637 = vmatpush2.msra.mxu0 0.0
        %2638 = vmatprep.subr.mxu0 0.0
        %2639 = vmatpush2.msra.mxu0 0.0
        %2640 = vmatprep.subr.mxu0 0.0
        %2641 = vmatpush2.msra.mxu0 0.0
        %2642 = vmatprep.subr.mxu0 0.0
        %2643 = vmatpush2.msra.mxu0 0.0
        %2644 = vmatprep.subr.mxu0 0.0
        %2645 = vmatpush2.msra.mxu0 0.0
        %2646 = vmatprep.subr.mxu0 0.0
        %2647 = vmatpush2.msra.mxu0 0.0
        %2648 = vmatprep.subr.mxu0 0.0
        %2649 = vmatpush2.msra.mxu0 0.0
        %2650 = vmatprep.subr.mxu0 0.0
        %2651 = vmatpush2.msra.mxu0 0.0
        %2652 = vmatprep.mubr.f32.mxu0 0.0
        %v2653 = vand.u32 %v2333, 4294901760
        %v2654 = vsub.f32 %v2333, %v2653
        %v2655 = vand.u32 %v2654, 4294901760
        %2656 = vmatmul.mubr.f32.gmra.mxu0 %v2655
        %v2657 = vpop.f32.mrf.mxu0
        %v2658 = vadd.f32 %v2577, %v2657
        %v2659 = vpop.f32.mrf.mxu0
        %2660 = vmatprep.mubr.f32.mxu0 0.0
        %v2661 = vand.u32 %v2336, 4294901760
        %v2662 = vsub.f32 %v2336, %v2661
        %v2663 = vand.u32 %v2662, 4294901760
        %2664 = vmatmul.mubr.f32.gmra.mxu0 %v2663
        %v2665 = vpop.f32.mrf.mxu0
        %v2666 = vadd.f32 %v2584, %v2665
        %v2667 = vpop.f32.mrf.mxu0
        %2668 = vdwg.mxu0
        %2669 = vmatprep.subr.mxu0 0.0
        %2670 = vmatpush1.msra.mxu0 0.0
        %2671 = vmatprep.subr.mxu0 0.0
        %2672 = vmatpush1.msra.mxu0 0.0
        %2673 = vmatprep.subr.mxu0 0.0
        %2674 = vmatpush1.msra.mxu0 0.0
        %2675 = vmatprep.subr.mxu0 0.0
        %2676 = vmatpush1.msra.mxu0 0.0
        %2677 = vmatprep.subr.mxu0 0.0
        %2678 = vmatpush1.msra.mxu0 0.0
        %2679 = vmatprep.subr.mxu0 0.0
        %2680 = vmatpush1.msra.mxu0 0.0
        %2681 = vmatprep.subr.mxu0 0.0
        %2682 = vmatpush1.msra.mxu0 0.0
        %2683 = vmatprep.subr.mxu0 0.0
        %2684 = vmatpush1.msra.mxu0 0.0
        %2685 = vmatprep.subr.mxu0 0.0
        %2686 = vmatpush1.msra.mxu0 0.0
        %2687 = vmatprep.subr.mxu0 0.0
        %2688 = vmatpush1.msra.mxu0 0.0
        %2689 = vmatprep.subr.mxu0 0.0
        %2690 = vmatpush1.msra.mxu0 0.0
        %2691 = vmatprep.subr.mxu0 0.0
        %2692 = vmatpush1.msra.mxu0 0.0
        %2693 = vmatprep.subr.mxu0 0.0
        %2694 = vmatpush1.msra.mxu0 0.0
        %2695 = vmatprep.subr.mxu0 0.0
        %2696 = vmatpush1.msra.mxu0 0.0
        %2697 = vmatprep.subr.mxu0 0.0
        %2698 = vmatpush1.msra.mxu0 0.0
        %2699 = vmatprep.subr.mxu0 0.0
        %v2700 = vand.u32 %v2330, 4294901760
        %v2701 = vsub.f32 %v2330, %v2700
        %v2702 = vand.u32 %v2701, 4294901760
        %2703 = vmatpush1.msra.mxu0 %v2702
        %2704 = vmatprep.subr.mxu0 0.0
        %2705 = vmatpush2.msra.mxu0 0.0
        %2706 = vmatprep.subr.mxu0 0.0
        %2707 = vmatpush2.msra.mxu0 0.0
        %2708 = vmatprep.subr.mxu0 0.0
        %2709 = vmatpush2.msra.mxu0 0.0
        %2710 = vmatprep.subr.mxu0 0.0
        %2711 = vmatpush2.msra.mxu0 0.0
        %2712 = vmatprep.subr.mxu0 0.0
        %2713 = vmatpush2.msra.mxu0 0.0
        %2714 = vmatprep.subr.mxu0 0.0
        %2715 = vmatpush2.msra.mxu0 0.0
        %2716 = vmatprep.subr.mxu0 0.0
        %2717 = vmatpush2.msra.mxu0 0.0
        %2718 = vmatprep.subr.mxu0 0.0
        %2719 = vmatpush2.msra.mxu0 0.0
        %2720 = vmatprep.subr.mxu0 0.0
        %2721 = vmatpush2.msra.mxu0 0.0
        %2722 = vmatprep.subr.mxu0 0.0
        %2723 = vmatpush2.msra.mxu0 0.0
        %2724 = vmatprep.subr.mxu0 0.0
        %2725 = vmatpush2.msra.mxu0 0.0
        %2726 = vmatprep.subr.mxu0 0.0
        %2727 = vmatpush2.msra.mxu0 0.0
        %2728 = vmatprep.subr.mxu0 0.0
        %2729 = vmatpush2.msra.mxu0 0.0
        %2730 = vmatprep.subr.mxu0 0.0
        %2731 = vmatpush2.msra.mxu0 0.0
        %2732 = vmatprep.subr.mxu0 0.0
        %2733 = vmatpush2.msra.mxu0 0.0
        %2734 = vmatprep.subr.mxu0 0.0
        %2735 = vmatpush2.msra.mxu0 0.0
        %2736 = vmatprep.mubr.f32.mxu0 0.0
        %v2737 = vand.u32 %v2333, 4294901760
        %2738 = vmatmul.mubr.f32.gmra.mxu0 %v2737
        %v2739 = vpop.f32.mrf.mxu0
        %v2740 = vadd.f32 %v2658, %v2739
        %v2741 = vpop.f32.mrf.mxu0
        %2742 = vmatprep.mubr.f32.mxu0 0.0
        %v2743 = vand.u32 %v2336, 4294901760
        %2744 = vmatmul.mubr.f32.gmra.mxu0 %v2743
        %v2745 = vpop.f32.mrf.mxu0
        %v2746 = vadd.f32 %v2666, %v2745
        %v2747 = vpop.f32.mrf.mxu0
        %2748 = vdwg.mxu0
        %2749 = vmatprep.subr.mxu0 0.0
        %2750 = vmatpush1.msra.mxu0 0.0
        %2751 = vmatprep.subr.mxu0 0.0
        %2752 = vmatpush1.msra.mxu0 0.0
        %2753 = vmatprep.subr.mxu0 0.0
        %2754 = vmatpush1.msra.mxu0 0.0
        %2755 = vmatprep.subr.mxu0 0.0
        %2756 = vmatpush1.msra.mxu0 0.0
        %2757 = vmatprep.subr.mxu0 0.0
        %2758 = vmatpush1.msra.mxu0 0.0
        %2759 = vmatprep.subr.mxu0 0.0
        %2760 = vmatpush1.msra.mxu0 0.0
        %2761 = vmatprep.subr.mxu0 0.0
        %2762 = vmatpush1.msra.mxu0 0.0
        %2763 = vmatprep.subr.mxu0 0.0
        %2764 = vmatpush1.msra.mxu0 0.0
        %2765 = vmatprep.subr.mxu0 0.0
        %2766 = vmatpush1.msra.mxu0 0.0
        %2767 = vmatprep.subr.mxu0 0.0
        %2768 = vmatpush1.msra.mxu0 0.0
        %2769 = vmatprep.subr.mxu0 0.0
        %2770 = vmatpush1.msra.mxu0 0.0
        %2771 = vmatprep.subr.mxu0 0.0
        %2772 = vmatpush1.msra.mxu0 0.0
        %2773 = vmatprep.subr.mxu0 0.0
        %2774 = vmatpush1.msra.mxu0 0.0
        %2775 = vmatprep.subr.mxu0 0.0
        %2776 = vmatpush1.msra.mxu0 0.0
        %2777 = vmatprep.subr.mxu0 0.0
        %2778 = vmatpush1.msra.mxu0 0.0
        %2779 = vmatprep.subr.mxu0 0.0
        %v2780 = vand.u32 %v2330, 4294901760
        %2781 = vmatpush1.msra.mxu0 %v2780
        %2782 = vmatprep.subr.mxu0 0.0
        %2783 = vmatpush2.msra.mxu0 0.0
        %2784 = vmatprep.subr.mxu0 0.0
        %2785 = vmatpush2.msra.mxu0 0.0
        %2786 = vmatprep.subr.mxu0 0.0
        %2787 = vmatpush2.msra.mxu0 0.0
        %2788 = vmatprep.subr.mxu0 0.0
        %2789 = vmatpush2.msra.mxu0 0.0
        %2790 = vmatprep.subr.mxu0 0.0
        %2791 = vmatpush2.msra.mxu0 0.0
        %2792 = vmatprep.subr.mxu0 0.0
        %2793 = vmatpush2.msra.mxu0 0.0
        %2794 = vmatprep.subr.mxu0 0.0
        %2795 = vmatpush2.msra.mxu0 0.0
        %2796 = vmatprep.subr.mxu0 0.0
        %2797 = vmatpush2.msra.mxu0 0.0
        %2798 = vmatprep.subr.mxu0 0.0
        %2799 = vmatpush2.msra.mxu0 0.0
        %2800 = vmatprep.subr.mxu0 0.0
        %2801 = vmatpush2.msra.mxu0 0.0
        %2802 = vmatprep.subr.mxu0 0.0
        %2803 = vmatpush2.msra.mxu0 0.0
        %2804 = vmatprep.subr.mxu0 0.0
        %2805 = vmatpush2.msra.mxu0 0.0
        %2806 = vmatprep.subr.mxu0 0.0
        %2807 = vmatpush2.msra.mxu0 0.0
        %2808 = vmatprep.subr.mxu0 0.0
        %2809 = vmatpush2.msra.mxu0 0.0
        %2810 = vmatprep.subr.mxu0 0.0
        %2811 = vmatpush2.msra.mxu0 0.0
        %2812 = vmatprep.subr.mxu0 0.0
        %2813 = vmatpush2.msra.mxu0 0.0
        %2814 = vmatprep.mubr.f32.mxu0 0.0
        %v2815 = vand.u32 %v2333, 4294901760
        %2816 = vmatmul.mubr.f32.gmra.mxu0 %v2815
        %v2817 = vpop.f32.mrf.mxu0
        %v2818 = vadd.f32 %v2740, %v2817
        %v2819 = vpop.f32.mrf.mxu0
        %2820 = vmatprep.mubr.f32.mxu0 0.0
        %v2821 = vand.u32 %v2336, 4294901760
        %2822 = vmatmul.mubr.f32.gmra.mxu0 %v2821
        %v2823 = vpop.f32.mrf.mxu0
        %v2824 = vadd.f32 %v2746, %v2823
        %v2825 = vpop.f32.mrf.mxu0
        %2826 = vdwg.mxu0
        %2829 = vrot.lane.b32.xlu0 %v2818, 16
        %v2830 = vpop.permute.xlu0 %2829
        %2831 = vrot.lane.b32.xlu0 %v2824, 16
        %v2832 = vpop.permute.xlu0 %2831
        %v2835 = vadd.f32 %v2295, %v2830
        %v2836 = vadd.f32 %v2301, %v2832
        %v2837 = vlaneseq
        %v2838 = vshrl.u32 %v2837, 7
        %v2839 = vsub.s32 0, %v2838
        %v2840 = vrot.slane %v2331, %v2839
        %2842 = vrot.lane.b32.xlu0 %v2840, 16
        %v2843 = vpop.permute.xlu0 %2842
        %v2845 = vadd.f32 %v2835, %v2843
        %v2846 = vadd.f32 %v2836, %v2843
        %v2847 = vmax.f32 %v2845, 0.0
        %v2848 = vmax.f32 %v2846, 0.0
        %v2849 = vld [vmem:[#allocation2 + $0x90] sm:$0xff]
        %v2850 = vld [vmem:[#allocation2 + $0x98] sm:$0xff]
        %v2851 = vld [vmem:[#allocation2 + $0xa0] sm:$0xff]
        %v2852 = vld [vmem:[#allocation2 + $0xa8] sm:$0xff]
        %v2853 = vld [vmem:[#allocation2 + $0xb0] sm:$0xff]
        %v2854 = vld [vmem:[#allocation2 + $0xb8] sm:$0xff]
        %v2855 = vld [vmem:[#allocation2 + $0xc0] sm:$0xff]
        %v2856 = vld [vmem:[#allocation2 + $0xc8] sm:$0xff]
        %2859 = vrot.lane.b32.xlu0 %v2847, 112
        %v2860 = vpop.permute.xlu0 %2859
        %2861 = vrot.lane.b32.xlu0 %v2848, 112
        %v2862 = vpop.permute.xlu0 %2861
        %vm2865 = vcmask 130048
        %v2867 = vsel %vm2865, %v2849, 0
        %v2870 = vsel %vm2865, %v2850, 0
        %v2873 = vsel %vm2865, %v2851, 0
        %v2876 = vsel %vm2865, %v2852, 0
        %v2879 = vsel %vm2865, %v2853, 0
        %v2882 = vsel %vm2865, %v2854, 0
        %v2885 = vsel %vm2865, %v2855, 0
        %v2888 = vsel %vm2865, %v2856, 0
        %2890 = vmatprep.subr.mxu0 0.0
        %2891 = vmatpush1.msra.mxu0 0.0
        %2892 = vmatprep.subr.mxu0 0.0
        %2893 = vmatpush1.msra.mxu0 0.0
        %2894 = vmatprep.subr.mxu0 0.0
        %2895 = vmatpush1.msra.mxu0 0.0
        %2896 = vmatprep.subr.mxu0 0.0
        %2897 = vmatpush1.msra.mxu0 0.0
        %2898 = vmatprep.subr.mxu0 0.0
        %2899 = vmatpush1.msra.mxu0 0.0
        %2900 = vmatprep.subr.mxu0 0.0
        %2901 = vmatpush1.msra.mxu0 0.0
        %2902 = vmatprep.subr.mxu0 0.0
        %2903 = vmatpush1.msra.mxu0 0.0
        %2904 = vmatprep.subr.mxu0 0.0
        %2905 = vmatpush1.msra.mxu0 0.0
        %2906 = vmatprep.subr.mxu0 0.0
        %2907 = vmatpush1.msra.mxu0 0.0
        %2908 = vmatprep.subr.mxu0 0.0
        %2909 = vmatpush1.msra.mxu0 0.0
        %2910 = vmatprep.subr.mxu0 0.0
        %2911 = vmatpush1.msra.mxu0 0.0
        %2912 = vmatprep.subr.mxu0 0.0
        %2913 = vmatpush1.msra.mxu0 0.0
        %2914 = vmatprep.subr.mxu0 0.0
        %2915 = vmatpush1.msra.mxu0 0.0
        %2916 = vmatprep.subr.mxu0 0.0
        %2917 = vmatpush1.msra.mxu0 0.0
        %2918 = vmatprep.subr.mxu0 0.0
        %v2919 = vand.u32 %v2862, 4294901760
        %2920 = vmatpush1.msra.mxu0 %v2919
        %2921 = vmatprep.subr.mxu0 0.0
        %v2922 = vand.u32 %v2860, 4294901760
        %2923 = vmatpush1.msra.mxu0 %v2922
        %2924 = vmatprep.subr.mxu0 0.0
        %2925 = vmatpush2.msra.mxu0 0.0
        %2926 = vmatprep.subr.mxu0 0.0
        %2927 = vmatpush2.msra.mxu0 0.0
        %2928 = vmatprep.subr.mxu0 0.0
        %2929 = vmatpush2.msra.mxu0 0.0
        %2930 = vmatprep.subr.mxu0 0.0
        %2931 = vmatpush2.msra.mxu0 0.0
        %2932 = vmatprep.subr.mxu0 0.0
        %2933 = vmatpush2.msra.mxu0 0.0
        %2934 = vmatprep.subr.mxu0 0.0
        %2935 = vmatpush2.msra.mxu0 0.0
        %2936 = vmatprep.subr.mxu0 0.0
        %2937 = vmatpush2.msra.mxu0 0.0
        %2938 = vmatprep.subr.mxu0 0.0
        %2939 = vmatpush2.msra.mxu0 0.0
        %2940 = vmatprep.subr.mxu0 0.0
        %2941 = vmatpush2.msra.mxu0 0.0
        %2942 = vmatprep.subr.mxu0 0.0
        %2943 = vmatpush2.msra.mxu0 0.0
        %2944 = vmatprep.subr.mxu0 0.0
        %2945 = vmatpush2.msra.mxu0 0.0
        %2946 = vmatprep.subr.mxu0 0.0
        %2947 = vmatpush2.msra.mxu0 0.0
        %2948 = vmatprep.subr.mxu0 0.0
        %2949 = vmatpush2.msra.mxu0 0.0
        %2950 = vmatprep.subr.mxu0 0.0
        %2951 = vmatpush2.msra.mxu0 0.0
        %2952 = vmatprep.subr.mxu0 0.0
        %2953 = vmatpush2.msra.mxu0 0.0
        %2954 = vmatprep.subr.mxu0 0.0
        %2955 = vmatpush2.msra.mxu0 0.0
        %2956 = vmatprep.mubr.f32.mxu0 0.0
        %v2957 = vand.u32 %v2867, 4294901760
        %v2958 = vsub.f32 %v2867, %v2957
        %v2959 = vand.u32 %v2958, 4294901760
        %v2960 = vsub.f32 %v2958, %v2959
        %v2961 = vand.u32 %v2960, 4294901760
        %2962 = vmatmul.mubr.f32.gmra.mxu0 %v2961
        %v2963 = vpop.f32.mrf.mxu0
        %v2964 = vadd.f32 0.0, %v2963
        %v2965 = vpop.f32.mrf.mxu0
        %2966 = vmatprep.mubr.f32.mxu0 0.0
        %v2967 = vand.u32 %v2870, 4294901760
        %v2968 = vsub.f32 %v2870, %v2967
        %v2969 = vand.u32 %v2968, 4294901760
        %v2970 = vsub.f32 %v2968, %v2969
        %v2971 = vand.u32 %v2970, 4294901760
        %2972 = vmatmul.mubr.f32.gmra.mxu0 %v2971
        %v2973 = vpop.f32.mrf.mxu0
        %v2974 = vadd.f32 0.0, %v2973
        %v2975 = vpop.f32.mrf.mxu0
        %2976 = vmatprep.mubr.f32.mxu0 0.0
        %v2977 = vand.u32 %v2873, 4294901760
        %v2978 = vsub.f32 %v2873, %v2977
        %v2979 = vand.u32 %v2978, 4294901760
        %v2980 = vsub.f32 %v2978, %v2979
        %v2981 = vand.u32 %v2980, 4294901760
        %2982 = vmatmul.mubr.f32.gmra.mxu0 %v2981
        %v2983 = vpop.f32.mrf.mxu0
        %v2984 = vadd.f32 0.0, %v2983
        %v2985 = vpop.f32.mrf.mxu0
        %2986 = vmatprep.mubr.f32.mxu0 0.0
        %v2987 = vand.u32 %v2876, 4294901760
        %v2988 = vsub.f32 %v2876, %v2987
        %v2989 = vand.u32 %v2988, 4294901760
        %v2990 = vsub.f32 %v2988, %v2989
        %v2991 = vand.u32 %v2990, 4294901760
        %2992 = vmatmul.mubr.f32.gmra.mxu0 %v2991
        %v2993 = vpop.f32.mrf.mxu0
        %v2994 = vadd.f32 0.0, %v2993
        %v2995 = vpop.f32.mrf.mxu0
        %2996 = vmatprep.mubr.f32.mxu0 0.0
        %v2997 = vand.u32 %v2879, 4294901760
        %v2998 = vsub.f32 %v2879, %v2997
        %v2999 = vand.u32 %v2998, 4294901760
        %v3000 = vsub.f32 %v2998, %v2999
        %v3001 = vand.u32 %v3000, 4294901760
        %3002 = vmatmul.mubr.f32.gmra.mxu0 %v3001
        %v3003 = vpop.f32.mrf.mxu0
        %v3004 = vadd.f32 0.0, %v3003
        %v3005 = vpop.f32.mrf.mxu0
        %3006 = vmatprep.mubr.f32.mxu0 0.0
        %v3007 = vand.u32 %v2882, 4294901760
        %v3008 = vsub.f32 %v2882, %v3007
        %v3009 = vand.u32 %v3008, 4294901760
        %v3010 = vsub.f32 %v3008, %v3009
        %v3011 = vand.u32 %v3010, 4294901760
        %3012 = vmatmul.mubr.f32.gmra.mxu0 %v3011
        %v3013 = vpop.f32.mrf.mxu0
        %v3014 = vadd.f32 0.0, %v3013
        %v3015 = vpop.f32.mrf.mxu0
        %3016 = vmatprep.mubr.f32.mxu0 0.0
        %v3017 = vand.u32 %v2885, 4294901760
        %v3018 = vsub.f32 %v2885, %v3017
        %v3019 = vand.u32 %v3018, 4294901760
        %v3020 = vsub.f32 %v3018, %v3019
        %v3021 = vand.u32 %v3020, 4294901760
        %3022 = vmatmul.mubr.f32.gmra.mxu0 %v3021
        %v3023 = vpop.f32.mrf.mxu0
        %v3024 = vadd.f32 0.0, %v3023
        %v3025 = vpop.f32.mrf.mxu0
        %3026 = vmatprep.mubr.f32.mxu0 0.0
        %v3027 = vand.u32 %v2888, 4294901760
        %v3028 = vsub.f32 %v2888, %v3027
        %v3029 = vand.u32 %v3028, 4294901760
        %v3030 = vsub.f32 %v3028, %v3029
        %v3031 = vand.u32 %v3030, 4294901760
        %3032 = vmatmul.mubr.f32.gmra.mxu0 %v3031
        %v3033 = vpop.f32.mrf.mxu0
        %v3034 = vadd.f32 0.0, %v3033
        %v3035 = vpop.f32.mrf.mxu0
        %3036 = vdwg.mxu0
        %3037 = vmatprep.subr.mxu0 0.0
        %3038 = vmatpush1.msra.mxu0 0.0
        %3039 = vmatprep.subr.mxu0 0.0
        %3040 = vmatpush1.msra.mxu0 0.0
        %3041 = vmatprep.subr.mxu0 0.0
        %3042 = vmatpush1.msra.mxu0 0.0
        %3043 = vmatprep.subr.mxu0 0.0
        %3044 = vmatpush1.msra.mxu0 0.0
        %3045 = vmatprep.subr.mxu0 0.0
        %3046 = vmatpush1.msra.mxu0 0.0
        %3047 = vmatprep.subr.mxu0 0.0
        %3048 = vmatpush1.msra.mxu0 0.0
        %3049 = vmatprep.subr.mxu0 0.0
        %3050 = vmatpush1.msra.mxu0 0.0
        %3051 = vmatprep.subr.mxu0 0.0
        %3052 = vmatpush1.msra.mxu0 0.0
        %3053 = vmatprep.subr.mxu0 0.0
        %3054 = vmatpush1.msra.mxu0 0.0
        %3055 = vmatprep.subr.mxu0 0.0
        %3056 = vmatpush1.msra.mxu0 0.0
        %3057 = vmatprep.subr.mxu0 0.0
        %3058 = vmatpush1.msra.mxu0 0.0
        %3059 = vmatprep.subr.mxu0 0.0
        %3060 = vmatpush1.msra.mxu0 0.0
        %3061 = vmatprep.subr.mxu0 0.0
        %3062 = vmatpush1.msra.mxu0 0.0
        %3063 = vmatprep.subr.mxu0 0.0
        %3064 = vmatpush1.msra.mxu0 0.0
        %3065 = vmatprep.subr.mxu0 0.0
        %v3066 = vand.u32 %v2862, 4294901760
        %v3067 = vsub.f32 %v2862, %v3066
        %v3068 = vand.u32 %v3067, 4294901760
        %v3069 = vsub.f32 %v3067, %v3068
        %v3070 = vand.u32 %v3069, 4294901760
        %3071 = vmatpush1.msra.mxu0 %v3070
        %3072 = vmatprep.subr.mxu0 0.0
        %v3073 = vand.u32 %v2860, 4294901760
        %v3074 = vsub.f32 %v2860, %v3073
        %v3075 = vand.u32 %v3074, 4294901760
        %v3076 = vsub.f32 %v3074, %v3075
        %v3077 = vand.u32 %v3076, 4294901760
        %3078 = vmatpush1.msra.mxu0 %v3077
        %3079 = vmatprep.subr.mxu0 0.0
        %3080 = vmatpush2.msra.mxu0 0.0
        %3081 = vmatprep.subr.mxu0 0.0
        %3082 = vmatpush2.msra.mxu0 0.0
        %3083 = vmatprep.subr.mxu0 0.0
        %3084 = vmatpush2.msra.mxu0 0.0
        %3085 = vmatprep.subr.mxu0 0.0
        %3086 = vmatpush2.msra.mxu0 0.0
        %3087 = vmatprep.subr.mxu0 0.0
        %3088 = vmatpush2.msra.mxu0 0.0
        %3089 = vmatprep.subr.mxu0 0.0
        %3090 = vmatpush2.msra.mxu0 0.0
        %3091 = vmatprep.subr.mxu0 0.0
        %3092 = vmatpush2.msra.mxu0 0.0
        %3093 = vmatprep.subr.mxu0 0.0
        %3094 = vmatpush2.msra.mxu0 0.0
        %3095 = vmatprep.subr.mxu0 0.0
        %3096 = vmatpush2.msra.mxu0 0.0
        %3097 = vmatprep.subr.mxu0 0.0
        %3098 = vmatpush2.msra.mxu0 0.0
        %3099 = vmatprep.subr.mxu0 0.0
        %3100 = vmatpush2.msra.mxu0 0.0
        %3101 = vmatprep.subr.mxu0 0.0
        %3102 = vmatpush2.msra.mxu0 0.0
        %3103 = vmatprep.subr.mxu0 0.0
        %3104 = vmatpush2.msra.mxu0 0.0
        %3105 = vmatprep.subr.mxu0 0.0
        %3106 = vmatpush2.msra.mxu0 0.0
        %3107 = vmatprep.subr.mxu0 0.0
        %3108 = vmatpush2.msra.mxu0 0.0
        %3109 = vmatprep.subr.mxu0 0.0
        %3110 = vmatpush2.msra.mxu0 0.0
        %3111 = vmatprep.mubr.f32.mxu0 0.0
        %v3112 = vand.u32 %v2867, 4294901760
        %3113 = vmatmul.mubr.f32.gmra.mxu0 %v3112
        %v3114 = vpop.f32.mrf.mxu0
        %v3115 = vadd.f32 %v2964, %v3114
        %v3116 = vpop.f32.mrf.mxu0
        %3117 = vmatprep.mubr.f32.mxu0 0.0
        %v3118 = vand.u32 %v2870, 4294901760
        %3119 = vmatmul.mubr.f32.gmra.mxu0 %v3118
        %v3120 = vpop.f32.mrf.mxu0
        %v3121 = vadd.f32 %v2974, %v3120
        %v3122 = vpop.f32.mrf.mxu0
        %3123 = vmatprep.mubr.f32.mxu0 0.0
        %v3124 = vand.u32 %v2873, 4294901760
        %3125 = vmatmul.mubr.f32.gmra.mxu0 %v3124
        %v3126 = vpop.f32.mrf.mxu0
        %v3127 = vadd.f32 %v2984, %v3126
        %v3128 = vpop.f32.mrf.mxu0
        %3129 = vmatprep.mubr.f32.mxu0 0.0
        %v3130 = vand.u32 %v2876, 4294901760
        %3131 = vmatmul.mubr.f32.gmra.mxu0 %v3130
        %v3132 = vpop.f32.mrf.mxu0
        %v3133 = vadd.f32 %v2994, %v3132
        %v3134 = vpop.f32.mrf.mxu0
        %3135 = vmatprep.mubr.f32.mxu0 0.0
        %v3136 = vand.u32 %v2879, 4294901760
        %3137 = vmatmul.mubr.f32.gmra.mxu0 %v3136
        %v3138 = vpop.f32.mrf.mxu0
        %v3139 = vadd.f32 %v3004, %v3138
        %v3140 = vpop.f32.mrf.mxu0
        %3141 = vmatprep.mubr.f32.mxu0 0.0
        %v3142 = vand.u32 %v2882, 4294901760
        %3143 = vmatmul.mubr.f32.gmra.mxu0 %v3142
        %v3144 = vpop.f32.mrf.mxu0
        %v3145 = vadd.f32 %v3014, %v3144
        %v3146 = vpop.f32.mrf.mxu0
        %3147 = vmatprep.mubr.f32.mxu0 0.0
        %v3148 = vand.u32 %v2885, 4294901760
        %3149 = vmatmul.mubr.f32.gmra.mxu0 %v3148
        %v3150 = vpop.f32.mrf.mxu0
        %v3151 = vadd.f32 %v3024, %v3150
        %v3152 = vpop.f32.mrf.mxu0
        %3153 = vmatprep.mubr.f32.mxu0 0.0
        %v3154 = vand.u32 %v2888, 4294901760
        %3155 = vmatmul.mubr.f32.gmra.mxu0 %v3154
        %v3156 = vpop.f32.mrf.mxu0
        %v3157 = vadd.f32 %v3034, %v3156
        %v3158 = vpop.f32.mrf.mxu0
        %3159 = vdwg.mxu0
        %3160 = vmatprep.subr.mxu0 0.0
        %3161 = vmatpush1.msra.mxu0 0.0
        %3162 = vmatprep.subr.mxu0 0.0
        %3163 = vmatpush1.msra.mxu0 0.0
        %3164 = vmatprep.subr.mxu0 0.0
        %3165 = vmatpush1.msra.mxu0 0.0
        %3166 = vmatprep.subr.mxu0 0.0
        %3167 = vmatpush1.msra.mxu0 0.0
        %3168 = vmatprep.subr.mxu0 0.0
        %3169 = vmatpush1.msra.mxu0 0.0
        %3170 = vmatprep.subr.mxu0 0.0
        %3171 = vmatpush1.msra.mxu0 0.0
        %3172 = vmatprep.subr.mxu0 0.0
        %3173 = vmatpush1.msra.mxu0 0.0
        %3174 = vmatprep.subr.mxu0 0.0
        %3175 = vmatpush1.msra.mxu0 0.0
        %3176 = vmatprep.subr.mxu0 0.0
        %3177 = vmatpush1.msra.mxu0 0.0
        %3178 = vmatprep.subr.mxu0 0.0
        %3179 = vmatpush1.msra.mxu0 0.0
        %3180 = vmatprep.subr.mxu0 0.0
        %3181 = vmatpush1.msra.mxu0 0.0
        %3182 = vmatprep.subr.mxu0 0.0
        %3183 = vmatpush1.msra.mxu0 0.0
        %3184 = vmatprep.subr.mxu0 0.0
        %3185 = vmatpush1.msra.mxu0 0.0
        %3186 = vmatprep.subr.mxu0 0.0
        %3187 = vmatpush1.msra.mxu0 0.0
        %3188 = vmatprep.subr.mxu0 0.0
        %v3189 = vand.u32 %v2862, 4294901760
        %v3190 = vsub.f32 %v2862, %v3189
        %3191 = vmatpush1.msra.mxu0 %v3190
        %3192 = vmatprep.subr.mxu0 0.0
        %v3193 = vand.u32 %v2860, 4294901760
        %v3194 = vsub.f32 %v2860, %v3193
        %3195 = vmatpush1.msra.mxu0 %v3194
        %3196 = vmatprep.subr.mxu0 0.0
        %3197 = vmatpush2.msra.mxu0 0.0
        %3198 = vmatprep.subr.mxu0 0.0
        %3199 = vmatpush2.msra.mxu0 0.0
        %3200 = vmatprep.subr.mxu0 0.0
        %3201 = vmatpush2.msra.mxu0 0.0
        %3202 = vmatprep.subr.mxu0 0.0
        %3203 = vmatpush2.msra.mxu0 0.0
        %3204 = vmatprep.subr.mxu0 0.0
        %3205 = vmatpush2.msra.mxu0 0.0
        %3206 = vmatprep.subr.mxu0 0.0
        %3207 = vmatpush2.msra.mxu0 0.0
        %3208 = vmatprep.subr.mxu0 0.0
        %3209 = vmatpush2.msra.mxu0 0.0
        %3210 = vmatprep.subr.mxu0 0.0
        %3211 = vmatpush2.msra.mxu0 0.0
        %3212 = vmatprep.subr.mxu0 0.0
        %3213 = vmatpush2.msra.mxu0 0.0
        %3214 = vmatprep.subr.mxu0 0.0
        %3215 = vmatpush2.msra.mxu0 0.0
        %3216 = vmatprep.subr.mxu0 0.0
        %3217 = vmatpush2.msra.mxu0 0.0
        %3218 = vmatprep.subr.mxu0 0.0
        %3219 = vmatpush2.msra.mxu0 0.0
        %3220 = vmatprep.subr.mxu0 0.0
        %3221 = vmatpush2.msra.mxu0 0.0
        %3222 = vmatprep.subr.mxu0 0.0
        %3223 = vmatpush2.msra.mxu0 0.0
        %3224 = vmatprep.subr.mxu0 0.0
        %3225 = vmatpush2.msra.mxu0 0.0
        %3226 = vmatprep.subr.mxu0 0.0
        %3227 = vmatpush2.msra.mxu0 0.0
        %3228 = vmatprep.mubr.f32.mxu0 0.0
        %v3229 = vand.u32 %v2867, 4294901760
        %v3230 = vsub.f32 %v2867, %v3229
        %3231 = vmatmul.mubr.f32.gmra.mxu0 %v3230
        %v3232 = vpop.f32.mrf.mxu0
        %v3233 = vadd.f32 %v3115, %v3232
        %v3234 = vpop.f32.mrf.mxu0
        %3235 = vmatprep.mubr.f32.mxu0 0.0
        %v3236 = vand.u32 %v2870, 4294901760
        %v3237 = vsub.f32 %v2870, %v3236
        %3238 = vmatmul.mubr.f32.gmra.mxu0 %v3237
        %v3239 = vpop.f32.mrf.mxu0
        %v3240 = vadd.f32 %v3121, %v3239
        %v3241 = vpop.f32.mrf.mxu0
        %3242 = vmatprep.mubr.f32.mxu0 0.0
        %v3243 = vand.u32 %v2873, 4294901760
        %v3244 = vsub.f32 %v2873, %v3243
        %3245 = vmatmul.mubr.f32.gmra.mxu0 %v3244
        %v3246 = vpop.f32.mrf.mxu0
        %v3247 = vadd.f32 %v3127, %v3246
        %v3248 = vpop.f32.mrf.mxu0
        %3249 = vmatprep.mubr.f32.mxu0 0.0
        %v3250 = vand.u32 %v2876, 4294901760
        %v3251 = vsub.f32 %v2876, %v3250
        %3252 = vmatmul.mubr.f32.gmra.mxu0 %v3251
        %v3253 = vpop.f32.mrf.mxu0
        %v3254 = vadd.f32 %v3133, %v3253
        %v3255 = vpop.f32.mrf.mxu0
        %3256 = vmatprep.mubr.f32.mxu0 0.0
        %v3257 = vand.u32 %v2879, 4294901760
        %v3258 = vsub.f32 %v2879, %v3257
        %3259 = vmatmul.mubr.f32.gmra.mxu0 %v3258
        %v3260 = vpop.f32.mrf.mxu0
        %v3261 = vadd.f32 %v3139, %v3260
        %v3262 = vpop.f32.mrf.mxu0
        %3263 = vmatprep.mubr.f32.mxu0 0.0
        %v3264 = vand.u32 %v2882, 4294901760
        %v3265 = vsub.f32 %v2882, %v3264
        %3266 = vmatmul.mubr.f32.gmra.mxu0 %v3265
        %v3267 = vpop.f32.mrf.mxu0
        %v3268 = vadd.f32 %v3145, %v3267
        %v3269 = vpop.f32.mrf.mxu0
        %3270 = vmatprep.mubr.f32.mxu0 0.0
        %v3271 = vand.u32 %v2885, 4294901760
        %v3272 = vsub.f32 %v2885, %v3271
        %3273 = vmatmul.mubr.f32.gmra.mxu0 %v3272
        %v3274 = vpop.f32.mrf.mxu0
        %v3275 = vadd.f32 %v3151, %v3274
        %v3276 = vpop.f32.mrf.mxu0
        %3277 = vmatprep.mubr.f32.mxu0 0.0
        %v3278 = vand.u32 %v2888, 4294901760
        %v3279 = vsub.f32 %v2888, %v3278
        %3280 = vmatmul.mubr.f32.gmra.mxu0 %v3279
        %v3281 = vpop.f32.mrf.mxu0
        %v3282 = vadd.f32 %v3157, %v3281
        %v3283 = vpop.f32.mrf.mxu0
        %3284 = vdwg.mxu0
        %3285 = vmatprep.subr.mxu0 0.0
        %3286 = vmatpush1.msra.mxu0 0.0
        %3287 = vmatprep.subr.mxu0 0.0
        %3288 = vmatpush1.msra.mxu0 0.0
        %3289 = vmatprep.subr.mxu0 0.0
        %3290 = vmatpush1.msra.mxu0 0.0
        %3291 = vmatprep.subr.mxu0 0.0
        %3292 = vmatpush1.msra.mxu0 0.0
        %3293 = vmatprep.subr.mxu0 0.0
        %3294 = vmatpush1.msra.mxu0 0.0
        %3295 = vmatprep.subr.mxu0 0.0
        %3296 = vmatpush1.msra.mxu0 0.0
        %3297 = vmatprep.subr.mxu0 0.0
        %3298 = vmatpush1.msra.mxu0 0.0
        %3299 = vmatprep.subr.mxu0 0.0
        %3300 = vmatpush1.msra.mxu0 0.0
        %3301 = vmatprep.subr.mxu0 0.0
        %3302 = vmatpush1.msra.mxu0 0.0
        %3303 = vmatprep.subr.mxu0 0.0
        %3304 = vmatpush1.msra.mxu0 0.0
        %3305 = vmatprep.subr.mxu0 0.0
        %3306 = vmatpush1.msra.mxu0 0.0
        %3307 = vmatprep.subr.mxu0 0.0
        %3308 = vmatpush1.msra.mxu0 0.0
        %3309 = vmatprep.subr.mxu0 0.0
        %3310 = vmatpush1.msra.mxu0 0.0
        %3311 = vmatprep.subr.mxu0 0.0
        %3312 = vmatpush1.msra.mxu0 0.0
        %3313 = vmatprep.subr.mxu0 0.0
        %v3314 = vand.u32 %v2862, 4294901760
        %3315 = vmatpush1.msra.mxu0 %v3314
        %3316 = vmatprep.subr.mxu0 0.0
        %v3317 = vand.u32 %v2860, 4294901760
        %3318 = vmatpush1.msra.mxu0 %v3317
        %3319 = vmatprep.subr.mxu0 0.0
        %3320 = vmatpush2.msra.mxu0 0.0
        %3321 = vmatprep.subr.mxu0 0.0
        %3322 = vmatpush2.msra.mxu0 0.0
        %3323 = vmatprep.subr.mxu0 0.0
        %3324 = vmatpush2.msra.mxu0 0.0
        %3325 = vmatprep.subr.mxu0 0.0
        %3326 = vmatpush2.msra.mxu0 0.0
        %3327 = vmatprep.subr.mxu0 0.0
        %3328 = vmatpush2.msra.mxu0 0.0
        %3329 = vmatprep.subr.mxu0 0.0
        %3330 = vmatpush2.msra.mxu0 0.0
        %3331 = vmatprep.subr.mxu0 0.0
        %3332 = vmatpush2.msra.mxu0 0.0
        %3333 = vmatprep.subr.mxu0 0.0
        %3334 = vmatpush2.msra.mxu0 0.0
        %3335 = vmatprep.subr.mxu0 0.0
        %3336 = vmatpush2.msra.mxu0 0.0
        %3337 = vmatprep.subr.mxu0 0.0
        %3338 = vmatpush2.msra.mxu0 0.0
        %3339 = vmatprep.subr.mxu0 0.0
        %3340 = vmatpush2.msra.mxu0 0.0
        %3341 = vmatprep.subr.mxu0 0.0
        %3342 = vmatpush2.msra.mxu0 0.0
        %3343 = vmatprep.subr.mxu0 0.0
        %3344 = vmatpush2.msra.mxu0 0.0
        %3345 = vmatprep.subr.mxu0 0.0
        %3346 = vmatpush2.msra.mxu0 0.0
        %3347 = vmatprep.subr.mxu0 0.0
        %3348 = vmatpush2.msra.mxu0 0.0
        %3349 = vmatprep.subr.mxu0 0.0
        %3350 = vmatpush2.msra.mxu0 0.0
        %3351 = vmatprep.mubr.f32.mxu0 0.0
        %v3352 = vand.u32 %v2867, 4294901760
        %v3353 = vsub.f32 %v2867, %v3352
        %v3354 = vand.u32 %v3353, 4294901760
        %3355 = vmatmul.mubr.f32.gmra.mxu0 %v3354
        %v3356 = vpop.f32.mrf.mxu0
        %v3357 = vadd.f32 %v3233, %v3356
        %v3358 = vpop.f32.mrf.mxu0
        %3359 = vmatprep.mubr.f32.mxu0 0.0
        %v3360 = vand.u32 %v2870, 4294901760
        %v3361 = vsub.f32 %v2870, %v3360
        %v3362 = vand.u32 %v3361, 4294901760
        %3363 = vmatmul.mubr.f32.gmra.mxu0 %v3362
        %v3364 = vpop.f32.mrf.mxu0
        %v3365 = vadd.f32 %v3240, %v3364
        %v3366 = vpop.f32.mrf.mxu0
        %3367 = vmatprep.mubr.f32.mxu0 0.0
        %v3368 = vand.u32 %v2873, 4294901760
        %v3369 = vsub.f32 %v2873, %v3368
        %v3370 = vand.u32 %v3369, 4294901760
        %3371 = vmatmul.mubr.f32.gmra.mxu0 %v3370
        %v3372 = vpop.f32.mrf.mxu0
        %v3373 = vadd.f32 %v3247, %v3372
        %v3374 = vpop.f32.mrf.mxu0
        %3375 = vmatprep.mubr.f32.mxu0 0.0
        %v3376 = vand.u32 %v2876, 4294901760
        %v3377 = vsub.f32 %v2876, %v3376
        %v3378 = vand.u32 %v3377, 4294901760
        %3379 = vmatmul.mubr.f32.gmra.mxu0 %v3378
        %v3380 = vpop.f32.mrf.mxu0
        %v3381 = vadd.f32 %v3254, %v3380
        %v3382 = vpop.f32.mrf.mxu0
        %3383 = vmatprep.mubr.f32.mxu0 0.0
        %v3384 = vand.u32 %v2879, 4294901760
        %v3385 = vsub.f32 %v2879, %v3384
        %v3386 = vand.u32 %v3385, 4294901760
        %3387 = vmatmul.mubr.f32.gmra.mxu0 %v3386
        %v3388 = vpop.f32.mrf.mxu0
        %v3389 = vadd.f32 %v3261, %v3388
        %v3390 = vpop.f32.mrf.mxu0
        %3391 = vmatprep.mubr.f32.mxu0 0.0
        %v3392 = vand.u32 %v2882, 4294901760
        %v3393 = vsub.f32 %v2882, %v3392
        %v3394 = vand.u32 %v3393, 4294901760
        %3395 = vmatmul.mubr.f32.gmra.mxu0 %v3394
        %v3396 = vpop.f32.mrf.mxu0
        %v3397 = vadd.f32 %v3268, %v3396
        %v3398 = vpop.f32.mrf.mxu0
        %3399 = vmatprep.mubr.f32.mxu0 0.0
        %v3400 = vand.u32 %v2885, 4294901760
        %v3401 = vsub.f32 %v2885, %v3400
        %v3402 = vand.u32 %v3401, 4294901760
        %3403 = vmatmul.mubr.f32.gmra.mxu0 %v3402
        %v3404 = vpop.f32.mrf.mxu0
        %v3405 = vadd.f32 %v3275, %v3404
        %v3406 = vpop.f32.mrf.mxu0
        %3407 = vmatprep.mubr.f32.mxu0 0.0
        %v3408 = vand.u32 %v2888, 4294901760
        %v3409 = vsub.f32 %v2888, %v3408
        %v3410 = vand.u32 %v3409, 4294901760
        %3411 = vmatmul.mubr.f32.gmra.mxu0 %v3410
        %v3412 = vpop.f32.mrf.mxu0
        %v3413 = vadd.f32 %v3282, %v3412
        %v3414 = vpop.f32.mrf.mxu0
        %3415 = vdwg.mxu0
        %3416 = vmatprep.subr.mxu0 0.0
        %3417 = vmatpush1.msra.mxu0 0.0
        %3418 = vmatprep.subr.mxu0 0.0
        %3419 = vmatpush1.msra.mxu0 0.0
        %3420 = vmatprep.subr.mxu0 0.0
        %3421 = vmatpush1.msra.mxu0 0.0
        %3422 = vmatprep.subr.mxu0 0.0
        %3423 = vmatpush1.msra.mxu0 0.0
        %3424 = vmatprep.subr.mxu0 0.0
        %3425 = vmatpush1.msra.mxu0 0.0
        %3426 = vmatprep.subr.mxu0 0.0
        %3427 = vmatpush1.msra.mxu0 0.0
        %3428 = vmatprep.subr.mxu0 0.0
        %3429 = vmatpush1.msra.mxu0 0.0
        %3430 = vmatprep.subr.mxu0 0.0
        %3431 = vmatpush1.msra.mxu0 0.0
        %3432 = vmatprep.subr.mxu0 0.0
        %3433 = vmatpush1.msra.mxu0 0.0
        %3434 = vmatprep.subr.mxu0 0.0
        %3435 = vmatpush1.msra.mxu0 0.0
        %3436 = vmatprep.subr.mxu0 0.0
        %3437 = vmatpush1.msra.mxu0 0.0
        %3438 = vmatprep.subr.mxu0 0.0
        %3439 = vmatpush1.msra.mxu0 0.0
        %3440 = vmatprep.subr.mxu0 0.0
        %3441 = vmatpush1.msra.mxu0 0.0
        %3442 = vmatprep.subr.mxu0 0.0
        %3443 = vmatpush1.msra.mxu0 0.0
        %3444 = vmatprep.subr.mxu0 0.0
        %v3445 = vand.u32 %v2862, 4294901760
        %v3446 = vsub.f32 %v2862, %v3445
        %v3447 = vand.u32 %v3446, 4294901760
        %3448 = vmatpush1.msra.mxu0 %v3447
        %3449 = vmatprep.subr.mxu0 0.0
        %v3450 = vand.u32 %v2860, 4294901760
        %v3451 = vsub.f32 %v2860, %v3450
        %v3452 = vand.u32 %v3451, 4294901760
        %3453 = vmatpush1.msra.mxu0 %v3452
        %3454 = vmatprep.subr.mxu0 0.0
        %3455 = vmatpush2.msra.mxu0 0.0
        %3456 = vmatprep.subr.mxu0 0.0
        %3457 = vmatpush2.msra.mxu0 0.0
        %3458 = vmatprep.subr.mxu0 0.0
        %3459 = vmatpush2.msra.mxu0 0.0
        %3460 = vmatprep.subr.mxu0 0.0
        %3461 = vmatpush2.msra.mxu0 0.0
        %3462 = vmatprep.subr.mxu0 0.0
        %3463 = vmatpush2.msra.mxu0 0.0
        %3464 = vmatprep.subr.mxu0 0.0
        %3465 = vmatpush2.msra.mxu0 0.0
        %3466 = vmatprep.subr.mxu0 0.0
        %3467 = vmatpush2.msra.mxu0 0.0
        %3468 = vmatprep.subr.mxu0 0.0
        %3469 = vmatpush2.msra.mxu0 0.0
        %3470 = vmatprep.subr.mxu0 0.0
        %3471 = vmatpush2.msra.mxu0 0.0
        %3472 = vmatprep.subr.mxu0 0.0
        %3473 = vmatpush2.msra.mxu0 0.0
        %3474 = vmatprep.subr.mxu0 0.0
        %3475 = vmatpush2.msra.mxu0 0.0
        %3476 = vmatprep.subr.mxu0 0.0
        %3477 = vmatpush2.msra.mxu0 0.0
        %3478 = vmatprep.subr.mxu0 0.0
        %3479 = vmatpush2.msra.mxu0 0.0
        %3480 = vmatprep.subr.mxu0 0.0
        %3481 = vmatpush2.msra.mxu0 0.0
        %3482 = vmatprep.subr.mxu0 0.0
        %3483 = vmatpush2.msra.mxu0 0.0
        %3484 = vmatprep.subr.mxu0 0.0
        %3485 = vmatpush2.msra.mxu0 0.0
        %3486 = vmatprep.mubr.f32.mxu0 0.0
        %v3487 = vand.u32 %v2867, 4294901760
        %3488 = vmatmul.mubr.f32.gmra.mxu0 %v3487
        %v3489 = vpop.f32.mrf.mxu0
        %v3490 = vadd.f32 %v3357, %v3489
        %v3491 = vpop.f32.mrf.mxu0
        %3492 = vmatprep.mubr.f32.mxu0 0.0
        %v3493 = vand.u32 %v2870, 4294901760
        %3494 = vmatmul.mubr.f32.gmra.mxu0 %v3493
        %v3495 = vpop.f32.mrf.mxu0
        %v3496 = vadd.f32 %v3365, %v3495
        %v3497 = vpop.f32.mrf.mxu0
        %3498 = vmatprep.mubr.f32.mxu0 0.0
        %v3499 = vand.u32 %v2873, 4294901760
        %3500 = vmatmul.mubr.f32.gmra.mxu0 %v3499
        %v3501 = vpop.f32.mrf.mxu0
        %v3502 = vadd.f32 %v3373, %v3501
        %v3503 = vpop.f32.mrf.mxu0
        %3504 = vmatprep.mubr.f32.mxu0 0.0
        %v3505 = vand.u32 %v2876, 4294901760
        %3506 = vmatmul.mubr.f32.gmra.mxu0 %v3505
        %v3507 = vpop.f32.mrf.mxu0
        %v3508 = vadd.f32 %v3381, %v3507
        %v3509 = vpop.f32.mrf.mxu0
        %3510 = vmatprep.mubr.f32.mxu0 0.0
        %v3511 = vand.u32 %v2879, 4294901760
        %3512 = vmatmul.mubr.f32.gmra.mxu0 %v3511
        %v3513 = vpop.f32.mrf.mxu0
        %v3514 = vadd.f32 %v3389, %v3513
        %v3515 = vpop.f32.mrf.mxu0
        %3516 = vmatprep.mubr.f32.mxu0 0.0
        %v3517 = vand.u32 %v2882, 4294901760
        %3518 = vmatmul.mubr.f32.gmra.mxu0 %v3517
        %v3519 = vpop.f32.mrf.mxu0
        %v3520 = vadd.f32 %v3397, %v3519
        %v3521 = vpop.f32.mrf.mxu0
        %3522 = vmatprep.mubr.f32.mxu0 0.0
        %v3523 = vand.u32 %v2885, 4294901760
        %3524 = vmatmul.mubr.f32.gmra.mxu0 %v3523
        %v3525 = vpop.f32.mrf.mxu0
        %v3526 = vadd.f32 %v3405, %v3525
        %v3527 = vpop.f32.mrf.mxu0
        %3528 = vmatprep.mubr.f32.mxu0 0.0
        %v3529 = vand.u32 %v2888, 4294901760
        %3530 = vmatmul.mubr.f32.gmra.mxu0 %v3529
        %v3531 = vpop.f32.mrf.mxu0
        %v3532 = vadd.f32 %v3413, %v3531
        %v3533 = vpop.f32.mrf.mxu0
        %3534 = vdwg.mxu0
        %3535 = vmatprep.subr.mxu0 0.0
        %3536 = vmatpush1.msra.mxu0 0.0
        %3537 = vmatprep.subr.mxu0 0.0
        %3538 = vmatpush1.msra.mxu0 0.0
        %3539 = vmatprep.subr.mxu0 0.0
        %3540 = vmatpush1.msra.mxu0 0.0
        %3541 = vmatprep.subr.mxu0 0.0
        %3542 = vmatpush1.msra.mxu0 0.0
        %3543 = vmatprep.subr.mxu0 0.0
        %3544 = vmatpush1.msra.mxu0 0.0
        %3545 = vmatprep.subr.mxu0 0.0
        %3546 = vmatpush1.msra.mxu0 0.0
        %3547 = vmatprep.subr.mxu0 0.0
        %3548 = vmatpush1.msra.mxu0 0.0
        %3549 = vmatprep.subr.mxu0 0.0
        %3550 = vmatpush1.msra.mxu0 0.0
        %3551 = vmatprep.subr.mxu0 0.0
        %3552 = vmatpush1.msra.mxu0 0.0
        %3553 = vmatprep.subr.mxu0 0.0
        %3554 = vmatpush1.msra.mxu0 0.0
        %3555 = vmatprep.subr.mxu0 0.0
        %3556 = vmatpush1.msra.mxu0 0.0
        %3557 = vmatprep.subr.mxu0 0.0
        %3558 = vmatpush1.msra.mxu0 0.0
        %3559 = vmatprep.subr.mxu0 0.0
        %3560 = vmatpush1.msra.mxu0 0.0
        %3561 = vmatprep.subr.mxu0 0.0
        %3562 = vmatpush1.msra.mxu0 0.0
        %3563 = vmatprep.subr.mxu0 0.0
        %v3564 = vand.u32 %v2862, 4294901760
        %3565 = vmatpush1.msra.mxu0 %v3564
        %3566 = vmatprep.subr.mxu0 0.0
        %v3567 = vand.u32 %v2860, 4294901760
        %3568 = vmatpush1.msra.mxu0 %v3567
        %3569 = vmatprep.subr.mxu0 0.0
        %3570 = vmatpush2.msra.mxu0 0.0
        %3571 = vmatprep.subr.mxu0 0.0
        %3572 = vmatpush2.msra.mxu0 0.0
        %3573 = vmatprep.subr.mxu0 0.0
        %3574 = vmatpush2.msra.mxu0 0.0
        %3575 = vmatprep.subr.mxu0 0.0
        %3576 = vmatpush2.msra.mxu0 0.0
        %3577 = vmatprep.subr.mxu0 0.0
        %3578 = vmatpush2.msra.mxu0 0.0
        %3579 = vmatprep.subr.mxu0 0.0
        %3580 = vmatpush2.msra.mxu0 0.0
        %3581 = vmatprep.subr.mxu0 0.0
        %3582 = vmatpush2.msra.mxu0 0.0
        %3583 = vmatprep.subr.mxu0 0.0
        %3584 = vmatpush2.msra.mxu0 0.0
        %3585 = vmatprep.subr.mxu0 0.0
        %3586 = vmatpush2.msra.mxu0 0.0
        %3587 = vmatprep.subr.mxu0 0.0
        %3588 = vmatpush2.msra.mxu0 0.0
        %3589 = vmatprep.subr.mxu0 0.0
        %3590 = vmatpush2.msra.mxu0 0.0
        %3591 = vmatprep.subr.mxu0 0.0
        %3592 = vmatpush2.msra.mxu0 0.0
        %3593 = vmatprep.subr.mxu0 0.0
        %3594 = vmatpush2.msra.mxu0 0.0
        %3595 = vmatprep.subr.mxu0 0.0
        %3596 = vmatpush2.msra.mxu0 0.0
        %3597 = vmatprep.subr.mxu0 0.0
        %3598 = vmatpush2.msra.mxu0 0.0
        %3599 = vmatprep.subr.mxu0 0.0
        %3600 = vmatpush2.msra.mxu0 0.0
        %3601 = vmatprep.mubr.f32.mxu0 0.0
        %v3602 = vand.u32 %v2867, 4294901760
        %3603 = vmatmul.mubr.f32.gmra.mxu0 %v3602
        %v3604 = vpop.f32.mrf.mxu0
        %v3605 = vadd.f32 %v3490, %v3604
        %v3606 = vpop.f32.mrf.mxu0
        %3607 = vmatprep.mubr.f32.mxu0 0.0
        %v3608 = vand.u32 %v2870, 4294901760
        %3609 = vmatmul.mubr.f32.gmra.mxu0 %v3608
        %v3610 = vpop.f32.mrf.mxu0
        %v3611 = vadd.f32 %v3496, %v3610
        %v3612 = vpop.f32.mrf.mxu0
        %3613 = vmatprep.mubr.f32.mxu0 0.0
        %v3614 = vand.u32 %v2873, 4294901760
        %3615 = vmatmul.mubr.f32.gmra.mxu0 %v3614
        %v3616 = vpop.f32.mrf.mxu0
        %v3617 = vadd.f32 %v3502, %v3616
        %v3618 = vpop.f32.mrf.mxu0
        %3619 = vmatprep.mubr.f32.mxu0 0.0
        %v3620 = vand.u32 %v2876, 4294901760
        %3621 = vmatmul.mubr.f32.gmra.mxu0 %v3620
        %v3622 = vpop.f32.mrf.mxu0
        %v3623 = vadd.f32 %v3508, %v3622
        %v3624 = vpop.f32.mrf.mxu0
        %3625 = vmatprep.mubr.f32.mxu0 0.0
        %v3626 = vand.u32 %v2879, 4294901760
        %3627 = vmatmul.mubr.f32.gmra.mxu0 %v3626
        %v3628 = vpop.f32.mrf.mxu0
        %v3629 = vadd.f32 %v3514, %v3628
        %v3630 = vpop.f32.mrf.mxu0
        %3631 = vmatprep.mubr.f32.mxu0 0.0
        %v3632 = vand.u32 %v2882, 4294901760
        %3633 = vmatmul.mubr.f32.gmra.mxu0 %v3632
        %v3634 = vpop.f32.mrf.mxu0
        %v3635 = vadd.f32 %v3520, %v3634
        %v3636 = vpop.f32.mrf.mxu0
        %3637 = vmatprep.mubr.f32.mxu0 0.0
        %v3638 = vand.u32 %v2885, 4294901760
        %3639 = vmatmul.mubr.f32.gmra.mxu0 %v3638
        %v3640 = vpop.f32.mrf.mxu0
        %v3641 = vadd.f32 %v3526, %v3640
        %v3642 = vpop.f32.mrf.mxu0
        %3643 = vmatprep.mubr.f32.mxu0 0.0
        %v3644 = vand.u32 %v2888, 4294901760
        %3645 = vmatmul.mubr.f32.gmra.mxu0 %v3644
        %v3646 = vpop.f32.mrf.mxu0
        %v3647 = vadd.f32 %v3532, %v3646
        %v3648 = vpop.f32.mrf.mxu0
        %3649 = vdwg.mxu0
        %v3650 = vld [vmem:[#allocation2 + $0xd0] sm:$0xff]
        %v3651 = vld [vmem:[#allocation2 + $0xd8] sm:$0xff]
        %v3652 = vld [vmem:[#allocation2 + $0xe0] sm:$0xff]
        %v3653 = vld [vmem:[#allocation2 + $0xe8] sm:$0xff]
        %v3654 = vld [vmem:[#allocation2 + $0xf0] sm:$0x1]
        %v3655 = vlaneseq
        %v3656 = vshrl.u32 %v3655, 7
        %v3657 = vsub.s32 0, %v3656
        %v3658 = vrot.slane %v3654, %v3657
        %v3660 = vsel %vm677, %v3605, 0
        %v3663 = vsel %vm677, %v3611, 0
        %v3666 = vsel %vm677, %v3617, 0
        %v3669 = vsel %vm677, %v3623, 0
        %v3672 = vsel %vm677, %v3629, 0
        %v3675 = vsel %vm677, %v3635, 0
        %v3678 = vsel %vm677, %v3641, 0
        %v3681 = vsel %vm677, %v3647, 0
        %3683 = vmatprep.subr.mxu0 0.0
        %3684 = vmatpush1.msra.mxu0 0.0
        %3685 = vmatprep.subr.mxu0 0.0
        %3686 = vmatpush1.msra.mxu0 0.0
        %3687 = vmatprep.subr.mxu0 0.0
        %3688 = vmatpush1.msra.mxu0 0.0
        %3689 = vmatprep.subr.mxu0 0.0
        %3690 = vmatpush1.msra.mxu0 0.0
        %3691 = vmatprep.subr.mxu0 0.0
        %3692 = vmatpush1.msra.mxu0 0.0
        %3693 = vmatprep.subr.mxu0 0.0
        %3694 = vmatpush1.msra.mxu0 0.0
        %3695 = vmatprep.subr.mxu0 0.0
        %3696 = vmatpush1.msra.mxu0 0.0
        %3697 = vmatprep.subr.mxu0 0.0
        %3698 = vmatpush1.msra.mxu0 0.0
        %3699 = vmatprep.subr.mxu0 0.0
        %3700 = vmatpush1.msra.mxu0 0.0
        %3701 = vmatprep.subr.mxu0 0.0
        %3702 = vmatpush1.msra.mxu0 0.0
        %3703 = vmatprep.subr.mxu0 0.0
        %3704 = vmatpush1.msra.mxu0 0.0
        %3705 = vmatprep.subr.mxu0 0.0
        %3706 = vmatpush1.msra.mxu0 0.0
        %3707 = vmatprep.subr.mxu0 0.0
        %v3708 = vand.u32 %v3653, 4294901760
        %3709 = vmatpush1.msra.mxu0 %v3708
        %3710 = vmatprep.subr.mxu0 0.0
        %v3711 = vand.u32 %v3652, 4294901760
        %3712 = vmatpush1.msra.mxu0 %v3711
        %3713 = vmatprep.subr.mxu0 0.0
        %v3714 = vand.u32 %v3651, 4294901760
        %3715 = vmatpush1.msra.mxu0 %v3714
        %3716 = vmatprep.subr.mxu0 0.0
        %v3717 = vand.u32 %v3650, 4294901760
        %3718 = vmatpush1.msra.mxu0 %v3717
        %3719 = vmatprep.subr.mxu0 0.0
        %3720 = vmatpush2.msra.mxu0 0.0
        %3721 = vmatprep.subr.mxu0 0.0
        %3722 = vmatpush2.msra.mxu0 0.0
        %3723 = vmatprep.subr.mxu0 0.0
        %3724 = vmatpush2.msra.mxu0 0.0
        %3725 = vmatprep.subr.mxu0 0.0
        %3726 = vmatpush2.msra.mxu0 0.0
        %3727 = vmatprep.subr.mxu0 0.0
        %3728 = vmatpush2.msra.mxu0 0.0
        %3729 = vmatprep.subr.mxu0 0.0
        %3730 = vmatpush2.msra.mxu0 0.0
        %3731 = vmatprep.subr.mxu0 0.0
        %3732 = vmatpush2.msra.mxu0 0.0
        %3733 = vmatprep.subr.mxu0 0.0
        %3734 = vmatpush2.msra.mxu0 0.0
        %3735 = vmatprep.subr.mxu0 0.0
        %3736 = vmatpush2.msra.mxu0 0.0
        %3737 = vmatprep.subr.mxu0 0.0
        %3738 = vmatpush2.msra.mxu0 0.0
        %3739 = vmatprep.subr.mxu0 0.0
        %3740 = vmatpush2.msra.mxu0 0.0
        %3741 = vmatprep.subr.mxu0 0.0
        %3742 = vmatpush2.msra.mxu0 0.0
        %3743 = vmatprep.subr.mxu0 0.0
        %3744 = vmatpush2.msra.mxu0 0.0
        %3745 = vmatprep.subr.mxu0 0.0
        %3746 = vmatpush2.msra.mxu0 0.0
        %3747 = vmatprep.subr.mxu0 0.0
        %3748 = vmatpush2.msra.mxu0 0.0
        %3749 = vmatprep.subr.mxu0 0.0
        %3750 = vmatpush2.msra.mxu0 0.0
        %3751 = vmatprep.mubr.f32.mxu0 0.0
        %v3752 = vand.u32 %v3660, 4294901760
        %v3753 = vsub.f32 %v3660, %v3752
        %v3754 = vand.u32 %v3753, 4294901760
        %v3755 = vsub.f32 %v3753, %v3754
        %v3756 = vand.u32 %v3755, 4294901760
        %3757 = vmatmul.mubr.f32.gmra.mxu0 %v3756
        %v3758 = vpop.f32.mrf.mxu0
        %v3759 = vadd.f32 %v3658, %v3758
        %v3760 = vpop.f32.mrf.mxu0
        %3761 = vmatprep.mubr.f32.mxu0 0.0
        %v3762 = vand.u32 %v3663, 4294901760
        %v3763 = vsub.f32 %v3663, %v3762
        %v3764 = vand.u32 %v3763, 4294901760
        %v3765 = vsub.f32 %v3763, %v3764
        %v3766 = vand.u32 %v3765, 4294901760
        %3767 = vmatmul.mubr.f32.gmra.mxu0 %v3766
        %v3768 = vpop.f32.mrf.mxu0
        %v3769 = vadd.f32 %v3658, %v3768
        %v3770 = vpop.f32.mrf.mxu0
        %3771 = vmatprep.mubr.f32.mxu0 0.0
        %v3772 = vand.u32 %v3666, 4294901760
        %v3773 = vsub.f32 %v3666, %v3772
        %v3774 = vand.u32 %v3773, 4294901760
        %v3775 = vsub.f32 %v3773, %v3774
        %v3776 = vand.u32 %v3775, 4294901760
        %3777 = vmatmul.mubr.f32.gmra.mxu0 %v3776
        %v3778 = vpop.f32.mrf.mxu0
        %v3779 = vadd.f32 %v3658, %v3778
        %v3780 = vpop.f32.mrf.mxu0
        %3781 = vmatprep.mubr.f32.mxu0 0.0
        %v3782 = vand.u32 %v3669, 4294901760
        %v3783 = vsub.f32 %v3669, %v3782
        %v3784 = vand.u32 %v3783, 4294901760
        %v3785 = vsub.f32 %v3783, %v3784
        %v3786 = vand.u32 %v3785, 4294901760
        %3787 = vmatmul.mubr.f32.gmra.mxu0 %v3786
        %v3788 = vpop.f32.mrf.mxu0
        %v3789 = vadd.f32 %v3658, %v3788
        %v3790 = vpop.f32.mrf.mxu0
        %3791 = vmatprep.mubr.f32.mxu0 0.0
        %v3792 = vand.u32 %v3672, 4294901760
        %v3793 = vsub.f32 %v3672, %v3792
        %v3794 = vand.u32 %v3793, 4294901760
        %v3795 = vsub.f32 %v3793, %v3794
        %v3796 = vand.u32 %v3795, 4294901760
        %3797 = vmatmul.mubr.f32.gmra.mxu0 %v3796
        %v3798 = vpop.f32.mrf.mxu0
        %v3799 = vadd.f32 %v3658, %v3798
        %v3800 = vpop.f32.mrf.mxu0
        %3801 = vmatprep.mubr.f32.mxu0 0.0
        %v3802 = vand.u32 %v3675, 4294901760
        %v3803 = vsub.f32 %v3675, %v3802
        %v3804 = vand.u32 %v3803, 4294901760
        %v3805 = vsub.f32 %v3803, %v3804
        %v3806 = vand.u32 %v3805, 4294901760
        %3807 = vmatmul.mubr.f32.gmra.mxu0 %v3806
        %v3808 = vpop.f32.mrf.mxu0
        %v3809 = vadd.f32 %v3658, %v3808
        %v3810 = vpop.f32.mrf.mxu0
        %3811 = vmatprep.mubr.f32.mxu0 0.0
        %v3812 = vand.u32 %v3678, 4294901760
        %v3813 = vsub.f32 %v3678, %v3812
        %v3814 = vand.u32 %v3813, 4294901760
        %v3815 = vsub.f32 %v3813, %v3814
        %v3816 = vand.u32 %v3815, 4294901760
        %3817 = vmatmul.mubr.f32.gmra.mxu0 %v3816
        %v3818 = vpop.f32.mrf.mxu0
        %v3819 = vadd.f32 %v3658, %v3818
        %v3820 = vpop.f32.mrf.mxu0
        %3821 = vmatprep.mubr.f32.mxu0 0.0
        %v3822 = vand.u32 %v3681, 4294901760
        %v3823 = vsub.f32 %v3681, %v3822
        %v3824 = vand.u32 %v3823, 4294901760
        %v3825 = vsub.f32 %v3823, %v3824
        %v3826 = vand.u32 %v3825, 4294901760
        %3827 = vmatmul.mubr.f32.gmra.mxu0 %v3826
        %v3828 = vpop.f32.mrf.mxu0
        %v3829 = vadd.f32 %v3658, %v3828
        %v3830 = vpop.f32.mrf.mxu0
        %3831 = vdwg.mxu0
        %3832 = vmatprep.subr.mxu0 0.0
        %3833 = vmatpush1.msra.mxu0 0.0
        %3834 = vmatprep.subr.mxu0 0.0
        %3835 = vmatpush1.msra.mxu0 0.0
        %3836 = vmatprep.subr.mxu0 0.0
        %3837 = vmatpush1.msra.mxu0 0.0
        %3838 = vmatprep.subr.mxu0 0.0
        %3839 = vmatpush1.msra.mxu0 0.0
        %3840 = vmatprep.subr.mxu0 0.0
        %3841 = vmatpush1.msra.mxu0 0.0
        %3842 = vmatprep.subr.mxu0 0.0
        %3843 = vmatpush1.msra.mxu0 0.0
        %3844 = vmatprep.subr.mxu0 0.0
        %3845 = vmatpush1.msra.mxu0 0.0
        %3846 = vmatprep.subr.mxu0 0.0
        %3847 = vmatpush1.msra.mxu0 0.0
        %3848 = vmatprep.subr.mxu0 0.0
        %3849 = vmatpush1.msra.mxu0 0.0
        %3850 = vmatprep.subr.mxu0 0.0
        %3851 = vmatpush1.msra.mxu0 0.0
        %3852 = vmatprep.subr.mxu0 0.0
        %3853 = vmatpush1.msra.mxu0 0.0
        %3854 = vmatprep.subr.mxu0 0.0
        %3855 = vmatpush1.msra.mxu0 0.0
        %3856 = vmatprep.subr.mxu0 0.0
        %v3857 = vand.u32 %v3653, 4294901760
        %v3858 = vsub.f32 %v3653, %v3857
        %v3859 = vand.u32 %v3858, 4294901760
        %v3860 = vsub.f32 %v3858, %v3859
        %v3861 = vand.u32 %v3860, 4294901760
        %3862 = vmatpush1.msra.mxu0 %v3861
        %3863 = vmatprep.subr.mxu0 0.0
        %v3864 = vand.u32 %v3652, 4294901760
        %v3865 = vsub.f32 %v3652, %v3864
        %v3866 = vand.u32 %v3865, 4294901760
        %v3867 = vsub.f32 %v3865, %v3866
        %v3868 = vand.u32 %v3867, 4294901760
        %3869 = vmatpush1.msra.mxu0 %v3868
        %3870 = vmatprep.subr.mxu0 0.0
        %v3871 = vand.u32 %v3651, 4294901760
        %v3872 = vsub.f32 %v3651, %v3871
        %v3873 = vand.u32 %v3872, 4294901760
        %v3874 = vsub.f32 %v3872, %v3873
        %v3875 = vand.u32 %v3874, 4294901760
        %3876 = vmatpush1.msra.mxu0 %v3875
        %3877 = vmatprep.subr.mxu0 0.0
        %v3878 = vand.u32 %v3650, 4294901760
        %v3879 = vsub.f32 %v3650, %v3878
        %v3880 = vand.u32 %v3879, 4294901760
        %v3881 = vsub.f32 %v3879, %v3880
        %v3882 = vand.u32 %v3881, 4294901760
        %3883 = vmatpush1.msra.mxu0 %v3882
        %3884 = vmatprep.subr.mxu0 0.0
        %3885 = vmatpush2.msra.mxu0 0.0
        %3886 = vmatprep.subr.mxu0 0.0
        %3887 = vmatpush2.msra.mxu0 0.0
        %3888 = vmatprep.subr.mxu0 0.0
        %3889 = vmatpush2.msra.mxu0 0.0
        %3890 = vmatprep.subr.mxu0 0.0
        %3891 = vmatpush2.msra.mxu0 0.0
        %3892 = vmatprep.subr.mxu0 0.0
        %3893 = vmatpush2.msra.mxu0 0.0
        %3894 = vmatprep.subr.mxu0 0.0
        %3895 = vmatpush2.msra.mxu0 0.0
        %3896 = vmatprep.subr.mxu0 0.0
        %3897 = vmatpush2.msra.mxu0 0.0
        %3898 = vmatprep.subr.mxu0 0.0
        %3899 = vmatpush2.msra.mxu0 0.0
        %3900 = vmatprep.subr.mxu0 0.0
        %3901 = vmatpush2.msra.mxu0 0.0
        %3902 = vmatprep.subr.mxu0 0.0
        %3903 = vmatpush2.msra.mxu0 0.0
        %3904 = vmatprep.subr.mxu0 0.0
        %3905 = vmatpush2.msra.mxu0 0.0
        %3906 = vmatprep.subr.mxu0 0.0
        %3907 = vmatpush2.msra.mxu0 0.0
        %3908 = vmatprep.subr.mxu0 0.0
        %3909 = vmatpush2.msra.mxu0 0.0
        %3910 = vmatprep.subr.mxu0 0.0
        %3911 = vmatpush2.msra.mxu0 0.0
        %3912 = vmatprep.subr.mxu0 0.0
        %3913 = vmatpush2.msra.mxu0 0.0
        %3914 = vmatprep.subr.mxu0 0.0
        %3915 = vmatpush2.msra.mxu0 0.0
        %3916 = vmatprep.mubr.f32.mxu0 0.0
        %v3917 = vand.u32 %v3660, 4294901760
        %3918 = vmatmul.mubr.f32.gmra.mxu0 %v3917
        %v3919 = vpop.f32.mrf.mxu0
        %v3920 = vadd.f32 %v3759, %v3919
        %v3921 = vpop.f32.mrf.mxu0
        %3922 = vmatprep.mubr.f32.mxu0 0.0
        %v3923 = vand.u32 %v3663, 4294901760
        %3924 = vmatmul.mubr.f32.gmra.mxu0 %v3923
        %v3925 = vpop.f32.mrf.mxu0
        %v3926 = vadd.f32 %v3769, %v3925
        %v3927 = vpop.f32.mrf.mxu0
        %3928 = vmatprep.mubr.f32.mxu0 0.0
        %v3929 = vand.u32 %v3666, 4294901760
        %3930 = vmatmul.mubr.f32.gmra.mxu0 %v3929
        %v3931 = vpop.f32.mrf.mxu0
        %v3932 = vadd.f32 %v3779, %v3931
        %v3933 = vpop.f32.mrf.mxu0
        %3934 = vmatprep.mubr.f32.mxu0 0.0
        %v3935 = vand.u32 %v3669, 4294901760
        %3936 = vmatmul.mubr.f32.gmra.mxu0 %v3935
        %v3937 = vpop.f32.mrf.mxu0
        %v3938 = vadd.f32 %v3789, %v3937
        %v3939 = vpop.f32.mrf.mxu0
        %3940 = vmatprep.mubr.f32.mxu0 0.0
        %v3941 = vand.u32 %v3672, 4294901760
        %3942 = vmatmul.mubr.f32.gmra.mxu0 %v3941
        %v3943 = vpop.f32.mrf.mxu0
        %v3944 = vadd.f32 %v3799, %v3943
        %v3945 = vpop.f32.mrf.mxu0
        %3946 = vmatprep.mubr.f32.mxu0 0.0
        %v3947 = vand.u32 %v3675, 4294901760
        %3948 = vmatmul.mubr.f32.gmra.mxu0 %v3947
        %v3949 = vpop.f32.mrf.mxu0
        %v3950 = vadd.f32 %v3809, %v3949
        %v3951 = vpop.f32.mrf.mxu0
        %3952 = vmatprep.mubr.f32.mxu0 0.0
        %v3953 = vand.u32 %v3678, 4294901760
        %3954 = vmatmul.mubr.f32.gmra.mxu0 %v3953
        %v3955 = vpop.f32.mrf.mxu0
        %v3956 = vadd.f32 %v3819, %v3955
        %v3957 = vpop.f32.mrf.mxu0
        %3958 = vmatprep.mubr.f32.mxu0 0.0
        %v3959 = vand.u32 %v3681, 4294901760
        %3960 = vmatmul.mubr.f32.gmra.mxu0 %v3959
        %v3961 = vpop.f32.mrf.mxu0
        %v3962 = vadd.f32 %v3829, %v3961
        %v3963 = vpop.f32.mrf.mxu0
        %3964 = vdwg.mxu0
        %3965 = vmatprep.subr.mxu0 0.0
        %3966 = vmatpush1.msra.mxu0 0.0
        %3967 = vmatprep.subr.mxu0 0.0
        %3968 = vmatpush1.msra.mxu0 0.0
        %3969 = vmatprep.subr.mxu0 0.0
        %3970 = vmatpush1.msra.mxu0 0.0
        %3971 = vmatprep.subr.mxu0 0.0
        %3972 = vmatpush1.msra.mxu0 0.0
        %3973 = vmatprep.subr.mxu0 0.0
        %3974 = vmatpush1.msra.mxu0 0.0
        %3975 = vmatprep.subr.mxu0 0.0
        %3976 = vmatpush1.msra.mxu0 0.0
        %3977 = vmatprep.subr.mxu0 0.0
        %3978 = vmatpush1.msra.mxu0 0.0
        %3979 = vmatprep.subr.mxu0 0.0
        %3980 = vmatpush1.msra.mxu0 0.0
        %3981 = vmatprep.subr.mxu0 0.0
        %3982 = vmatpush1.msra.mxu0 0.0
        %3983 = vmatprep.subr.mxu0 0.0
        %3984 = vmatpush1.msra.mxu0 0.0
        %3985 = vmatprep.subr.mxu0 0.0
        %3986 = vmatpush1.msra.mxu0 0.0
        %3987 = vmatprep.subr.mxu0 0.0
        %3988 = vmatpush1.msra.mxu0 0.0
        %3989 = vmatprep.subr.mxu0 0.0
        %v3990 = vand.u32 %v3653, 4294901760
        %v3991 = vsub.f32 %v3653, %v3990
        %3992 = vmatpush1.msra.mxu0 %v3991
        %3993 = vmatprep.subr.mxu0 0.0
        %v3994 = vand.u32 %v3652, 4294901760
        %v3995 = vsub.f32 %v3652, %v3994
        %3996 = vmatpush1.msra.mxu0 %v3995
        %3997 = vmatprep.subr.mxu0 0.0
        %v3998 = vand.u32 %v3651, 4294901760
        %v3999 = vsub.f32 %v3651, %v3998
        %4000 = vmatpush1.msra.mxu0 %v3999
        %4001 = vmatprep.subr.mxu0 0.0
        %v4002 = vand.u32 %v3650, 4294901760
        %v4003 = vsub.f32 %v3650, %v4002
        %4004 = vmatpush1.msra.mxu0 %v4003
        %4005 = vmatprep.subr.mxu0 0.0
        %4006 = vmatpush2.msra.mxu0 0.0
        %4007 = vmatprep.subr.mxu0 0.0
        %4008 = vmatpush2.msra.mxu0 0.0
        %4009 = vmatprep.subr.mxu0 0.0
        %4010 = vmatpush2.msra.mxu0 0.0
        %4011 = vmatprep.subr.mxu0 0.0
        %4012 = vmatpush2.msra.mxu0 0.0
        %4013 = vmatprep.subr.mxu0 0.0
        %4014 = vmatpush2.msra.mxu0 0.0
        %4015 = vmatprep.subr.mxu0 0.0
        %4016 = vmatpush2.msra.mxu0 0.0
        %4017 = vmatprep.subr.mxu0 0.0
        %4018 = vmatpush2.msra.mxu0 0.0
        %4019 = vmatprep.subr.mxu0 0.0
        %4020 = vmatpush2.msra.mxu0 0.0
        %4021 = vmatprep.subr.mxu0 0.0
        %4022 = vmatpush2.msra.mxu0 0.0
        %4023 = vmatprep.subr.mxu0 0.0
        %4024 = vmatpush2.msra.mxu0 0.0
        %4025 = vmatprep.subr.mxu0 0.0
        %4026 = vmatpush2.msra.mxu0 0.0
        %4027 = vmatprep.subr.mxu0 0.0
        %4028 = vmatpush2.msra.mxu0 0.0
        %4029 = vmatprep.subr.mxu0 0.0
        %4030 = vmatpush2.msra.mxu0 0.0
        %4031 = vmatprep.subr.mxu0 0.0
        %4032 = vmatpush2.msra.mxu0 0.0
        %4033 = vmatprep.subr.mxu0 0.0
        %4034 = vmatpush2.msra.mxu0 0.0
        %4035 = vmatprep.subr.mxu0 0.0
        %4036 = vmatpush2.msra.mxu0 0.0
        %4037 = vmatprep.mubr.f32.mxu0 0.0
        %v4038 = vand.u32 %v3660, 4294901760
        %v4039 = vsub.f32 %v3660, %v4038
        %4040 = vmatmul.mubr.f32.gmra.mxu0 %v4039
        %v4041 = vpop.f32.mrf.mxu0
        %v4042 = vadd.f32 %v3920, %v4041
        %v4043 = vpop.f32.mrf.mxu0
        %4044 = vmatprep.mubr.f32.mxu0 0.0
        %v4045 = vand.u32 %v3663, 4294901760
        %v4046 = vsub.f32 %v3663, %v4045
        %4047 = vmatmul.mubr.f32.gmra.mxu0 %v4046
        %v4048 = vpop.f32.mrf.mxu0
        %v4049 = vadd.f32 %v3926, %v4048
        %v4050 = vpop.f32.mrf.mxu0
        %4051 = vmatprep.mubr.f32.mxu0 0.0
        %v4052 = vand.u32 %v3666, 4294901760
        %v4053 = vsub.f32 %v3666, %v4052
        %4054 = vmatmul.mubr.f32.gmra.mxu0 %v4053
        %v4055 = vpop.f32.mrf.mxu0
        %v4056 = vadd.f32 %v3932, %v4055
        %v4057 = vpop.f32.mrf.mxu0
        %4058 = vmatprep.mubr.f32.mxu0 0.0
        %v4059 = vand.u32 %v3669, 4294901760
        %v4060 = vsub.f32 %v3669, %v4059
        %4061 = vmatmul.mubr.f32.gmra.mxu0 %v4060
        %v4062 = vpop.f32.mrf.mxu0
        %v4063 = vadd.f32 %v3938, %v4062
        %v4064 = vpop.f32.mrf.mxu0
        %4065 = vmatprep.mubr.f32.mxu0 0.0
        %v4066 = vand.u32 %v3672, 4294901760
        %v4067 = vsub.f32 %v3672, %v4066
        %4068 = vmatmul.mubr.f32.gmra.mxu0 %v4067
        %v4069 = vpop.f32.mrf.mxu0
        %v4070 = vadd.f32 %v3944, %v4069
        %v4071 = vpop.f32.mrf.mxu0
        %4072 = vmatprep.mubr.f32.mxu0 0.0
        %v4073 = vand.u32 %v3675, 4294901760
        %v4074 = vsub.f32 %v3675, %v4073
        %4075 = vmatmul.mubr.f32.gmra.mxu0 %v4074
        %v4076 = vpop.f32.mrf.mxu0
        %v4077 = vadd.f32 %v3950, %v4076
        %v4078 = vpop.f32.mrf.mxu0
        %4079 = vmatprep.mubr.f32.mxu0 0.0
        %v4080 = vand.u32 %v3678, 4294901760
        %v4081 = vsub.f32 %v3678, %v4080
        %4082 = vmatmul.mubr.f32.gmra.mxu0 %v4081
        %v4083 = vpop.f32.mrf.mxu0
        %v4084 = vadd.f32 %v3956, %v4083
        %v4085 = vpop.f32.mrf.mxu0
        %4086 = vmatprep.mubr.f32.mxu0 0.0
        %v4087 = vand.u32 %v3681, 4294901760
        %v4088 = vsub.f32 %v3681, %v4087
        %4089 = vmatmul.mubr.f32.gmra.mxu0 %v4088
        %v4090 = vpop.f32.mrf.mxu0
        %v4091 = vadd.f32 %v3962, %v4090
        %v4092 = vpop.f32.mrf.mxu0
        %4093 = vdwg.mxu0
        %4094 = vmatprep.subr.mxu0 0.0
        %4095 = vmatpush1.msra.mxu0 0.0
        %4096 = vmatprep.subr.mxu0 0.0
        %4097 = vmatpush1.msra.mxu0 0.0
        %4098 = vmatprep.subr.mxu0 0.0
        %4099 = vmatpush1.msra.mxu0 0.0
        %4100 = vmatprep.subr.mxu0 0.0
        %4101 = vmatpush1.msra.mxu0 0.0
        %4102 = vmatprep.subr.mxu0 0.0
        %4103 = vmatpush1.msra.mxu0 0.0
        %4104 = vmatprep.subr.mxu0 0.0
        %4105 = vmatpush1.msra.mxu0 0.0
        %4106 = vmatprep.subr.mxu0 0.0
        %4107 = vmatpush1.msra.mxu0 0.0
        %4108 = vmatprep.subr.mxu0 0.0
        %4109 = vmatpush1.msra.mxu0 0.0
        %4110 = vmatprep.subr.mxu0 0.0
        %4111 = vmatpush1.msra.mxu0 0.0
        %4112 = vmatprep.subr.mxu0 0.0
        %4113 = vmatpush1.msra.mxu0 0.0
        %4114 = vmatprep.subr.mxu0 0.0
        %4115 = vmatpush1.msra.mxu0 0.0
        %4116 = vmatprep.subr.mxu0 0.0
        %4117 = vmatpush1.msra.mxu0 0.0
        %4118 = vmatprep.subr.mxu0 0.0
        %v4119 = vand.u32 %v3653, 4294901760
        %4120 = vmatpush1.msra.mxu0 %v4119
        %4121 = vmatprep.subr.mxu0 0.0
        %v4122 = vand.u32 %v3652, 4294901760
        %4123 = vmatpush1.msra.mxu0 %v4122
        %4124 = vmatprep.subr.mxu0 0.0
        %v4125 = vand.u32 %v3651, 4294901760
        %4126 = vmatpush1.msra.mxu0 %v4125
        %4127 = vmatprep.subr.mxu0 0.0
        %v4128 = vand.u32 %v3650, 4294901760
        %4129 = vmatpush1.msra.mxu0 %v4128
        %4130 = vmatprep.subr.mxu0 0.0
        %4131 = vmatpush2.msra.mxu0 0.0
        %4132 = vmatprep.subr.mxu0 0.0
        %4133 = vmatpush2.msra.mxu0 0.0
        %4134 = vmatprep.subr.mxu0 0.0
        %4135 = vmatpush2.msra.mxu0 0.0
        %4136 = vmatprep.subr.mxu0 0.0
        %4137 = vmatpush2.msra.mxu0 0.0
        %4138 = vmatprep.subr.mxu0 0.0
        %4139 = vmatpush2.msra.mxu0 0.0
        %4140 = vmatprep.subr.mxu0 0.0
        %4141 = vmatpush2.msra.mxu0 0.0
        %4142 = vmatprep.subr.mxu0 0.0
        %4143 = vmatpush2.msra.mxu0 0.0
        %4144 = vmatprep.subr.mxu0 0.0
        %4145 = vmatpush2.msra.mxu0 0.0
        %4146 = vmatprep.subr.mxu0 0.0
        %4147 = vmatpush2.msra.mxu0 0.0
        %4148 = vmatprep.subr.mxu0 0.0
        %4149 = vmatpush2.msra.mxu0 0.0
        %4150 = vmatprep.subr.mxu0 0.0
        %4151 = vmatpush2.msra.mxu0 0.0
        %4152 = vmatprep.subr.mxu0 0.0
        %4153 = vmatpush2.msra.mxu0 0.0
        %4154 = vmatprep.subr.mxu0 0.0
        %4155 = vmatpush2.msra.mxu0 0.0
        %4156 = vmatprep.subr.mxu0 0.0
        %4157 = vmatpush2.msra.mxu0 0.0
        %4158 = vmatprep.subr.mxu0 0.0
        %4159 = vmatpush2.msra.mxu0 0.0
        %4160 = vmatprep.subr.mxu0 0.0
        %4161 = vmatpush2.msra.mxu0 0.0
        %4162 = vmatprep.mubr.f32.mxu0 0.0
        %v4163 = vand.u32 %v3660, 4294901760
        %v4164 = vsub.f32 %v3660, %v4163
        %v4165 = vand.u32 %v4164, 4294901760
        %4166 = vmatmul.mubr.f32.gmra.mxu0 %v4165
        %v4167 = vpop.f32.mrf.mxu0
        %v4168 = vadd.f32 %v4042, %v4167
        %v4169 = vpop.f32.mrf.mxu0
        %4170 = vmatprep.mubr.f32.mxu0 0.0
        %v4171 = vand.u32 %v3663, 4294901760
        %v4172 = vsub.f32 %v3663, %v4171
        %v4173 = vand.u32 %v4172, 4294901760
        %4174 = vmatmul.mubr.f32.gmra.mxu0 %v4173
        %v4175 = vpop.f32.mrf.mxu0
        %v4176 = vadd.f32 %v4049, %v4175
        %v4177 = vpop.f32.mrf.mxu0
        %4178 = vmatprep.mubr.f32.mxu0 0.0
        %v4179 = vand.u32 %v3666, 4294901760
        %v4180 = vsub.f32 %v3666, %v4179
        %v4181 = vand.u32 %v4180, 4294901760
        %4182 = vmatmul.mubr.f32.gmra.mxu0 %v4181
        %v4183 = vpop.f32.mrf.mxu0
        %v4184 = vadd.f32 %v4056, %v4183
        %v4185 = vpop.f32.mrf.mxu0
        %4186 = vmatprep.mubr.f32.mxu0 0.0
        %v4187 = vand.u32 %v3669, 4294901760
        %v4188 = vsub.f32 %v3669, %v4187
        %v4189 = vand.u32 %v4188, 4294901760
        %4190 = vmatmul.mubr.f32.gmra.mxu0 %v4189
        %v4191 = vpop.f32.mrf.mxu0
        %v4192 = vadd.f32 %v4063, %v4191
        %v4193 = vpop.f32.mrf.mxu0
        %4194 = vmatprep.mubr.f32.mxu0 0.0
        %v4195 = vand.u32 %v3672, 4294901760
        %v4196 = vsub.f32 %v3672, %v4195
        %v4197 = vand.u32 %v4196, 4294901760
        %4198 = vmatmul.mubr.f32.gmra.mxu0 %v4197
        %v4199 = vpop.f32.mrf.mxu0
        %v4200 = vadd.f32 %v4070, %v4199
        %v4201 = vpop.f32.mrf.mxu0
        %4202 = vmatprep.mubr.f32.mxu0 0.0
        %v4203 = vand.u32 %v3675, 4294901760
        %v4204 = vsub.f32 %v3675, %v4203
        %v4205 = vand.u32 %v4204, 4294901760
        %4206 = vmatmul.mubr.f32.gmra.mxu0 %v4205
        %v4207 = vpop.f32.mrf.mxu0
        %v4208 = vadd.f32 %v4077, %v4207
        %v4209 = vpop.f32.mrf.mxu0
        %4210 = vmatprep.mubr.f32.mxu0 0.0
        %v4211 = vand.u32 %v3678, 4294901760
        %v4212 = vsub.f32 %v3678, %v4211
        %v4213 = vand.u32 %v4212, 4294901760
        %4214 = vmatmul.mubr.f32.gmra.mxu0 %v4213
        %v4215 = vpop.f32.mrf.mxu0
        %v4216 = vadd.f32 %v4084, %v4215
        %v4217 = vpop.f32.mrf.mxu0
        %4218 = vmatprep.mubr.f32.mxu0 0.0
        %v4219 = vand.u32 %v3681, 4294901760
        %v4220 = vsub.f32 %v3681, %v4219
        %v4221 = vand.u32 %v4220, 4294901760
        %4222 = vmatmul.mubr.f32.gmra.mxu0 %v4221
        %v4223 = vpop.f32.mrf.mxu0
        %v4224 = vadd.f32 %v4091, %v4223
        %v4225 = vpop.f32.mrf.mxu0
        %4226 = vdwg.mxu0
        %4227 = vmatprep.subr.mxu0 0.0
        %4228 = vmatpush1.msra.mxu0 0.0
        %4229 = vmatprep.subr.mxu0 0.0
        %4230 = vmatpush1.msra.mxu0 0.0
        %4231 = vmatprep.subr.mxu0 0.0
        %4232 = vmatpush1.msra.mxu0 0.0
        %4233 = vmatprep.subr.mxu0 0.0
        %4234 = vmatpush1.msra.mxu0 0.0
        %4235 = vmatprep.subr.mxu0 0.0
        %4236 = vmatpush1.msra.mxu0 0.0
        %4237 = vmatprep.subr.mxu0 0.0
        %4238 = vmatpush1.msra.mxu0 0.0
        %4239 = vmatprep.subr.mxu0 0.0
        %4240 = vmatpush1.msra.mxu0 0.0
        %4241 = vmatprep.subr.mxu0 0.0
        %4242 = vmatpush1.msra.mxu0 0.0
        %4243 = vmatprep.subr.mxu0 0.0
        %4244 = vmatpush1.msra.mxu0 0.0
        %4245 = vmatprep.subr.mxu0 0.0
        %4246 = vmatpush1.msra.mxu0 0.0
        %4247 = vmatprep.subr.mxu0 0.0
        %4248 = vmatpush1.msra.mxu0 0.0
        %4249 = vmatprep.subr.mxu0 0.0
        %4250 = vmatpush1.msra.mxu0 0.0
        %4251 = vmatprep.subr.mxu0 0.0
        %v4252 = vand.u32 %v3653, 4294901760
        %v4253 = vsub.f32 %v3653, %v4252
        %v4254 = vand.u32 %v4253, 4294901760
        %4255 = vmatpush1.msra.mxu0 %v4254
        %4256 = vmatprep.subr.mxu0 0.0
        %v4257 = vand.u32 %v3652, 4294901760
        %v4258 = vsub.f32 %v3652, %v4257
        %v4259 = vand.u32 %v4258, 4294901760
        %4260 = vmatpush1.msra.mxu0 %v4259
        %4261 = vmatprep.subr.mxu0 0.0
        %v4262 = vand.u32 %v3651, 4294901760
        %v4263 = vsub.f32 %v3651, %v4262
        %v4264 = vand.u32 %v4263, 4294901760
        %4265 = vmatpush1.msra.mxu0 %v4264
        %4266 = vmatprep.subr.mxu0 0.0
        %v4267 = vand.u32 %v3650, 4294901760
        %v4268 = vsub.f32 %v3650, %v4267
        %v4269 = vand.u32 %v4268, 4294901760
        %4270 = vmatpush1.msra.mxu0 %v4269
        %4271 = vmatprep.subr.mxu0 0.0
        %4272 = vmatpush2.msra.mxu0 0.0
        %4273 = vmatprep.subr.mxu0 0.0
        %4274 = vmatpush2.msra.mxu0 0.0
        %4275 = vmatprep.subr.mxu0 0.0
        %4276 = vmatpush2.msra.mxu0 0.0
        %4277 = vmatprep.subr.mxu0 0.0
        %4278 = vmatpush2.msra.mxu0 0.0
        %4279 = vmatprep.subr.mxu0 0.0
        %4280 = vmatpush2.msra.mxu0 0.0
        %4281 = vmatprep.subr.mxu0 0.0
        %4282 = vmatpush2.msra.mxu0 0.0
        %4283 = vmatprep.subr.mxu0 0.0
        %4284 = vmatpush2.msra.mxu0 0.0
        %4285 = vmatprep.subr.mxu0 0.0
        %4286 = vmatpush2.msra.mxu0 0.0
        %4287 = vmatprep.subr.mxu0 0.0
        %4288 = vmatpush2.msra.mxu0 0.0
        %4289 = vmatprep.subr.mxu0 0.0
        %4290 = vmatpush2.msra.mxu0 0.0
        %4291 = vmatprep.subr.mxu0 0.0
        %4292 = vmatpush2.msra.mxu0 0.0
        %4293 = vmatprep.subr.mxu0 0.0
        %4294 = vmatpush2.msra.mxu0 0.0
        %4295 = vmatprep.subr.mxu0 0.0
        %4296 = vmatpush2.msra.mxu0 0.0
        %4297 = vmatprep.subr.mxu0 0.0
        %4298 = vmatpush2.msra.mxu0 0.0
        %4299 = vmatprep.subr.mxu0 0.0
        %4300 = vmatpush2.msra.mxu0 0.0
        %4301 = vmatprep.subr.mxu0 0.0
        %4302 = vmatpush2.msra.mxu0 0.0
        %4303 = vmatprep.mubr.f32.mxu0 0.0
        %v4304 = vand.u32 %v3660, 4294901760
        %4305 = vmatmul.mubr.f32.gmra.mxu0 %v4304
        %v4306 = vpop.f32.mrf.mxu0
        %v4307 = vadd.f32 %v4168, %v4306
        %v4308 = vpop.f32.mrf.mxu0
        %4309 = vmatprep.mubr.f32.mxu0 0.0
        %v4310 = vand.u32 %v3663, 4294901760
        %4311 = vmatmul.mubr.f32.gmra.mxu0 %v4310
        %v4312 = vpop.f32.mrf.mxu0
        %v4313 = vadd.f32 %v4176, %v4312
        %v4314 = vpop.f32.mrf.mxu0
        %4315 = vmatprep.mubr.f32.mxu0 0.0
        %v4316 = vand.u32 %v3666, 4294901760
        %4317 = vmatmul.mubr.f32.gmra.mxu0 %v4316
        %v4318 = vpop.f32.mrf.mxu0
        %v4319 = vadd.f32 %v4184, %v4318
        %v4320 = vpop.f32.mrf.mxu0
        %4321 = vmatprep.mubr.f32.mxu0 0.0
        %v4322 = vand.u32 %v3669, 4294901760
        %4323 = vmatmul.mubr.f32.gmra.mxu0 %v4322
        %v4324 = vpop.f32.mrf.mxu0
        %v4325 = vadd.f32 %v4192, %v4324
        %v4326 = vpop.f32.mrf.mxu0
        %4327 = vmatprep.mubr.f32.mxu0 0.0
        %v4328 = vand.u32 %v3672, 4294901760
        %4329 = vmatmul.mubr.f32.gmra.mxu0 %v4328
        %v4330 = vpop.f32.mrf.mxu0
        %v4331 = vadd.f32 %v4200, %v4330
        %v4332 = vpop.f32.mrf.mxu0
        %4333 = vmatprep.mubr.f32.mxu0 0.0
        %v4334 = vand.u32 %v3675, 4294901760
        %4335 = vmatmul.mubr.f32.gmra.mxu0 %v4334
        %v4336 = vpop.f32.mrf.mxu0
        %v4337 = vadd.f32 %v4208, %v4336
        %v4338 = vpop.f32.mrf.mxu0
        %4339 = vmatprep.mubr.f32.mxu0 0.0
        %v4340 = vand.u32 %v3678, 4294901760
        %4341 = vmatmul.mubr.f32.gmra.mxu0 %v4340
        %v4342 = vpop.f32.mrf.mxu0
        %v4343 = vadd.f32 %v4216, %v4342
        %v4344 = vpop.f32.mrf.mxu0
        %4345 = vmatprep.mubr.f32.mxu0 0.0
        %v4346 = vand.u32 %v3681, 4294901760
        %4347 = vmatmul.mubr.f32.gmra.mxu0 %v4346
        %v4348 = vpop.f32.mrf.mxu0
        %v4349 = vadd.f32 %v4224, %v4348
        %v4350 = vpop.f32.mrf.mxu0
        %4351 = vdwg.mxu0
        %4352 = vmatprep.subr.mxu0 0.0
        %4353 = vmatpush1.msra.mxu0 0.0
        %4354 = vmatprep.subr.mxu0 0.0
        %4355 = vmatpush1.msra.mxu0 0.0
        %4356 = vmatprep.subr.mxu0 0.0
        %4357 = vmatpush1.msra.mxu0 0.0
        %4358 = vmatprep.subr.mxu0 0.0
        %4359 = vmatpush1.msra.mxu0 0.0
        %4360 = vmatprep.subr.mxu0 0.0
        %4361 = vmatpush1.msra.mxu0 0.0
        %4362 = vmatprep.subr.mxu0 0.0
        %4363 = vmatpush1.msra.mxu0 0.0
        %4364 = vmatprep.subr.mxu0 0.0
        %4365 = vmatpush1.msra.mxu0 0.0
        %4366 = vmatprep.subr.mxu0 0.0
        %4367 = vmatpush1.msra.mxu0 0.0
        %4368 = vmatprep.subr.mxu0 0.0
        %4369 = vmatpush1.msra.mxu0 0.0
        %4370 = vmatprep.subr.mxu0 0.0
        %4371 = vmatpush1.msra.mxu0 0.0
        %4372 = vmatprep.subr.mxu0 0.0
        %4373 = vmatpush1.msra.mxu0 0.0
        %4374 = vmatprep.subr.mxu0 0.0
        %4375 = vmatpush1.msra.mxu0 0.0
        %4376 = vmatprep.subr.mxu0 0.0
        %v4377 = vand.u32 %v3653, 4294901760
        %4378 = vmatpush1.msra.mxu0 %v4377
        %4379 = vmatprep.subr.mxu0 0.0
        %v4380 = vand.u32 %v3652, 4294901760
        %4381 = vmatpush1.msra.mxu0 %v4380
        %4382 = vmatprep.subr.mxu0 0.0
        %v4383 = vand.u32 %v3651, 4294901760
        %4384 = vmatpush1.msra.mxu0 %v4383
        %4385 = vmatprep.subr.mxu0 0.0
        %v4386 = vand.u32 %v3650, 4294901760
        %4387 = vmatpush1.msra.mxu0 %v4386
        %4388 = vmatprep.subr.mxu0 0.0
        %4389 = vmatpush2.msra.mxu0 0.0
        %4390 = vmatprep.subr.mxu0 0.0
        %4391 = vmatpush2.msra.mxu0 0.0
        %4392 = vmatprep.subr.mxu0 0.0
        %4393 = vmatpush2.msra.mxu0 0.0
        %4394 = vmatprep.subr.mxu0 0.0
        %4395 = vmatpush2.msra.mxu0 0.0
        %4396 = vmatprep.subr.mxu0 0.0
        %4397 = vmatpush2.msra.mxu0 0.0
        %4398 = vmatprep.subr.mxu0 0.0
        %4399 = vmatpush2.msra.mxu0 0.0
        %4400 = vmatprep.subr.mxu0 0.0
        %4401 = vmatpush2.msra.mxu0 0.0
        %4402 = vmatprep.subr.mxu0 0.0
        %4403 = vmatpush2.msra.mxu0 0.0
        %4404 = vmatprep.subr.mxu0 0.0
        %4405 = vmatpush2.msra.mxu0 0.0
        %4406 = vmatprep.subr.mxu0 0.0
        %4407 = vmatpush2.msra.mxu0 0.0
        %4408 = vmatprep.subr.mxu0 0.0
        %4409 = vmatpush2.msra.mxu0 0.0
        %4410 = vmatprep.subr.mxu0 0.0
        %4411 = vmatpush2.msra.mxu0 0.0
        %4412 = vmatprep.subr.mxu0 0.0
        %4413 = vmatpush2.msra.mxu0 0.0
        %4414 = vmatprep.subr.mxu0 0.0
        %4415 = vmatpush2.msra.mxu0 0.0
        %4416 = vmatprep.subr.mxu0 0.0
        %4417 = vmatpush2.msra.mxu0 0.0
        %4418 = vmatprep.subr.mxu0 0.0
        %4419 = vmatpush2.msra.mxu0 0.0
        %4420 = vmatprep.mubr.f32.mxu0 0.0
        %v4421 = vand.u32 %v3660, 4294901760
        %4422 = vmatmul.mubr.f32.gmra.mxu0 %v4421
        %v4423 = vpop.f32.mrf.mxu0
        %v4424 = vadd.f32 %v4307, %v4423
        %v4425 = vpop.f32.mrf.mxu0
        %4426 = vmatprep.mubr.f32.mxu0 0.0
        %v4427 = vand.u32 %v3663, 4294901760
        %4428 = vmatmul.mubr.f32.gmra.mxu0 %v4427
        %v4429 = vpop.f32.mrf.mxu0
        %v4430 = vadd.f32 %v4313, %v4429
        %v4431 = vpop.f32.mrf.mxu0
        %4432 = vmatprep.mubr.f32.mxu0 0.0
        %v4433 = vand.u32 %v3666, 4294901760
        %4434 = vmatmul.mubr.f32.gmra.mxu0 %v4433
        %v4435 = vpop.f32.mrf.mxu0
        %v4436 = vadd.f32 %v4319, %v4435
        %v4437 = vpop.f32.mrf.mxu0
        %4438 = vmatprep.mubr.f32.mxu0 0.0
        %v4439 = vand.u32 %v3669, 4294901760
        %4440 = vmatmul.mubr.f32.gmra.mxu0 %v4439
        %v4441 = vpop.f32.mrf.mxu0
        %v4442 = vadd.f32 %v4325, %v4441
        %v4443 = vpop.f32.mrf.mxu0
        %4444 = vmatprep.mubr.f32.mxu0 0.0
        %v4445 = vand.u32 %v3672, 4294901760
        %4446 = vmatmul.mubr.f32.gmra.mxu0 %v4445
        %v4447 = vpop.f32.mrf.mxu0
        %v4448 = vadd.f32 %v4331, %v4447
        %v4449 = vpop.f32.mrf.mxu0
        %4450 = vmatprep.mubr.f32.mxu0 0.0
        %v4451 = vand.u32 %v3675, 4294901760
        %4452 = vmatmul.mubr.f32.gmra.mxu0 %v4451
        %v4453 = vpop.f32.mrf.mxu0
        %v4454 = vadd.f32 %v4337, %v4453
        %v4455 = vpop.f32.mrf.mxu0
        %4456 = vmatprep.mubr.f32.mxu0 0.0
        %v4457 = vand.u32 %v3678, 4294901760
        %4458 = vmatmul.mubr.f32.gmra.mxu0 %v4457
        %v4459 = vpop.f32.mrf.mxu0
        %v4460 = vadd.f32 %v4343, %v4459
        %v4461 = vpop.f32.mrf.mxu0
        %4462 = vmatprep.mubr.f32.mxu0 0.0
        %v4463 = vand.u32 %v3681, 4294901760
        %4464 = vmatmul.mubr.f32.gmra.mxu0 %v4463
        %v4465 = vpop.f32.mrf.mxu0
        %v4466 = vadd.f32 %v4349, %v4465
        %v4467 = vpop.f32.mrf.mxu0
        %4468 = vdwg.mxu0
        %v4469 = vld [vmem:[%s157 + $0x28] sm:$0xff]
        %v4470 = vld [vmem:[%s157 + $0x30] sm:$0xff]
        %v4471 = vld [vmem:[%s157 + $0x38] sm:$0xff]
        %v4472 = vld [vmem:[%s157 + $0x40] sm:$0xff]
        %v4473 = vld [vmem:[%s157 + $0x48] sm:$0xff]
        %v4474 = vld [vmem:[%s157 + $0x50] sm:$0xff]
        %v4475 = vld [vmem:[%s157 + $0x58] sm:$0xff]
        %v4476 = vld [vmem:[%s157 + $0x60] sm:$0xff]
        %v4477 = vmul.f32 %v4424, 1.442695
        %v4478 = vpow.pop %v4477
        %v4479 = vmul.f32 %v4430, 1.442695
        %v4480 = vpow.pop %v4479
        %v4481 = vmul.f32 %v4436, 1.442695
        %v4482 = vpow.pop %v4481
        %v4483 = vmul.f32 %v4442, 1.442695
        %v4484 = vpow.pop %v4483
        %v4485 = vmul.f32 %v4448, 1.442695
        %v4486 = vpow.pop %v4485
        %v4487 = vmul.f32 %v4454, 1.442695
        %v4488 = vpow.pop %v4487
        %v4489 = vmul.f32 %v4460, 1.442695
        %v4490 = vpow.pop %v4489
        %v4491 = vmul.f32 %v4466, 1.442695
        %v4492 = vpow.pop %v4491
        %4501 = vrot.lane.b32.xlu0 %v4469, 8
        %v4502 = vpop.permute.xlu0 %4501
        %4503 = vrot.lane.b32.xlu0 %v4470, 8
        %v4504 = vpop.permute.xlu0 %4503
        %4505 = vrot.lane.b32.xlu0 %v4471, 8
        %v4506 = vpop.permute.xlu0 %4505
        %4507 = vrot.lane.b32.xlu0 %v4472, 8
        %v4508 = vpop.permute.xlu0 %4507
        %4509 = vrot.lane.b32.xlu0 %v4473, 8
        %v4510 = vpop.permute.xlu0 %4509
        %4511 = vrot.lane.b32.xlu0 %v4474, 8
        %v4512 = vpop.permute.xlu0 %4511
        %4513 = vrot.lane.b32.xlu0 %v4475, 8
        %v4514 = vpop.permute.xlu0 %4513
        %4515 = vrot.lane.b32.xlu0 %v4476, 8
        %v4516 = vpop.permute.xlu0 %4515
        %v4525 = vmul.f32 %v4478, %v4502
        %v4526 = vmul.f32 %v4480, %v4504
        %v4527 = vmul.f32 %v4482, %v4506
        %v4528 = vmul.f32 %v4484, %v4508
        %v4529 = vmul.f32 %v4486, %v4510
        %v4530 = vmul.f32 %v4488, %v4512
        %v4531 = vmul.f32 %v4490, %v4514
        %v4532 = vmul.f32 %v4492, %v4516
        %4541 = vrot.lane.b32.xlu0 %v4525, 120
        %v4542 = vpop.permute.xlu0 %4541
        %4543 = vrot.lane.b32.xlu0 %v4526, 120
        %v4544 = vpop.permute.xlu0 %4543
        %4545 = vrot.lane.b32.xlu0 %v4527, 120
        %v4546 = vpop.permute.xlu0 %4545
        %4547 = vrot.lane.b32.xlu0 %v4528, 120
        %v4548 = vpop.permute.xlu0 %4547
        %4549 = vrot.lane.b32.xlu0 %v4529, 120
        %v4550 = vpop.permute.xlu0 %4549
        %4551 = vrot.lane.b32.xlu0 %v4530, 120
        %v4552 = vpop.permute.xlu0 %4551
        %4553 = vrot.lane.b32.xlu0 %v4531, 120
        %v4554 = vpop.permute.xlu0 %4553
        %4555 = vrot.lane.b32.xlu0 %v4532, 120
        %v4556 = vpop.permute.xlu0 %4555
        %v4565 = vadd.f32 %v4424, %v4542
        %v4566 = vadd.f32 %v4430, %v4544
        %v4567 = vadd.f32 %v4436, %v4546
        %v4568 = vadd.f32 %v4442, %v4548
        %v4569 = vadd.f32 %v4448, %v4550
        %v4570 = vadd.f32 %v4454, %v4552
        %v4571 = vadd.f32 %v4460, %v4554
        %v4572 = vadd.f32 %v4466, %v4556
        %v4573 = vld [vmem:[#allocation2 + $0xf8] sm:$0xff]
        %v4574 = vld [vmem:[#allocation2 + $0x100] sm:$0x1]
        %v4576 = vsel %vm176, %v4565, 0
        %v4579 = vsel %vm176, %v4566, 0
        %v4582 = vsel %vm176, %v4567, 0
        %v4585 = vsel %vm176, %v4568, 0
        %v4588 = vsel %vm176, %v4569, 0
        %v4591 = vsel %vm176, %v4570, 0
        %v4594 = vsel %vm176, %v4571, 0
        %v4597 = vsel %vm176, %v4572, 0
        %4599 = vmatprep.subr.mxu0 0.0
        %4600 = vmatpush1.msra.mxu0 0.0
        %4601 = vmatprep.subr.mxu0 0.0
        %4602 = vmatpush1.msra.mxu0 0.0
        %4603 = vmatprep.subr.mxu0 0.0
        %4604 = vmatpush1.msra.mxu0 0.0
        %4605 = vmatprep.subr.mxu0 0.0
        %4606 = vmatpush1.msra.mxu0 0.0
        %4607 = vmatprep.subr.mxu0 0.0
        %4608 = vmatpush1.msra.mxu0 0.0
        %4609 = vmatprep.subr.mxu0 0.0
        %4610 = vmatpush1.msra.mxu0 0.0
        %4611 = vmatprep.subr.mxu0 0.0
        %4612 = vmatpush1.msra.mxu0 0.0
        %4613 = vmatprep.subr.mxu0 0.0
        %4614 = vmatpush1.msra.mxu0 0.0
        %4615 = vmatprep.subr.mxu0 0.0
        %4616 = vmatpush1.msra.mxu0 0.0
        %4617 = vmatprep.subr.mxu0 0.0
        %4618 = vmatpush1.msra.mxu0 0.0
        %4619 = vmatprep.subr.mxu0 0.0
        %4620 = vmatpush1.msra.mxu0 0.0
        %4621 = vmatprep.subr.mxu0 0.0
        %4622 = vmatpush1.msra.mxu0 0.0
        %4623 = vmatprep.subr.mxu0 0.0
        %4624 = vmatpush1.msra.mxu0 0.0
        %4625 = vmatprep.subr.mxu0 0.0
        %4626 = vmatpush1.msra.mxu0 0.0
        %4627 = vmatprep.subr.mxu0 0.0
        %4628 = vmatpush1.msra.mxu0 0.0
        %4629 = vmatprep.subr.mxu0 0.0
        %v4630 = vand.u32 %v4573, 4294901760
        %4631 = vmatpush1.msra.mxu0 %v4630
        %4632 = vmatprep.subr.mxu0 0.0
        %4633 = vmatpush2.msra.mxu0 0.0
        %4634 = vmatprep.subr.mxu0 0.0
        %4635 = vmatpush2.msra.mxu0 0.0
        %4636 = vmatprep.subr.mxu0 0.0
        %4637 = vmatpush2.msra.mxu0 0.0
        %4638 = vmatprep.subr.mxu0 0.0
        %4639 = vmatpush2.msra.mxu0 0.0
        %4640 = vmatprep.subr.mxu0 0.0
        %4641 = vmatpush2.msra.mxu0 0.0
        %4642 = vmatprep.subr.mxu0 0.0
        %4643 = vmatpush2.msra.mxu0 0.0
        %4644 = vmatprep.subr.mxu0 0.0
        %4645 = vmatpush2.msra.mxu0 0.0
        %4646 = vmatprep.subr.mxu0 0.0
        %4647 = vmatpush2.msra.mxu0 0.0
        %4648 = vmatprep.subr.mxu0 0.0
        %4649 = vmatpush2.msra.mxu0 0.0
        %4650 = vmatprep.subr.mxu0 0.0
        %4651 = vmatpush2.msra.mxu0 0.0
        %4652 = vmatprep.subr.mxu0 0.0
        %4653 = vmatpush2.msra.mxu0 0.0
        %4654 = vmatprep.subr.mxu0 0.0
        %4655 = vmatpush2.msra.mxu0 0.0
        %4656 = vmatprep.subr.mxu0 0.0
        %4657 = vmatpush2.msra.mxu0 0.0
        %4658 = vmatprep.subr.mxu0 0.0
        %4659 = vmatpush2.msra.mxu0 0.0
        %4660 = vmatprep.subr.mxu0 0.0
        %4661 = vmatpush2.msra.mxu0 0.0
        %4662 = vmatprep.subr.mxu0 0.0
        %4663 = vmatpush2.msra.mxu0 0.0
        %4664 = vmatprep.mubr.f32.mxu0 0.0
        %v4665 = vand.u32 %v4576, 4294901760
        %v4666 = vsub.f32 %v4576, %v4665
        %v4667 = vand.u32 %v4666, 4294901760
        %v4668 = vsub.f32 %v4666, %v4667
        %v4669 = vand.u32 %v4668, 4294901760
        %4670 = vmatmul.mubr.f32.gmra.mxu0 %v4669
        %v4671 = vpop.f32.mrf.mxu0
        %v4672 = vadd.f32 0.0, %v4671
        %v4673 = vpop.f32.mrf.mxu0
        %4674 = vmatprep.mubr.f32.mxu0 0.0
        %v4675 = vand.u32 %v4579, 4294901760
        %v4676 = vsub.f32 %v4579, %v4675
        %v4677 = vand.u32 %v4676, 4294901760
        %v4678 = vsub.f32 %v4676, %v4677
        %v4679 = vand.u32 %v4678, 4294901760
        %4680 = vmatmul.mubr.f32.gmra.mxu0 %v4679
        %v4681 = vpop.f32.mrf.mxu0
        %v4682 = vadd.f32 0.0, %v4681
        %v4683 = vpop.f32.mrf.mxu0
        %4684 = vmatprep.mubr.f32.mxu0 0.0
        %v4685 = vand.u32 %v4582, 4294901760
        %v4686 = vsub.f32 %v4582, %v4685
        %v4687 = vand.u32 %v4686, 4294901760
        %v4688 = vsub.f32 %v4686, %v4687
        %v4689 = vand.u32 %v4688, 4294901760
        %4690 = vmatmul.mubr.f32.gmra.mxu0 %v4689
        %v4691 = vpop.f32.mrf.mxu0
        %v4692 = vadd.f32 0.0, %v4691
        %v4693 = vpop.f32.mrf.mxu0
        %4694 = vmatprep.mubr.f32.mxu0 0.0
        %v4695 = vand.u32 %v4585, 4294901760
        %v4696 = vsub.f32 %v4585, %v4695
        %v4697 = vand.u32 %v4696, 4294901760
        %v4698 = vsub.f32 %v4696, %v4697
        %v4699 = vand.u32 %v4698, 4294901760
        %4700 = vmatmul.mubr.f32.gmra.mxu0 %v4699
        %v4701 = vpop.f32.mrf.mxu0
        %v4702 = vadd.f32 0.0, %v4701
        %v4703 = vpop.f32.mrf.mxu0
        %4704 = vmatprep.mubr.f32.mxu0 0.0
        %v4705 = vand.u32 %v4588, 4294901760
        %v4706 = vsub.f32 %v4588, %v4705
        %v4707 = vand.u32 %v4706, 4294901760
        %v4708 = vsub.f32 %v4706, %v4707
        %v4709 = vand.u32 %v4708, 4294901760
        %4710 = vmatmul.mubr.f32.gmra.mxu0 %v4709
        %v4711 = vpop.f32.mrf.mxu0
        %v4712 = vadd.f32 0.0, %v4711
        %v4713 = vpop.f32.mrf.mxu0
        %4714 = vmatprep.mubr.f32.mxu0 0.0
        %v4715 = vand.u32 %v4591, 4294901760
        %v4716 = vsub.f32 %v4591, %v4715
        %v4717 = vand.u32 %v4716, 4294901760
        %v4718 = vsub.f32 %v4716, %v4717
        %v4719 = vand.u32 %v4718, 4294901760
        %4720 = vmatmul.mubr.f32.gmra.mxu0 %v4719
        %v4721 = vpop.f32.mrf.mxu0
        %v4722 = vadd.f32 0.0, %v4721
        %v4723 = vpop.f32.mrf.mxu0
        %4724 = vmatprep.mubr.f32.mxu0 0.0
        %v4725 = vand.u32 %v4594, 4294901760
        %v4726 = vsub.f32 %v4594, %v4725
        %v4727 = vand.u32 %v4726, 4294901760
        %v4728 = vsub.f32 %v4726, %v4727
        %v4729 = vand.u32 %v4728, 4294901760
        %4730 = vmatmul.mubr.f32.gmra.mxu0 %v4729
        %v4731 = vpop.f32.mrf.mxu0
        %v4732 = vadd.f32 0.0, %v4731
        %v4733 = vpop.f32.mrf.mxu0
        %4734 = vmatprep.mubr.f32.mxu0 0.0
        %v4735 = vand.u32 %v4597, 4294901760
        %v4736 = vsub.f32 %v4597, %v4735
        %v4737 = vand.u32 %v4736, 4294901760
        %v4738 = vsub.f32 %v4736, %v4737
        %v4739 = vand.u32 %v4738, 4294901760
        %4740 = vmatmul.mubr.f32.gmra.mxu0 %v4739
        %v4741 = vpop.f32.mrf.mxu0
        %v4742 = vadd.f32 0.0, %v4741
        %v4743 = vpop.f32.mrf.mxu0
        %4744 = vdwg.mxu0
        %4745 = vmatprep.subr.mxu0 0.0
        %4746 = vmatpush1.msra.mxu0 0.0
        %4747 = vmatprep.subr.mxu0 0.0
        %4748 = vmatpush1.msra.mxu0 0.0
        %4749 = vmatprep.subr.mxu0 0.0
        %4750 = vmatpush1.msra.mxu0 0.0
        %4751 = vmatprep.subr.mxu0 0.0
        %4752 = vmatpush1.msra.mxu0 0.0
        %4753 = vmatprep.subr.mxu0 0.0
        %4754 = vmatpush1.msra.mxu0 0.0
        %4755 = vmatprep.subr.mxu0 0.0
        %4756 = vmatpush1.msra.mxu0 0.0
        %4757 = vmatprep.subr.mxu0 0.0
        %4758 = vmatpush1.msra.mxu0 0.0
        %4759 = vmatprep.subr.mxu0 0.0
        %4760 = vmatpush1.msra.mxu0 0.0
        %4761 = vmatprep.subr.mxu0 0.0
        %4762 = vmatpush1.msra.mxu0 0.0
        %4763 = vmatprep.subr.mxu0 0.0
        %4764 = vmatpush1.msra.mxu0 0.0
        %4765 = vmatprep.subr.mxu0 0.0
        %4766 = vmatpush1.msra.mxu0 0.0
        %4767 = vmatprep.subr.mxu0 0.0
        %4768 = vmatpush1.msra.mxu0 0.0
        %4769 = vmatprep.subr.mxu0 0.0
        %4770 = vmatpush1.msra.mxu0 0.0
        %4771 = vmatprep.subr.mxu0 0.0
        %4772 = vmatpush1.msra.mxu0 0.0
        %4773 = vmatprep.subr.mxu0 0.0
        %4774 = vmatpush1.msra.mxu0 0.0
        %4775 = vmatprep.subr.mxu0 0.0
        %v4776 = vand.u32 %v4573, 4294901760
        %v4777 = vsub.f32 %v4573, %v4776
        %v4778 = vand.u32 %v4777, 4294901760
        %v4779 = vsub.f32 %v4777, %v4778
        %v4780 = vand.u32 %v4779, 4294901760
        %4781 = vmatpush1.msra.mxu0 %v4780
        %4782 = vmatprep.subr.mxu0 0.0
        %4783 = vmatpush2.msra.mxu0 0.0
        %4784 = vmatprep.subr.mxu0 0.0
        %4785 = vmatpush2.msra.mxu0 0.0
        %4786 = vmatprep.subr.mxu0 0.0
        %4787 = vmatpush2.msra.mxu0 0.0
        %4788 = vmatprep.subr.mxu0 0.0
        %4789 = vmatpush2.msra.mxu0 0.0
        %4790 = vmatprep.subr.mxu0 0.0
        %4791 = vmatpush2.msra.mxu0 0.0
        %4792 = vmatprep.subr.mxu0 0.0
        %4793 = vmatpush2.msra.mxu0 0.0
        %4794 = vmatprep.subr.mxu0 0.0
        %4795 = vmatpush2.msra.mxu0 0.0
        %4796 = vmatprep.subr.mxu0 0.0
        %4797 = vmatpush2.msra.mxu0 0.0
        %4798 = vmatprep.subr.mxu0 0.0
        %4799 = vmatpush2.msra.mxu0 0.0
        %4800 = vmatprep.subr.mxu0 0.0
        %4801 = vmatpush2.msra.mxu0 0.0
        %4802 = vmatprep.subr.mxu0 0.0
        %4803 = vmatpush2.msra.mxu0 0.0
        %4804 = vmatprep.subr.mxu0 0.0
        %4805 = vmatpush2.msra.mxu0 0.0
        %4806 = vmatprep.subr.mxu0 0.0
        %4807 = vmatpush2.msra.mxu0 0.0
        %4808 = vmatprep.subr.mxu0 0.0
        %4809 = vmatpush2.msra.mxu0 0.0
        %4810 = vmatprep.subr.mxu0 0.0
        %4811 = vmatpush2.msra.mxu0 0.0
        %4812 = vmatprep.subr.mxu0 0.0
        %4813 = vmatpush2.msra.mxu0 0.0
        %4814 = vmatprep.mubr.f32.mxu0 0.0
        %v4815 = vand.u32 %v4576, 4294901760
        %4816 = vmatmul.mubr.f32.gmra.mxu0 %v4815
        %v4817 = vpop.f32.mrf.mxu0
        %v4818 = vadd.f32 %v4672, %v4817
        %v4819 = vpop.f32.mrf.mxu0
        %4820 = vmatprep.mubr.f32.mxu0 0.0
        %v4821 = vand.u32 %v4579, 4294901760
        %4822 = vmatmul.mubr.f32.gmra.mxu0 %v4821
        %v4823 = vpop.f32.mrf.mxu0
        %v4824 = vadd.f32 %v4682, %v4823
        %v4825 = vpop.f32.mrf.mxu0
        %4826 = vmatprep.mubr.f32.mxu0 0.0
        %v4827 = vand.u32 %v4582, 4294901760
        %4828 = vmatmul.mubr.f32.gmra.mxu0 %v4827
        %v4829 = vpop.f32.mrf.mxu0
        %v4830 = vadd.f32 %v4692, %v4829
        %v4831 = vpop.f32.mrf.mxu0
        %4832 = vmatprep.mubr.f32.mxu0 0.0
        %v4833 = vand.u32 %v4585, 4294901760
        %4834 = vmatmul.mubr.f32.gmra.mxu0 %v4833
        %v4835 = vpop.f32.mrf.mxu0
        %v4836 = vadd.f32 %v4702, %v4835
        %v4837 = vpop.f32.mrf.mxu0
        %4838 = vmatprep.mubr.f32.mxu0 0.0
        %v4839 = vand.u32 %v4588, 4294901760
        %4840 = vmatmul.mubr.f32.gmra.mxu0 %v4839
        %v4841 = vpop.f32.mrf.mxu0
        %v4842 = vadd.f32 %v4712, %v4841
        %v4843 = vpop.f32.mrf.mxu0
        %4844 = vmatprep.mubr.f32.mxu0 0.0
        %v4845 = vand.u32 %v4591, 4294901760
        %4846 = vmatmul.mubr.f32.gmra.mxu0 %v4845
        %v4847 = vpop.f32.mrf.mxu0
        %v4848 = vadd.f32 %v4722, %v4847
        %v4849 = vpop.f32.mrf.mxu0
        %4850 = vmatprep.mubr.f32.mxu0 0.0
        %v4851 = vand.u32 %v4594, 4294901760
        %4852 = vmatmul.mubr.f32.gmra.mxu0 %v4851
        %v4853 = vpop.f32.mrf.mxu0
        %v4854 = vadd.f32 %v4732, %v4853
        %v4855 = vpop.f32.mrf.mxu0
        %4856 = vmatprep.mubr.f32.mxu0 0.0
        %v4857 = vand.u32 %v4597, 4294901760
        %4858 = vmatmul.mubr.f32.gmra.mxu0 %v4857
        %v4859 = vpop.f32.mrf.mxu0
        %v4860 = vadd.f32 %v4742, %v4859
        %v4861 = vpop.f32.mrf.mxu0
        %4862 = vdwg.mxu0
        %4863 = vmatprep.subr.mxu0 0.0
        %4864 = vmatpush1.msra.mxu0 0.0
        %4865 = vmatprep.subr.mxu0 0.0
        %4866 = vmatpush1.msra.mxu0 0.0
        %4867 = vmatprep.subr.mxu0 0.0
        %4868 = vmatpush1.msra.mxu0 0.0
        %4869 = vmatprep.subr.mxu0 0.0
        %4870 = vmatpush1.msra.mxu0 0.0
        %4871 = vmatprep.subr.mxu0 0.0
        %4872 = vmatpush1.msra.mxu0 0.0
        %4873 = vmatprep.subr.mxu0 0.0
        %4874 = vmatpush1.msra.mxu0 0.0
        %4875 = vmatprep.subr.mxu0 0.0
        %4876 = vmatpush1.msra.mxu0 0.0
        %4877 = vmatprep.subr.mxu0 0.0
        %4878 = vmatpush1.msra.mxu0 0.0
        %4879 = vmatprep.subr.mxu0 0.0
        %4880 = vmatpush1.msra.mxu0 0.0
        %4881 = vmatprep.subr.mxu0 0.0
        %4882 = vmatpush1.msra.mxu0 0.0
        %4883 = vmatprep.subr.mxu0 0.0
        %4884 = vmatpush1.msra.mxu0 0.0
        %4885 = vmatprep.subr.mxu0 0.0
        %4886 = vmatpush1.msra.mxu0 0.0
        %4887 = vmatprep.subr.mxu0 0.0
        %4888 = vmatpush1.msra.mxu0 0.0
        %4889 = vmatprep.subr.mxu0 0.0
        %4890 = vmatpush1.msra.mxu0 0.0
        %4891 = vmatprep.subr.mxu0 0.0
        %4892 = vmatpush1.msra.mxu0 0.0
        %4893 = vmatprep.subr.mxu0 0.0
        %v4894 = vand.u32 %v4573, 4294901760
        %v4895 = vsub.f32 %v4573, %v4894
        %4896 = vmatpush1.msra.mxu0 %v4895
        %4897 = vmatprep.subr.mxu0 0.0
        %4898 = vmatpush2.msra.mxu0 0.0
        %4899 = vmatprep.subr.mxu0 0.0
        %4900 = vmatpush2.msra.mxu0 0.0
        %4901 = vmatprep.subr.mxu0 0.0
        %4902 = vmatpush2.msra.mxu0 0.0
        %4903 = vmatprep.subr.mxu0 0.0
        %4904 = vmatpush2.msra.mxu0 0.0
        %4905 = vmatprep.subr.mxu0 0.0
        %4906 = vmatpush2.msra.mxu0 0.0
        %4907 = vmatprep.subr.mxu0 0.0
        %4908 = vmatpush2.msra.mxu0 0.0
        %4909 = vmatprep.subr.mxu0 0.0
        %4910 = vmatpush2.msra.mxu0 0.0
        %4911 = vmatprep.subr.mxu0 0.0
        %4912 = vmatpush2.msra.mxu0 0.0
        %4913 = vmatprep.subr.mxu0 0.0
        %4914 = vmatpush2.msra.mxu0 0.0
        %4915 = vmatprep.subr.mxu0 0.0
        %4916 = vmatpush2.msra.mxu0 0.0
        %4917 = vmatprep.subr.mxu0 0.0
        %4918 = vmatpush2.msra.mxu0 0.0
        %4919 = vmatprep.subr.mxu0 0.0
        %4920 = vmatpush2.msra.mxu0 0.0
        %4921 = vmatprep.subr.mxu0 0.0
        %4922 = vmatpush2.msra.mxu0 0.0
        %4923 = vmatprep.subr.mxu0 0.0
        %4924 = vmatpush2.msra.mxu0 0.0
        %4925 = vmatprep.subr.mxu0 0.0
        %4926 = vmatpush2.msra.mxu0 0.0
        %4927 = vmatprep.subr.mxu0 0.0
        %4928 = vmatpush2.msra.mxu0 0.0
        %4929 = vmatprep.mubr.f32.mxu0 0.0
        %v4930 = vand.u32 %v4576, 4294901760
        %v4931 = vsub.f32 %v4576, %v4930
        %4932 = vmatmul.mubr.f32.gmra.mxu0 %v4931
        %v4933 = vpop.f32.mrf.mxu0
        %v4934 = vadd.f32 %v4818, %v4933
        %v4935 = vpop.f32.mrf.mxu0
        %4936 = vmatprep.mubr.f32.mxu0 0.0
        %v4937 = vand.u32 %v4579, 4294901760
        %v4938 = vsub.f32 %v4579, %v4937
        %4939 = vmatmul.mubr.f32.gmra.mxu0 %v4938
        %v4940 = vpop.f32.mrf.mxu0
        %v4941 = vadd.f32 %v4824, %v4940
        %v4942 = vpop.f32.mrf.mxu0
        %4943 = vmatprep.mubr.f32.mxu0 0.0
        %v4944 = vand.u32 %v4582, 4294901760
        %v4945 = vsub.f32 %v4582, %v4944
        %4946 = vmatmul.mubr.f32.gmra.mxu0 %v4945
        %v4947 = vpop.f32.mrf.mxu0
        %v4948 = vadd.f32 %v4830, %v4947
        %v4949 = vpop.f32.mrf.mxu0
        %4950 = vmatprep.mubr.f32.mxu0 0.0
        %v4951 = vand.u32 %v4585, 4294901760
        %v4952 = vsub.f32 %v4585, %v4951
        %4953 = vmatmul.mubr.f32.gmra.mxu0 %v4952
        %v4954 = vpop.f32.mrf.mxu0
        %v4955 = vadd.f32 %v4836, %v4954
        %v4956 = vpop.f32.mrf.mxu0
        %4957 = vmatprep.mubr.f32.mxu0 0.0
        %v4958 = vand.u32 %v4588, 4294901760
        %v4959 = vsub.f32 %v4588, %v4958
        %4960 = vmatmul.mubr.f32.gmra.mxu0 %v4959
        %v4961 = vpop.f32.mrf.mxu0
        %v4962 = vadd.f32 %v4842, %v4961
        %v4963 = vpop.f32.mrf.mxu0
        %4964 = vmatprep.mubr.f32.mxu0 0.0
        %v4965 = vand.u32 %v4591, 4294901760
        %v4966 = vsub.f32 %v4591, %v4965
        %4967 = vmatmul.mubr.f32.gmra.mxu0 %v4966
        %v4968 = vpop.f32.mrf.mxu0
        %v4969 = vadd.f32 %v4848, %v4968
        %v4970 = vpop.f32.mrf.mxu0
        %4971 = vmatprep.mubr.f32.mxu0 0.0
        %v4972 = vand.u32 %v4594, 4294901760
        %v4973 = vsub.f32 %v4594, %v4972
        %4974 = vmatmul.mubr.f32.gmra.mxu0 %v4973
        %v4975 = vpop.f32.mrf.mxu0
        %v4976 = vadd.f32 %v4854, %v4975
        %v4977 = vpop.f32.mrf.mxu0
        %4978 = vmatprep.mubr.f32.mxu0 0.0
        %v4979 = vand.u32 %v4597, 4294901760
        %v4980 = vsub.f32 %v4597, %v4979
        %4981 = vmatmul.mubr.f32.gmra.mxu0 %v4980
        %v4982 = vpop.f32.mrf.mxu0
        %v4983 = vadd.f32 %v4860, %v4982
        %v4984 = vpop.f32.mrf.mxu0
        %4985 = vdwg.mxu0
        %4986 = vmatprep.subr.mxu0 0.0
        %4987 = vmatpush1.msra.mxu0 0.0
        %4988 = vmatprep.subr.mxu0 0.0
        %4989 = vmatpush1.msra.mxu0 0.0
        %4990 = vmatprep.subr.mxu0 0.0
        %4991 = vmatpush1.msra.mxu0 0.0
        %4992 = vmatprep.subr.mxu0 0.0
        %4993 = vmatpush1.msra.mxu0 0.0
        %4994 = vmatprep.subr.mxu0 0.0
        %4995 = vmatpush1.msra.mxu0 0.0
        %4996 = vmatprep.subr.mxu0 0.0
        %4997 = vmatpush1.msra.mxu0 0.0
        %4998 = vmatprep.subr.mxu0 0.0
        %4999 = vmatpush1.msra.mxu0 0.0
        %5000 = vmatprep.subr.mxu0 0.0
        %5001 = vmatpush1.msra.mxu0 0.0
        %5002 = vmatprep.subr.mxu0 0.0
        %5003 = vmatpush1.msra.mxu0 0.0
        %5004 = vmatprep.subr.mxu0 0.0
        %5005 = vmatpush1.msra.mxu0 0.0
        %5006 = vmatprep.subr.mxu0 0.0
        %5007 = vmatpush1.msra.mxu0 0.0
        %5008 = vmatprep.subr.mxu0 0.0
        %5009 = vmatpush1.msra.mxu0 0.0
        %5010 = vmatprep.subr.mxu0 0.0
        %5011 = vmatpush1.msra.mxu0 0.0
        %5012 = vmatprep.subr.mxu0 0.0
        %5013 = vmatpush1.msra.mxu0 0.0
        %5014 = vmatprep.subr.mxu0 0.0
        %5015 = vmatpush1.msra.mxu0 0.0
        %5016 = vmatprep.subr.mxu0 0.0
        %v5017 = vand.u32 %v4573, 4294901760
        %5018 = vmatpush1.msra.mxu0 %v5017
        %5019 = vmatprep.subr.mxu0 0.0
        %5020 = vmatpush2.msra.mxu0 0.0
        %5021 = vmatprep.subr.mxu0 0.0
        %5022 = vmatpush2.msra.mxu0 0.0
        %5023 = vmatprep.subr.mxu0 0.0
        %5024 = vmatpush2.msra.mxu0 0.0
        %5025 = vmatprep.subr.mxu0 0.0
        %5026 = vmatpush2.msra.mxu0 0.0
        %5027 = vmatprep.subr.mxu0 0.0
        %5028 = vmatpush2.msra.mxu0 0.0
        %5029 = vmatprep.subr.mxu0 0.0
        %5030 = vmatpush2.msra.mxu0 0.0
        %5031 = vmatprep.subr.mxu0 0.0
        %5032 = vmatpush2.msra.mxu0 0.0
        %5033 = vmatprep.subr.mxu0 0.0
        %5034 = vmatpush2.msra.mxu0 0.0
        %5035 = vmatprep.subr.mxu0 0.0
        %5036 = vmatpush2.msra.mxu0 0.0
        %5037 = vmatprep.subr.mxu0 0.0
        %5038 = vmatpush2.msra.mxu0 0.0
        %5039 = vmatprep.subr.mxu0 0.0
        %5040 = vmatpush2.msra.mxu0 0.0
        %5041 = vmatprep.subr.mxu0 0.0
        %5042 = vmatpush2.msra.mxu0 0.0
        %5043 = vmatprep.subr.mxu0 0.0
        %5044 = vmatpush2.msra.mxu0 0.0
        %5045 = vmatprep.subr.mxu0 0.0
        %5046 = vmatpush2.msra.mxu0 0.0
        %5047 = vmatprep.subr.mxu0 0.0
        %5048 = vmatpush2.msra.mxu0 0.0
        %5049 = vmatprep.subr.mxu0 0.0
        %5050 = vmatpush2.msra.mxu0 0.0
        %5051 = vmatprep.mubr.f32.mxu0 0.0
        %v5052 = vand.u32 %v4576, 4294901760
        %v5053 = vsub.f32 %v4576, %v5052
        %v5054 = vand.u32 %v5053, 4294901760
        %5055 = vmatmul.mubr.f32.gmra.mxu0 %v5054
        %v5056 = vpop.f32.mrf.mxu0
        %v5057 = vadd.f32 %v4934, %v5056
        %v5058 = vpop.f32.mrf.mxu0
        %5059 = vmatprep.mubr.f32.mxu0 0.0
        %v5060 = vand.u32 %v4579, 4294901760
        %v5061 = vsub.f32 %v4579, %v5060
        %v5062 = vand.u32 %v5061, 4294901760
        %5063 = vmatmul.mubr.f32.gmra.mxu0 %v5062
        %v5064 = vpop.f32.mrf.mxu0
        %v5065 = vadd.f32 %v4941, %v5064
        %v5066 = vpop.f32.mrf.mxu0
        %5067 = vmatprep.mubr.f32.mxu0 0.0
        %v5068 = vand.u32 %v4582, 4294901760
        %v5069 = vsub.f32 %v4582, %v5068
        %v5070 = vand.u32 %v5069, 4294901760
        %5071 = vmatmul.mubr.f32.gmra.mxu0 %v5070
        %v5072 = vpop.f32.mrf.mxu0
        %v5073 = vadd.f32 %v4948, %v5072
        %v5074 = vpop.f32.mrf.mxu0
        %5075 = vmatprep.mubr.f32.mxu0 0.0
        %v5076 = vand.u32 %v4585, 4294901760
        %v5077 = vsub.f32 %v4585, %v5076
        %v5078 = vand.u32 %v5077, 4294901760
        %5079 = vmatmul.mubr.f32.gmra.mxu0 %v5078
        %v5080 = vpop.f32.mrf.mxu0
        %v5081 = vadd.f32 %v4955, %v5080
        %v5082 = vpop.f32.mrf.mxu0
        %5083 = vmatprep.mubr.f32.mxu0 0.0
        %v5084 = vand.u32 %v4588, 4294901760
        %v5085 = vsub.f32 %v4588, %v5084
        %v5086 = vand.u32 %v5085, 4294901760
        %5087 = vmatmul.mubr.f32.gmra.mxu0 %v5086
        %v5088 = vpop.f32.mrf.mxu0
        %v5089 = vadd.f32 %v4962, %v5088
        %v5090 = vpop.f32.mrf.mxu0
        %5091 = vmatprep.mubr.f32.mxu0 0.0
        %v5092 = vand.u32 %v4591, 4294901760
        %v5093 = vsub.f32 %v4591, %v5092
        %v5094 = vand.u32 %v5093, 4294901760
        %5095 = vmatmul.mubr.f32.gmra.mxu0 %v5094
        %v5096 = vpop.f32.mrf.mxu0
        %v5097 = vadd.f32 %v4969, %v5096
        %v5098 = vpop.f32.mrf.mxu0
        %5099 = vmatprep.mubr.f32.mxu0 0.0
        %v5100 = vand.u32 %v4594, 4294901760
        %v5101 = vsub.f32 %v4594, %v5100
        %v5102 = vand.u32 %v5101, 4294901760
        %5103 = vmatmul.mubr.f32.gmra.mxu0 %v5102
        %v5104 = vpop.f32.mrf.mxu0
        %v5105 = vadd.f32 %v4976, %v5104
        %v5106 = vpop.f32.mrf.mxu0
        %5107 = vmatprep.mubr.f32.mxu0 0.0
        %v5108 = vand.u32 %v4597, 4294901760
        %v5109 = vsub.f32 %v4597, %v5108
        %v5110 = vand.u32 %v5109, 4294901760
        %5111 = vmatmul.mubr.f32.gmra.mxu0 %v5110
        %v5112 = vpop.f32.mrf.mxu0
        %v5113 = vadd.f32 %v4983, %v5112
        %v5114 = vpop.f32.mrf.mxu0
        %5115 = vdwg.mxu0
        %5116 = vmatprep.subr.mxu0 0.0
        %5117 = vmatpush1.msra.mxu0 0.0
        %5118 = vmatprep.subr.mxu0 0.0
        %5119 = vmatpush1.msra.mxu0 0.0
        %5120 = vmatprep.subr.mxu0 0.0
        %5121 = vmatpush1.msra.mxu0 0.0
        %5122 = vmatprep.subr.mxu0 0.0
        %5123 = vmatpush1.msra.mxu0 0.0
        %5124 = vmatprep.subr.mxu0 0.0
        %5125 = vmatpush1.msra.mxu0 0.0
        %5126 = vmatprep.subr.mxu0 0.0
        %5127 = vmatpush1.msra.mxu0 0.0
        %5128 = vmatprep.subr.mxu0 0.0
        %5129 = vmatpush1.msra.mxu0 0.0
        %5130 = vmatprep.subr.mxu0 0.0
        %5131 = vmatpush1.msra.mxu0 0.0
        %5132 = vmatprep.subr.mxu0 0.0
        %5133 = vmatpush1.msra.mxu0 0.0
        %5134 = vmatprep.subr.mxu0 0.0
        %5135 = vmatpush1.msra.mxu0 0.0
        %5136 = vmatprep.subr.mxu0 0.0
        %5137 = vmatpush1.msra.mxu0 0.0
        %5138 = vmatprep.subr.mxu0 0.0
        %5139 = vmatpush1.msra.mxu0 0.0
        %5140 = vmatprep.subr.mxu0 0.0
        %5141 = vmatpush1.msra.mxu0 0.0
        %5142 = vmatprep.subr.mxu0 0.0
        %5143 = vmatpush1.msra.mxu0 0.0
        %5144 = vmatprep.subr.mxu0 0.0
        %5145 = vmatpush1.msra.mxu0 0.0
        %5146 = vmatprep.subr.mxu0 0.0
        %v5147 = vand.u32 %v4573, 4294901760
        %v5148 = vsub.f32 %v4573, %v5147
        %v5149 = vand.u32 %v5148, 4294901760
        %5150 = vmatpush1.msra.mxu0 %v5149
        %5151 = vmatprep.subr.mxu0 0.0
        %5152 = vmatpush2.msra.mxu0 0.0
        %5153 = vmatprep.subr.mxu0 0.0
        %5154 = vmatpush2.msra.mxu0 0.0
        %5155 = vmatprep.subr.mxu0 0.0
        %5156 = vmatpush2.msra.mxu0 0.0
        %5157 = vmatprep.subr.mxu0 0.0
        %5158 = vmatpush2.msra.mxu0 0.0
        %5159 = vmatprep.subr.mxu0 0.0
        %5160 = vmatpush2.msra.mxu0 0.0
        %5161 = vmatprep.subr.mxu0 0.0
        %5162 = vmatpush2.msra.mxu0 0.0
        %5163 = vmatprep.subr.mxu0 0.0
        %5164 = vmatpush2.msra.mxu0 0.0
        %5165 = vmatprep.subr.mxu0 0.0
        %5166 = vmatpush2.msra.mxu0 0.0
        %5167 = vmatprep.subr.mxu0 0.0
        %5168 = vmatpush2.msra.mxu0 0.0
        %5169 = vmatprep.subr.mxu0 0.0
        %5170 = vmatpush2.msra.mxu0 0.0
        %5171 = vmatprep.subr.mxu0 0.0
        %5172 = vmatpush2.msra.mxu0 0.0
        %5173 = vmatprep.subr.mxu0 0.0
        %5174 = vmatpush2.msra.mxu0 0.0
        %5175 = vmatprep.subr.mxu0 0.0
        %5176 = vmatpush2.msra.mxu0 0.0
        %5177 = vmatprep.subr.mxu0 0.0
        %5178 = vmatpush2.msra.mxu0 0.0
        %5179 = vmatprep.subr.mxu0 0.0
        %5180 = vmatpush2.msra.mxu0 0.0
        %5181 = vmatprep.subr.mxu0 0.0
        %5182 = vmatpush2.msra.mxu0 0.0
        %5183 = vmatprep.mubr.f32.mxu0 0.0
        %v5184 = vand.u32 %v4576, 4294901760
        %5185 = vmatmul.mubr.f32.gmra.mxu0 %v5184
        %v5186 = vpop.f32.mrf.mxu0
        %v5187 = vadd.f32 %v5057, %v5186
        %v5188 = vpop.f32.mrf.mxu0
        %5189 = vmatprep.mubr.f32.mxu0 0.0
        %v5190 = vand.u32 %v4579, 4294901760
        %5191 = vmatmul.mubr.f32.gmra.mxu0 %v5190
        %v5192 = vpop.f32.mrf.mxu0
        %v5193 = vadd.f32 %v5065, %v5192
        %v5194 = vpop.f32.mrf.mxu0
        %5195 = vmatprep.mubr.f32.mxu0 0.0
        %v5196 = vand.u32 %v4582, 4294901760
        %5197 = vmatmul.mubr.f32.gmra.mxu0 %v5196
        %v5198 = vpop.f32.mrf.mxu0
        %v5199 = vadd.f32 %v5073, %v5198
        %v5200 = vpop.f32.mrf.mxu0
        %5201 = vmatprep.mubr.f32.mxu0 0.0
        %v5202 = vand.u32 %v4585, 4294901760
        %5203 = vmatmul.mubr.f32.gmra.mxu0 %v5202
        %v5204 = vpop.f32.mrf.mxu0
        %v5205 = vadd.f32 %v5081, %v5204
        %v5206 = vpop.f32.mrf.mxu0
        %5207 = vmatprep.mubr.f32.mxu0 0.0
        %v5208 = vand.u32 %v4588, 4294901760
        %5209 = vmatmul.mubr.f32.gmra.mxu0 %v5208
        %v5210 = vpop.f32.mrf.mxu0
        %v5211 = vadd.f32 %v5089, %v5210
        %v5212 = vpop.f32.mrf.mxu0
        %5213 = vmatprep.mubr.f32.mxu0 0.0
        %v5214 = vand.u32 %v4591, 4294901760
        %5215 = vmatmul.mubr.f32.gmra.mxu0 %v5214
        %v5216 = vpop.f32.mrf.mxu0
        %v5217 = vadd.f32 %v5097, %v5216
        %v5218 = vpop.f32.mrf.mxu0
        %5219 = vmatprep.mubr.f32.mxu0 0.0
        %v5220 = vand.u32 %v4594, 4294901760
        %5221 = vmatmul.mubr.f32.gmra.mxu0 %v5220
        %v5222 = vpop.f32.mrf.mxu0
        %v5223 = vadd.f32 %v5105, %v5222
        %v5224 = vpop.f32.mrf.mxu0
        %5225 = vmatprep.mubr.f32.mxu0 0.0
        %v5226 = vand.u32 %v4597, 4294901760
        %5227 = vmatmul.mubr.f32.gmra.mxu0 %v5226
        %v5228 = vpop.f32.mrf.mxu0
        %v5229 = vadd.f32 %v5113, %v5228
        %v5230 = vpop.f32.mrf.mxu0
        %5231 = vdwg.mxu0
        %5232 = vmatprep.subr.mxu0 0.0
        %5233 = vmatpush1.msra.mxu0 0.0
        %5234 = vmatprep.subr.mxu0 0.0
        %5235 = vmatpush1.msra.mxu0 0.0
        %5236 = vmatprep.subr.mxu0 0.0
        %5237 = vmatpush1.msra.mxu0 0.0
        %5238 = vmatprep.subr.mxu0 0.0
        %5239 = vmatpush1.msra.mxu0 0.0
        %5240 = vmatprep.subr.mxu0 0.0
        %5241 = vmatpush1.msra.mxu0 0.0
        %5242 = vmatprep.subr.mxu0 0.0
        %5243 = vmatpush1.msra.mxu0 0.0
        %5244 = vmatprep.subr.mxu0 0.0
        %5245 = vmatpush1.msra.mxu0 0.0
        %5246 = vmatprep.subr.mxu0 0.0
        %5247 = vmatpush1.msra.mxu0 0.0
        %5248 = vmatprep.subr.mxu0 0.0
        %5249 = vmatpush1.msra.mxu0 0.0
        %5250 = vmatprep.subr.mxu0 0.0
        %5251 = vmatpush1.msra.mxu0 0.0
        %5252 = vmatprep.subr.mxu0 0.0
        %5253 = vmatpush1.msra.mxu0 0.0
        %5254 = vmatprep.subr.mxu0 0.0
        %5255 = vmatpush1.msra.mxu0 0.0
        %5256 = vmatprep.subr.mxu0 0.0
        %5257 = vmatpush1.msra.mxu0 0.0
        %5258 = vmatprep.subr.mxu0 0.0
        %5259 = vmatpush1.msra.mxu0 0.0
        %5260 = vmatprep.subr.mxu0 0.0
        %5261 = vmatpush1.msra.mxu0 0.0
        %5262 = vmatprep.subr.mxu0 0.0
        %v5263 = vand.u32 %v4573, 4294901760
        %5264 = vmatpush1.msra.mxu0 %v5263
        %5265 = vmatprep.subr.mxu0 0.0
        %5266 = vmatpush2.msra.mxu0 0.0
        %5267 = vmatprep.subr.mxu0 0.0
        %5268 = vmatpush2.msra.mxu0 0.0
        %5269 = vmatprep.subr.mxu0 0.0
        %5270 = vmatpush2.msra.mxu0 0.0
        %5271 = vmatprep.subr.mxu0 0.0
        %5272 = vmatpush2.msra.mxu0 0.0
        %5273 = vmatprep.subr.mxu0 0.0
        %5274 = vmatpush2.msra.mxu0 0.0
        %5275 = vmatprep.subr.mxu0 0.0
        %5276 = vmatpush2.msra.mxu0 0.0
        %5277 = vmatprep.subr.mxu0 0.0
        %5278 = vmatpush2.msra.mxu0 0.0
        %5279 = vmatprep.subr.mxu0 0.0
        %5280 = vmatpush2.msra.mxu0 0.0
        %5281 = vmatprep.subr.mxu0 0.0
        %5282 = vmatpush2.msra.mxu0 0.0
        %5283 = vmatprep.subr.mxu0 0.0
        %5284 = vmatpush2.msra.mxu0 0.0
        %5285 = vmatprep.subr.mxu0 0.0
        %5286 = vmatpush2.msra.mxu0 0.0
        %5287 = vmatprep.subr.mxu0 0.0
        %5288 = vmatpush2.msra.mxu0 0.0
        %5289 = vmatprep.subr.mxu0 0.0
        %5290 = vmatpush2.msra.mxu0 0.0
        %5291 = vmatprep.subr.mxu0 0.0
        %5292 = vmatpush2.msra.mxu0 0.0
        %5293 = vmatprep.subr.mxu0 0.0
        %5294 = vmatpush2.msra.mxu0 0.0
        %5295 = vmatprep.subr.mxu0 0.0
        %5296 = vmatpush2.msra.mxu0 0.0
        %5297 = vmatprep.mubr.f32.mxu0 0.0
        %v5298 = vand.u32 %v4576, 4294901760
        %5299 = vmatmul.mubr.f32.gmra.mxu0 %v5298
        %v5300 = vpop.f32.mrf.mxu0
        %v5301 = vadd.f32 %v5187, %v5300
        %v5302 = vpop.f32.mrf.mxu0
        %5303 = vmatprep.mubr.f32.mxu0 0.0
        %v5304 = vand.u32 %v4579, 4294901760
        %5305 = vmatmul.mubr.f32.gmra.mxu0 %v5304
        %v5306 = vpop.f32.mrf.mxu0
        %v5307 = vadd.f32 %v5193, %v5306
        %v5308 = vpop.f32.mrf.mxu0
        %5309 = vmatprep.mubr.f32.mxu0 0.0
        %v5310 = vand.u32 %v4582, 4294901760
        %5311 = vmatmul.mubr.f32.gmra.mxu0 %v5310
        %v5312 = vpop.f32.mrf.mxu0
        %v5313 = vadd.f32 %v5199, %v5312
        %v5314 = vpop.f32.mrf.mxu0
        %5315 = vmatprep.mubr.f32.mxu0 0.0
        %v5316 = vand.u32 %v4585, 4294901760
        %5317 = vmatmul.mubr.f32.gmra.mxu0 %v5316
        %v5318 = vpop.f32.mrf.mxu0
        %v5319 = vadd.f32 %v5205, %v5318
        %v5320 = vpop.f32.mrf.mxu0
        %5321 = vmatprep.mubr.f32.mxu0 0.0
        %v5322 = vand.u32 %v4588, 4294901760
        %5323 = vmatmul.mubr.f32.gmra.mxu0 %v5322
        %v5324 = vpop.f32.mrf.mxu0
        %v5325 = vadd.f32 %v5211, %v5324
        %v5326 = vpop.f32.mrf.mxu0
        %5327 = vmatprep.mubr.f32.mxu0 0.0
        %v5328 = vand.u32 %v4591, 4294901760
        %5329 = vmatmul.mubr.f32.gmra.mxu0 %v5328
        %v5330 = vpop.f32.mrf.mxu0
        %v5331 = vadd.f32 %v5217, %v5330
        %v5332 = vpop.f32.mrf.mxu0
        %5333 = vmatprep.mubr.f32.mxu0 0.0
        %v5334 = vand.u32 %v4594, 4294901760
        %5335 = vmatmul.mubr.f32.gmra.mxu0 %v5334
        %v5336 = vpop.f32.mrf.mxu0
        %v5337 = vadd.f32 %v5223, %v5336
        %v5338 = vpop.f32.mrf.mxu0
        %5339 = vmatprep.mubr.f32.mxu0 0.0
        %v5340 = vand.u32 %v4597, 4294901760
        %5341 = vmatmul.mubr.f32.gmra.mxu0 %v5340
        %v5342 = vpop.f32.mrf.mxu0
        %v5343 = vadd.f32 %v5229, %v5342
        %v5344 = vpop.f32.mrf.mxu0
        %5345 = vdwg.mxu0
        %5354 = vrot.lane.b32.xlu0 %v5301, 16
        %v5355 = vpop.permute.xlu0 %5354
        %5356 = vrot.lane.b32.xlu0 %v5307, 16
        %v5357 = vpop.permute.xlu0 %5356
        %5358 = vrot.lane.b32.xlu0 %v5313, 16
        %v5359 = vpop.permute.xlu0 %5358
        %5360 = vrot.lane.b32.xlu0 %v5319, 16
        %v5361 = vpop.permute.xlu0 %5360
        %5362 = vrot.lane.b32.xlu0 %v5325, 16
        %v5363 = vpop.permute.xlu0 %5362
        %5364 = vrot.lane.b32.xlu0 %v5331, 16
        %v5365 = vpop.permute.xlu0 %5364
        %5366 = vrot.lane.b32.xlu0 %v5337, 16
        %v5367 = vpop.permute.xlu0 %5366
        %5368 = vrot.lane.b32.xlu0 %v5343, 16
        %v5369 = vpop.permute.xlu0 %5368
        %v5378 = vadd.f32 %v4424, %v5355
        %v5379 = vadd.f32 %v4430, %v5357
        %v5380 = vadd.f32 %v4436, %v5359
        %v5381 = vadd.f32 %v4442, %v5361
        %v5382 = vadd.f32 %v4448, %v5363
        %v5383 = vadd.f32 %v4454, %v5365
        %v5384 = vadd.f32 %v4460, %v5367
        %v5385 = vadd.f32 %v4466, %v5369
        %v5386 = vlaneseq
        %v5387 = vshrl.u32 %v5386, 7
        %v5388 = vsub.s32 0, %v5387
        %v5389 = vrot.slane %v4574, %v5388
        %5391 = vrot.lane.b32.xlu0 %v5389, 16
        %v5392 = vpop.permute.xlu0 %5391
        %v5394 = vadd.f32 %v5378, %v5392
        %v5395 = vadd.f32 %v5379, %v5392
        %v5396 = vadd.f32 %v5380, %v5392
        %v5397 = vadd.f32 %v5381, %v5392
        %v5398 = vadd.f32 %v5382, %v5392
        %v5399 = vadd.f32 %v5383, %v5392
        %v5400 = vadd.f32 %v5384, %v5392
        %v5401 = vadd.f32 %v5385, %v5392
        %v5402 = vmax.f32 %v5394, 0.0
        %v5403 = vmax.f32 %v5395, 0.0
        %v5404 = vmax.f32 %v5396, 0.0
        %v5405 = vmax.f32 %v5397, 0.0
        %v5406 = vmax.f32 %v5398, 0.0
        %v5407 = vmax.f32 %v5399, 0.0
        %v5408 = vmax.f32 %v5400, 0.0
        %v5409 = vmax.f32 %v5401, 0.0
        %v5410 = vld [vmem:[#allocation2 + $0x108] sm:$0xff]
        %v5411 = vld [vmem:[#allocation2 + $0x110] sm:$0xff]
        %v5412 = vld [vmem:[#allocation2 + $0x118] sm:$0xff]
        %v5413 = vld [vmem:[#allocation2 + $0x120] sm:$0xff]
        %v5414 = vld [vmem:[#allocation2 + $0x128] sm:$0x1]
        %v5415 = vlaneseq
        %v5416 = vshrl.u32 %v5415, 7
        %v5417 = vsub.s32 0, %v5416
        %v5418 = vrot.slane %v5414, %v5417
        %5427 = vrot.lane.b32.xlu0 %v5402, 112
        %v5428 = vpop.permute.xlu0 %5427
        %5429 = vrot.lane.b32.xlu0 %v5403, 112
        %v5430 = vpop.permute.xlu0 %5429
        %5431 = vrot.lane.b32.xlu0 %v5404, 112
        %v5432 = vpop.permute.xlu0 %5431
        %5433 = vrot.lane.b32.xlu0 %v5405, 112
        %v5434 = vpop.permute.xlu0 %5433
        %5435 = vrot.lane.b32.xlu0 %v5406, 112
        %v5436 = vpop.permute.xlu0 %5435
        %5437 = vrot.lane.b32.xlu0 %v5407, 112
        %v5438 = vpop.permute.xlu0 %5437
        %5439 = vrot.lane.b32.xlu0 %v5408, 112
        %v5440 = vpop.permute.xlu0 %5439
        %5441 = vrot.lane.b32.xlu0 %v5409, 112
        %v5442 = vpop.permute.xlu0 %5441
        %v5443 = vsel %vm677, %v5428, 0
        %v5445 = vsel %vm677, %v5430, 0
        %v5447 = vsel %vm677, %v5432, 0
        %v5449 = vsel %vm677, %v5434, 0
        %v5451 = vsel %vm677, %v5436, 0
        %v5453 = vsel %vm677, %v5438, 0
        %v5455 = vsel %vm677, %v5440, 0
        %v5457 = vsel %vm677, %v5442, 0
        %5459 = vmatprep.subr.mxu0 0.0
        %5460 = vmatpush1.msra.mxu0 0.0
        %5461 = vmatprep.subr.mxu0 0.0
        %5462 = vmatpush1.msra.mxu0 0.0
        %5463 = vmatprep.subr.mxu0 0.0
        %5464 = vmatpush1.msra.mxu0 0.0
        %5465 = vmatprep.subr.mxu0 0.0
        %5466 = vmatpush1.msra.mxu0 0.0
        %5467 = vmatprep.subr.mxu0 0.0
        %5468 = vmatpush1.msra.mxu0 0.0
        %5469 = vmatprep.subr.mxu0 0.0
        %5470 = vmatpush1.msra.mxu0 0.0
        %5471 = vmatprep.subr.mxu0 0.0
        %5472 = vmatpush1.msra.mxu0 0.0
        %5473 = vmatprep.subr.mxu0 0.0
        %5474 = vmatpush1.msra.mxu0 0.0
        %5475 = vmatprep.subr.mxu0 0.0
        %5476 = vmatpush1.msra.mxu0 0.0
        %5477 = vmatprep.subr.mxu0 0.0
        %5478 = vmatpush1.msra.mxu0 0.0
        %5479 = vmatprep.subr.mxu0 0.0
        %5480 = vmatpush1.msra.mxu0 0.0
        %5481 = vmatprep.subr.mxu0 0.0
        %5482 = vmatpush1.msra.mxu0 0.0
        %5483 = vmatprep.subr.mxu0 0.0
        %v5484 = vand.u32 %v5413, 4294901760
        %5485 = vmatpush1.msra.mxu0 %v5484
        %5486 = vmatprep.subr.mxu0 0.0
        %v5487 = vand.u32 %v5412, 4294901760
        %5488 = vmatpush1.msra.mxu0 %v5487
        %5489 = vmatprep.subr.mxu0 0.0
        %v5490 = vand.u32 %v5411, 4294901760
        %5491 = vmatpush1.msra.mxu0 %v5490
        %5492 = vmatprep.subr.mxu0 0.0
        %v5493 = vand.u32 %v5410, 4294901760
        %5494 = vmatpush1.msra.mxu0 %v5493
        %5495 = vmatprep.subr.mxu0 0.0
        %5496 = vmatpush2.msra.mxu0 0.0
        %5497 = vmatprep.subr.mxu0 0.0
        %5498 = vmatpush2.msra.mxu0 0.0
        %5499 = vmatprep.subr.mxu0 0.0
        %5500 = vmatpush2.msra.mxu0 0.0
        %5501 = vmatprep.subr.mxu0 0.0
        %5502 = vmatpush2.msra.mxu0 0.0
        %5503 = vmatprep.subr.mxu0 0.0
        %5504 = vmatpush2.msra.mxu0 0.0
        %5505 = vmatprep.subr.mxu0 0.0
        %5506 = vmatpush2.msra.mxu0 0.0
        %5507 = vmatprep.subr.mxu0 0.0
        %5508 = vmatpush2.msra.mxu0 0.0
        %5509 = vmatprep.subr.mxu0 0.0
        %5510 = vmatpush2.msra.mxu0 0.0
        %5511 = vmatprep.subr.mxu0 0.0
        %5512 = vmatpush2.msra.mxu0 0.0
        %5513 = vmatprep.subr.mxu0 0.0
        %5514 = vmatpush2.msra.mxu0 0.0
        %5515 = vmatprep.subr.mxu0 0.0
        %5516 = vmatpush2.msra.mxu0 0.0
        %5517 = vmatprep.subr.mxu0 0.0
        %5518 = vmatpush2.msra.mxu0 0.0
        %5519 = vmatprep.subr.mxu0 0.0
        %5520 = vmatpush2.msra.mxu0 0.0
        %5521 = vmatprep.subr.mxu0 0.0
        %5522 = vmatpush2.msra.mxu0 0.0
        %5523 = vmatprep.subr.mxu0 0.0
        %5524 = vmatpush2.msra.mxu0 0.0
        %5525 = vmatprep.subr.mxu0 0.0
        %5526 = vmatpush2.msra.mxu0 0.0
        %5527 = vmatprep.mubr.f32.mxu0 0.0
        %v5528 = vand.u32 %v5443, 4294901760
        %v5529 = vsub.f32 %v5443, %v5528
        %v5530 = vand.u32 %v5529, 4294901760
        %v5531 = vsub.f32 %v5529, %v5530
        %v5532 = vand.u32 %v5531, 4294901760
        %5533 = vmatmul.mubr.f32.gmra.mxu0 %v5532
        %v5534 = vpop.f32.mrf.mxu0
        %v5535 = vadd.f32 %v5418, %v5534
        %v5536 = vpop.f32.mrf.mxu0
        %5537 = vmatprep.mubr.f32.mxu0 0.0
        %v5538 = vand.u32 %v5445, 4294901760
        %v5539 = vsub.f32 %v5445, %v5538
        %v5540 = vand.u32 %v5539, 4294901760
        %v5541 = vsub.f32 %v5539, %v5540
        %v5542 = vand.u32 %v5541, 4294901760
        %5543 = vmatmul.mubr.f32.gmra.mxu0 %v5542
        %v5544 = vpop.f32.mrf.mxu0
        %v5545 = vadd.f32 %v5418, %v5544
        %v5546 = vpop.f32.mrf.mxu0
        %5547 = vmatprep.mubr.f32.mxu0 0.0
        %v5548 = vand.u32 %v5447, 4294901760
        %v5549 = vsub.f32 %v5447, %v5548
        %v5550 = vand.u32 %v5549, 4294901760
        %v5551 = vsub.f32 %v5549, %v5550
        %v5552 = vand.u32 %v5551, 4294901760
        %5553 = vmatmul.mubr.f32.gmra.mxu0 %v5552
        %v5554 = vpop.f32.mrf.mxu0
        %v5555 = vadd.f32 %v5418, %v5554
        %v5556 = vpop.f32.mrf.mxu0
        %5557 = vmatprep.mubr.f32.mxu0 0.0
        %v5558 = vand.u32 %v5449, 4294901760
        %v5559 = vsub.f32 %v5449, %v5558
        %v5560 = vand.u32 %v5559, 4294901760
        %v5561 = vsub.f32 %v5559, %v5560
        %v5562 = vand.u32 %v5561, 4294901760
        %5563 = vmatmul.mubr.f32.gmra.mxu0 %v5562
        %v5564 = vpop.f32.mrf.mxu0
        %v5565 = vadd.f32 %v5418, %v5564
        %v5566 = vpop.f32.mrf.mxu0
        %5567 = vmatprep.mubr.f32.mxu0 0.0
        %v5568 = vand.u32 %v5451, 4294901760
        %v5569 = vsub.f32 %v5451, %v5568
        %v5570 = vand.u32 %v5569, 4294901760
        %v5571 = vsub.f32 %v5569, %v5570
        %v5572 = vand.u32 %v5571, 4294901760
        %5573 = vmatmul.mubr.f32.gmra.mxu0 %v5572
        %v5574 = vpop.f32.mrf.mxu0
        %v5575 = vadd.f32 %v5418, %v5574
        %v5576 = vpop.f32.mrf.mxu0
        %5577 = vmatprep.mubr.f32.mxu0 0.0
        %v5578 = vand.u32 %v5453, 4294901760
        %v5579 = vsub.f32 %v5453, %v5578
        %v5580 = vand.u32 %v5579, 4294901760
        %v5581 = vsub.f32 %v5579, %v5580
        %v5582 = vand.u32 %v5581, 4294901760
        %5583 = vmatmul.mubr.f32.gmra.mxu0 %v5582
        %v5584 = vpop.f32.mrf.mxu0
        %v5585 = vadd.f32 %v5418, %v5584
        %v5586 = vpop.f32.mrf.mxu0
        %5587 = vmatprep.mubr.f32.mxu0 0.0
        %v5588 = vand.u32 %v5455, 4294901760
        %v5589 = vsub.f32 %v5455, %v5588
        %v5590 = vand.u32 %v5589, 4294901760
        %v5591 = vsub.f32 %v5589, %v5590
        %v5592 = vand.u32 %v5591, 4294901760
        %5593 = vmatmul.mubr.f32.gmra.mxu0 %v5592
        %v5594 = vpop.f32.mrf.mxu0
        %v5595 = vadd.f32 %v5418, %v5594
        %v5596 = vpop.f32.mrf.mxu0
        %5597 = vmatprep.mubr.f32.mxu0 0.0
        %v5598 = vand.u32 %v5457, 4294901760
        %v5599 = vsub.f32 %v5457, %v5598
        %v5600 = vand.u32 %v5599, 4294901760
        %v5601 = vsub.f32 %v5599, %v5600
        %v5602 = vand.u32 %v5601, 4294901760
        %5603 = vmatmul.mubr.f32.gmra.mxu0 %v5602
        %v5604 = vpop.f32.mrf.mxu0
        %v5605 = vadd.f32 %v5418, %v5604
        %v5606 = vpop.f32.mrf.mxu0
        %5607 = vdwg.mxu0
        %5608 = vmatprep.subr.mxu0 0.0
        %5609 = vmatpush1.msra.mxu0 0.0
        %5610 = vmatprep.subr.mxu0 0.0
        %5611 = vmatpush1.msra.mxu0 0.0
        %5612 = vmatprep.subr.mxu0 0.0
        %5613 = vmatpush1.msra.mxu0 0.0
        %5614 = vmatprep.subr.mxu0 0.0
        %5615 = vmatpush1.msra.mxu0 0.0
        %5616 = vmatprep.subr.mxu0 0.0
        %5617 = vmatpush1.msra.mxu0 0.0
        %5618 = vmatprep.subr.mxu0 0.0
        %5619 = vmatpush1.msra.mxu0 0.0
        %5620 = vmatprep.subr.mxu0 0.0
        %5621 = vmatpush1.msra.mxu0 0.0
        %5622 = vmatprep.subr.mxu0 0.0
        %5623 = vmatpush1.msra.mxu0 0.0
        %5624 = vmatprep.subr.mxu0 0.0
        %5625 = vmatpush1.msra.mxu0 0.0
        %5626 = vmatprep.subr.mxu0 0.0
        %5627 = vmatpush1.msra.mxu0 0.0
        %5628 = vmatprep.subr.mxu0 0.0
        %5629 = vmatpush1.msra.mxu0 0.0
        %5630 = vmatprep.subr.mxu0 0.0
        %5631 = vmatpush1.msra.mxu0 0.0
        %5632 = vmatprep.subr.mxu0 0.0
        %v5633 = vand.u32 %v5413, 4294901760
        %v5634 = vsub.f32 %v5413, %v5633
        %v5635 = vand.u32 %v5634, 4294901760
        %v5636 = vsub.f32 %v5634, %v5635
        %v5637 = vand.u32 %v5636, 4294901760
        %5638 = vmatpush1.msra.mxu0 %v5637
        %5639 = vmatprep.subr.mxu0 0.0
        %v5640 = vand.u32 %v5412, 4294901760
        %v5641 = vsub.f32 %v5412, %v5640
        %v5642 = vand.u32 %v5641, 4294901760
        %v5643 = vsub.f32 %v5641, %v5642
        %v5644 = vand.u32 %v5643, 4294901760
        %5645 = vmatpush1.msra.mxu0 %v5644
        %5646 = vmatprep.subr.mxu0 0.0
        %v5647 = vand.u32 %v5411, 4294901760
        %v5648 = vsub.f32 %v5411, %v5647
        %v5649 = vand.u32 %v5648, 4294901760
        %v5650 = vsub.f32 %v5648, %v5649
        %v5651 = vand.u32 %v5650, 4294901760
        %5652 = vmatpush1.msra.mxu0 %v5651
        %5653 = vmatprep.subr.mxu0 0.0
        %v5654 = vand.u32 %v5410, 4294901760
        %v5655 = vsub.f32 %v5410, %v5654
        %v5656 = vand.u32 %v5655, 4294901760
        %v5657 = vsub.f32 %v5655, %v5656
        %v5658 = vand.u32 %v5657, 4294901760
        %5659 = vmatpush1.msra.mxu0 %v5658
        %5660 = vmatprep.subr.mxu0 0.0
        %5661 = vmatpush2.msra.mxu0 0.0
        %5662 = vmatprep.subr.mxu0 0.0
        %5663 = vmatpush2.msra.mxu0 0.0
        %5664 = vmatprep.subr.mxu0 0.0
        %5665 = vmatpush2.msra.mxu0 0.0
        %5666 = vmatprep.subr.mxu0 0.0
        %5667 = vmatpush2.msra.mxu0 0.0
        %5668 = vmatprep.subr.mxu0 0.0
        %5669 = vmatpush2.msra.mxu0 0.0
        %5670 = vmatprep.subr.mxu0 0.0
        %5671 = vmatpush2.msra.mxu0 0.0
        %5672 = vmatprep.subr.mxu0 0.0
        %5673 = vmatpush2.msra.mxu0 0.0
        %5674 = vmatprep.subr.mxu0 0.0
        %5675 = vmatpush2.msra.mxu0 0.0
        %5676 = vmatprep.subr.mxu0 0.0
        %5677 = vmatpush2.msra.mxu0 0.0
        %5678 = vmatprep.subr.mxu0 0.0
        %5679 = vmatpush2.msra.mxu0 0.0
        %5680 = vmatprep.subr.mxu0 0.0
        %5681 = vmatpush2.msra.mxu0 0.0
        %5682 = vmatprep.subr.mxu0 0.0
        %5683 = vmatpush2.msra.mxu0 0.0
        %5684 = vmatprep.subr.mxu0 0.0
        %5685 = vmatpush2.msra.mxu0 0.0
        %5686 = vmatprep.subr.mxu0 0.0
        %5687 = vmatpush2.msra.mxu0 0.0
        %5688 = vmatprep.subr.mxu0 0.0
        %5689 = vmatpush2.msra.mxu0 0.0
        %5690 = vmatprep.subr.mxu0 0.0
        %5691 = vmatpush2.msra.mxu0 0.0
        %5692 = vmatprep.mubr.f32.mxu0 0.0
        %v5693 = vand.u32 %v5443, 4294901760
        %5694 = vmatmul.mubr.f32.gmra.mxu0 %v5693
        %v5695 = vpop.f32.mrf.mxu0
        %v5696 = vadd.f32 %v5535, %v5695
        %v5697 = vpop.f32.mrf.mxu0
        %5698 = vmatprep.mubr.f32.mxu0 0.0
        %v5699 = vand.u32 %v5445, 4294901760
        %5700 = vmatmul.mubr.f32.gmra.mxu0 %v5699
        %v5701 = vpop.f32.mrf.mxu0
        %v5702 = vadd.f32 %v5545, %v5701
        %v5703 = vpop.f32.mrf.mxu0
        %5704 = vmatprep.mubr.f32.mxu0 0.0
        %v5705 = vand.u32 %v5447, 4294901760
        %5706 = vmatmul.mubr.f32.gmra.mxu0 %v5705
        %v5707 = vpop.f32.mrf.mxu0
        %v5708 = vadd.f32 %v5555, %v5707
        %v5709 = vpop.f32.mrf.mxu0
        %5710 = vmatprep.mubr.f32.mxu0 0.0
        %v5711 = vand.u32 %v5449, 4294901760
        %5712 = vmatmul.mubr.f32.gmra.mxu0 %v5711
        %v5713 = vpop.f32.mrf.mxu0
        %v5714 = vadd.f32 %v5565, %v5713
        %v5715 = vpop.f32.mrf.mxu0
        %5716 = vmatprep.mubr.f32.mxu0 0.0
        %v5717 = vand.u32 %v5451, 4294901760
        %5718 = vmatmul.mubr.f32.gmra.mxu0 %v5717
        %v5719 = vpop.f32.mrf.mxu0
        %v5720 = vadd.f32 %v5575, %v5719
        %v5721 = vpop.f32.mrf.mxu0
        %5722 = vmatprep.mubr.f32.mxu0 0.0
        %v5723 = vand.u32 %v5453, 4294901760
        %5724 = vmatmul.mubr.f32.gmra.mxu0 %v5723
        %v5725 = vpop.f32.mrf.mxu0
        %v5726 = vadd.f32 %v5585, %v5725
        %v5727 = vpop.f32.mrf.mxu0
        %5728 = vmatprep.mubr.f32.mxu0 0.0
        %v5729 = vand.u32 %v5455, 4294901760
        %5730 = vmatmul.mubr.f32.gmra.mxu0 %v5729
        %v5731 = vpop.f32.mrf.mxu0
        %v5732 = vadd.f32 %v5595, %v5731
        %v5733 = vpop.f32.mrf.mxu0
        %5734 = vmatprep.mubr.f32.mxu0 0.0
        %v5735 = vand.u32 %v5457, 4294901760
        %5736 = vmatmul.mubr.f32.gmra.mxu0 %v5735
        %v5737 = vpop.f32.mrf.mxu0
        %v5738 = vadd.f32 %v5605, %v5737
        %v5739 = vpop.f32.mrf.mxu0
        %5740 = vdwg.mxu0
        %5741 = vmatprep.subr.mxu0 0.0
        %5742 = vmatpush1.msra.mxu0 0.0
        %5743 = vmatprep.subr.mxu0 0.0
        %5744 = vmatpush1.msra.mxu0 0.0
        %5745 = vmatprep.subr.mxu0 0.0
        %5746 = vmatpush1.msra.mxu0 0.0
        %5747 = vmatprep.subr.mxu0 0.0
        %5748 = vmatpush1.msra.mxu0 0.0
        %5749 = vmatprep.subr.mxu0 0.0
        %5750 = vmatpush1.msra.mxu0 0.0
        %5751 = vmatprep.subr.mxu0 0.0
        %5752 = vmatpush1.msra.mxu0 0.0
        %5753 = vmatprep.subr.mxu0 0.0
        %5754 = vmatpush1.msra.mxu0 0.0
        %5755 = vmatprep.subr.mxu0 0.0
        %5756 = vmatpush1.msra.mxu0 0.0
        %5757 = vmatprep.subr.mxu0 0.0
        %5758 = vmatpush1.msra.mxu0 0.0
        %5759 = vmatprep.subr.mxu0 0.0
        %5760 = vmatpush1.msra.mxu0 0.0
        %5761 = vmatprep.subr.mxu0 0.0
        %5762 = vmatpush1.msra.mxu0 0.0
        %5763 = vmatprep.subr.mxu0 0.0
        %5764 = vmatpush1.msra.mxu0 0.0
        %5765 = vmatprep.subr.mxu0 0.0
        %v5766 = vand.u32 %v5413, 4294901760
        %v5767 = vsub.f32 %v5413, %v5766
        %5768 = vmatpush1.msra.mxu0 %v5767
        %5769 = vmatprep.subr.mxu0 0.0
        %v5770 = vand.u32 %v5412, 4294901760
        %v5771 = vsub.f32 %v5412, %v5770
        %5772 = vmatpush1.msra.mxu0 %v5771
        %5773 = vmatprep.subr.mxu0 0.0
        %v5774 = vand.u32 %v5411, 4294901760
        %v5775 = vsub.f32 %v5411, %v5774
        %5776 = vmatpush1.msra.mxu0 %v5775
        %5777 = vmatprep.subr.mxu0 0.0
        %v5778 = vand.u32 %v5410, 4294901760
        %v5779 = vsub.f32 %v5410, %v5778
        %5780 = vmatpush1.msra.mxu0 %v5779
        %5781 = vmatprep.subr.mxu0 0.0
        %5782 = vmatpush2.msra.mxu0 0.0
        %5783 = vmatprep.subr.mxu0 0.0
        %5784 = vmatpush2.msra.mxu0 0.0
        %5785 = vmatprep.subr.mxu0 0.0
        %5786 = vmatpush2.msra.mxu0 0.0
        %5787 = vmatprep.subr.mxu0 0.0
        %5788 = vmatpush2.msra.mxu0 0.0
        %5789 = vmatprep.subr.mxu0 0.0
        %5790 = vmatpush2.msra.mxu0 0.0
        %5791 = vmatprep.subr.mxu0 0.0
        %5792 = vmatpush2.msra.mxu0 0.0
        %5793 = vmatprep.subr.mxu0 0.0
        %5794 = vmatpush2.msra.mxu0 0.0
        %5795 = vmatprep.subr.mxu0 0.0
        %5796 = vmatpush2.msra.mxu0 0.0
        %5797 = vmatprep.subr.mxu0 0.0
        %5798 = vmatpush2.msra.mxu0 0.0
        %5799 = vmatprep.subr.mxu0 0.0
        %5800 = vmatpush2.msra.mxu0 0.0
        %5801 = vmatprep.subr.mxu0 0.0
        %5802 = vmatpush2.msra.mxu0 0.0
        %5803 = vmatprep.subr.mxu0 0.0
        %5804 = vmatpush2.msra.mxu0 0.0
        %5805 = vmatprep.subr.mxu0 0.0
        %5806 = vmatpush2.msra.mxu0 0.0
        %5807 = vmatprep.subr.mxu0 0.0
        %5808 = vmatpush2.msra.mxu0 0.0
        %5809 = vmatprep.subr.mxu0 0.0
        %5810 = vmatpush2.msra.mxu0 0.0
        %5811 = vmatprep.subr.mxu0 0.0
        %5812 = vmatpush2.msra.mxu0 0.0
        %5813 = vmatprep.mubr.f32.mxu0 0.0
        %v5814 = vand.u32 %v5443, 4294901760
        %v5815 = vsub.f32 %v5443, %v5814
        %5816 = vmatmul.mubr.f32.gmra.mxu0 %v5815
        %v5817 = vpop.f32.mrf.mxu0
        %v5818 = vadd.f32 %v5696, %v5817
        %v5819 = vpop.f32.mrf.mxu0
        %5820 = vmatprep.mubr.f32.mxu0 0.0
        %v5821 = vand.u32 %v5445, 4294901760
        %v5822 = vsub.f32 %v5445, %v5821
        %5823 = vmatmul.mubr.f32.gmra.mxu0 %v5822
        %v5824 = vpop.f32.mrf.mxu0
        %v5825 = vadd.f32 %v5702, %v5824
        %v5826 = vpop.f32.mrf.mxu0
        %5827 = vmatprep.mubr.f32.mxu0 0.0
        %v5828 = vand.u32 %v5447, 4294901760
        %v5829 = vsub.f32 %v5447, %v5828
        %5830 = vmatmul.mubr.f32.gmra.mxu0 %v5829
        %v5831 = vpop.f32.mrf.mxu0
        %v5832 = vadd.f32 %v5708, %v5831
        %v5833 = vpop.f32.mrf.mxu0
        %5834 = vmatprep.mubr.f32.mxu0 0.0
        %v5835 = vand.u32 %v5449, 4294901760
        %v5836 = vsub.f32 %v5449, %v5835
        %5837 = vmatmul.mubr.f32.gmra.mxu0 %v5836
        %v5838 = vpop.f32.mrf.mxu0
        %v5839 = vadd.f32 %v5714, %v5838
        %v5840 = vpop.f32.mrf.mxu0
        %5841 = vmatprep.mubr.f32.mxu0 0.0
        %v5842 = vand.u32 %v5451, 4294901760
        %v5843 = vsub.f32 %v5451, %v5842
        %5844 = vmatmul.mubr.f32.gmra.mxu0 %v5843
        %v5845 = vpop.f32.mrf.mxu0
        %v5846 = vadd.f32 %v5720, %v5845
        %v5847 = vpop.f32.mrf.mxu0
        %5848 = vmatprep.mubr.f32.mxu0 0.0
        %v5849 = vand.u32 %v5453, 4294901760
        %v5850 = vsub.f32 %v5453, %v5849
        %5851 = vmatmul.mubr.f32.gmra.mxu0 %v5850
        %v5852 = vpop.f32.mrf.mxu0
        %v5853 = vadd.f32 %v5726, %v5852
        %v5854 = vpop.f32.mrf.mxu0
        %5855 = vmatprep.mubr.f32.mxu0 0.0
        %v5856 = vand.u32 %v5455, 4294901760
        %v5857 = vsub.f32 %v5455, %v5856
        %5858 = vmatmul.mubr.f32.gmra.mxu0 %v5857
        %v5859 = vpop.f32.mrf.mxu0
        %v5860 = vadd.f32 %v5732, %v5859
        %v5861 = vpop.f32.mrf.mxu0
        %5862 = vmatprep.mubr.f32.mxu0 0.0
        %v5863 = vand.u32 %v5457, 4294901760
        %v5864 = vsub.f32 %v5457, %v5863
        %5865 = vmatmul.mubr.f32.gmra.mxu0 %v5864
        %v5866 = vpop.f32.mrf.mxu0
        %v5867 = vadd.f32 %v5738, %v5866
        %v5868 = vpop.f32.mrf.mxu0
        %5869 = vdwg.mxu0
        %5870 = vmatprep.subr.mxu0 0.0
        %5871 = vmatpush1.msra.mxu0 0.0
        %5872 = vmatprep.subr.mxu0 0.0
        %5873 = vmatpush1.msra.mxu0 0.0
        %5874 = vmatprep.subr.mxu0 0.0
        %5875 = vmatpush1.msra.mxu0 0.0
        %5876 = vmatprep.subr.mxu0 0.0
        %5877 = vmatpush1.msra.mxu0 0.0
        %5878 = vmatprep.subr.mxu0 0.0
        %5879 = vmatpush1.msra.mxu0 0.0
        %5880 = vmatprep.subr.mxu0 0.0
        %5881 = vmatpush1.msra.mxu0 0.0
        %5882 = vmatprep.subr.mxu0 0.0
        %5883 = vmatpush1.msra.mxu0 0.0
        %5884 = vmatprep.subr.mxu0 0.0
        %5885 = vmatpush1.msra.mxu0 0.0
        %5886 = vmatprep.subr.mxu0 0.0
        %5887 = vmatpush1.msra.mxu0 0.0
        %5888 = vmatprep.subr.mxu0 0.0
        %5889 = vmatpush1.msra.mxu0 0.0
        %5890 = vmatprep.subr.mxu0 0.0
        %5891 = vmatpush1.msra.mxu0 0.0
        %5892 = vmatprep.subr.mxu0 0.0
        %5893 = vmatpush1.msra.mxu0 0.0
        %5894 = vmatprep.subr.mxu0 0.0
        %v5895 = vand.u32 %v5413, 4294901760
        %5896 = vmatpush1.msra.mxu0 %v5895
        %5897 = vmatprep.subr.mxu0 0.0
        %v5898 = vand.u32 %v5412, 4294901760
        %5899 = vmatpush1.msra.mxu0 %v5898
        %5900 = vmatprep.subr.mxu0 0.0
        %v5901 = vand.u32 %v5411, 4294901760
        %5902 = vmatpush1.msra.mxu0 %v5901
        %5903 = vmatprep.subr.mxu0 0.0
        %v5904 = vand.u32 %v5410, 4294901760
        %5905 = vmatpush1.msra.mxu0 %v5904
        %5906 = vmatprep.subr.mxu0 0.0
        %5907 = vmatpush2.msra.mxu0 0.0
        %5908 = vmatprep.subr.mxu0 0.0
        %5909 = vmatpush2.msra.mxu0 0.0
        %5910 = vmatprep.subr.mxu0 0.0
        %5911 = vmatpush2.msra.mxu0 0.0
        %5912 = vmatprep.subr.mxu0 0.0
        %5913 = vmatpush2.msra.mxu0 0.0
        %5914 = vmatprep.subr.mxu0 0.0
        %5915 = vmatpush2.msra.mxu0 0.0
        %5916 = vmatprep.subr.mxu0 0.0
        %5917 = vmatpush2.msra.mxu0 0.0
        %5918 = vmatprep.subr.mxu0 0.0
        %5919 = vmatpush2.msra.mxu0 0.0
        %5920 = vmatprep.subr.mxu0 0.0
        %5921 = vmatpush2.msra.mxu0 0.0
        %5922 = vmatprep.subr.mxu0 0.0
        %5923 = vmatpush2.msra.mxu0 0.0
        %5924 = vmatprep.subr.mxu0 0.0
        %5925 = vmatpush2.msra.mxu0 0.0
        %5926 = vmatprep.subr.mxu0 0.0
        %5927 = vmatpush2.msra.mxu0 0.0
        %5928 = vmatprep.subr.mxu0 0.0
        %5929 = vmatpush2.msra.mxu0 0.0
        %5930 = vmatprep.subr.mxu0 0.0
        %5931 = vmatpush2.msra.mxu0 0.0
        %5932 = vmatprep.subr.mxu0 0.0
        %5933 = vmatpush2.msra.mxu0 0.0
        %5934 = vmatprep.subr.mxu0 0.0
        %5935 = vmatpush2.msra.mxu0 0.0
        %5936 = vmatprep.subr.mxu0 0.0
        %5937 = vmatpush2.msra.mxu0 0.0
        %5938 = vmatprep.mubr.f32.mxu0 0.0
        %v5939 = vand.u32 %v5443, 4294901760
        %v5940 = vsub.f32 %v5443, %v5939
        %v5941 = vand.u32 %v5940, 4294901760
        %5942 = vmatmul.mubr.f32.gmra.mxu0 %v5941
        %v5943 = vpop.f32.mrf.mxu0
        %v5944 = vadd.f32 %v5818, %v5943
        %v5945 = vpop.f32.mrf.mxu0
        %5946 = vmatprep.mubr.f32.mxu0 0.0
        %v5947 = vand.u32 %v5445, 4294901760
        %v5948 = vsub.f32 %v5445, %v5947
        %v5949 = vand.u32 %v5948, 4294901760
        %5950 = vmatmul.mubr.f32.gmra.mxu0 %v5949
        %v5951 = vpop.f32.mrf.mxu0
        %v5952 = vadd.f32 %v5825, %v5951
        %v5953 = vpop.f32.mrf.mxu0
        %5954 = vmatprep.mubr.f32.mxu0 0.0
        %v5955 = vand.u32 %v5447, 4294901760
        %v5956 = vsub.f32 %v5447, %v5955
        %v5957 = vand.u32 %v5956, 4294901760
        %5958 = vmatmul.mubr.f32.gmra.mxu0 %v5957
        %v5959 = vpop.f32.mrf.mxu0
        %v5960 = vadd.f32 %v5832, %v5959
        %v5961 = vpop.f32.mrf.mxu0
        %5962 = vmatprep.mubr.f32.mxu0 0.0
        %v5963 = vand.u32 %v5449, 4294901760
        %v5964 = vsub.f32 %v5449, %v5963
        %v5965 = vand.u32 %v5964, 4294901760
        %5966 = vmatmul.mubr.f32.gmra.mxu0 %v5965
        %v5967 = vpop.f32.mrf.mxu0
        %v5968 = vadd.f32 %v5839, %v5967
        %v5969 = vpop.f32.mrf.mxu0
        %5970 = vmatprep.mubr.f32.mxu0 0.0
        %v5971 = vand.u32 %v5451, 4294901760
        %v5972 = vsub.f32 %v5451, %v5971
        %v5973 = vand.u32 %v5972, 4294901760
        %5974 = vmatmul.mubr.f32.gmra.mxu0 %v5973
        %v5975 = vpop.f32.mrf.mxu0
        %v5976 = vadd.f32 %v5846, %v5975
        %v5977 = vpop.f32.mrf.mxu0
        %5978 = vmatprep.mubr.f32.mxu0 0.0
        %v5979 = vand.u32 %v5453, 4294901760
        %v5980 = vsub.f32 %v5453, %v5979
        %v5981 = vand.u32 %v5980, 4294901760
        %5982 = vmatmul.mubr.f32.gmra.mxu0 %v5981
        %v5983 = vpop.f32.mrf.mxu0
        %v5984 = vadd.f32 %v5853, %v5983
        %v5985 = vpop.f32.mrf.mxu0
        %5986 = vmatprep.mubr.f32.mxu0 0.0
        %v5987 = vand.u32 %v5455, 4294901760
        %v5988 = vsub.f32 %v5455, %v5987
        %v5989 = vand.u32 %v5988, 4294901760
        %5990 = vmatmul.mubr.f32.gmra.mxu0 %v5989
        %v5991 = vpop.f32.mrf.mxu0
        %v5992 = vadd.f32 %v5860, %v5991
        %v5993 = vpop.f32.mrf.mxu0
        %5994 = vmatprep.mubr.f32.mxu0 0.0
        %v5995 = vand.u32 %v5457, 4294901760
        %v5996 = vsub.f32 %v5457, %v5995
        %v5997 = vand.u32 %v5996, 4294901760
        %5998 = vmatmul.mubr.f32.gmra.mxu0 %v5997
        %v5999 = vpop.f32.mrf.mxu0
        %v6000 = vadd.f32 %v5867, %v5999
        %v6001 = vpop.f32.mrf.mxu0
        %6002 = vdwg.mxu0
        %6003 = vmatprep.subr.mxu0 0.0
        %6004 = vmatpush1.msra.mxu0 0.0
        %6005 = vmatprep.subr.mxu0 0.0
        %6006 = vmatpush1.msra.mxu0 0.0
        %6007 = vmatprep.subr.mxu0 0.0
        %6008 = vmatpush1.msra.mxu0 0.0
        %6009 = vmatprep.subr.mxu0 0.0
        %6010 = vmatpush1.msra.mxu0 0.0
        %6011 = vmatprep.subr.mxu0 0.0
        %6012 = vmatpush1.msra.mxu0 0.0
        %6013 = vmatprep.subr.mxu0 0.0
        %6014 = vmatpush1.msra.mxu0 0.0
        %6015 = vmatprep.subr.mxu0 0.0
        %6016 = vmatpush1.msra.mxu0 0.0
        %6017 = vmatprep.subr.mxu0 0.0
        %6018 = vmatpush1.msra.mxu0 0.0
        %6019 = vmatprep.subr.mxu0 0.0
        %6020 = vmatpush1.msra.mxu0 0.0
        %6021 = vmatprep.subr.mxu0 0.0
        %6022 = vmatpush1.msra.mxu0 0.0
        %6023 = vmatprep.subr.mxu0 0.0
        %6024 = vmatpush1.msra.mxu0 0.0
        %6025 = vmatprep.subr.mxu0 0.0
        %6026 = vmatpush1.msra.mxu0 0.0
        %6027 = vmatprep.subr.mxu0 0.0
        %v6028 = vand.u32 %v5413, 4294901760
        %v6029 = vsub.f32 %v5413, %v6028
        %v6030 = vand.u32 %v6029, 4294901760
        %6031 = vmatpush1.msra.mxu0 %v6030
        %6032 = vmatprep.subr.mxu0 0.0
        %v6033 = vand.u32 %v5412, 4294901760
        %v6034 = vsub.f32 %v5412, %v6033
        %v6035 = vand.u32 %v6034, 4294901760
        %6036 = vmatpush1.msra.mxu0 %v6035
        %6037 = vmatprep.subr.mxu0 0.0
        %v6038 = vand.u32 %v5411, 4294901760
        %v6039 = vsub.f32 %v5411, %v6038
        %v6040 = vand.u32 %v6039, 4294901760
        %6041 = vmatpush1.msra.mxu0 %v6040
        %6042 = vmatprep.subr.mxu0 0.0
        %v6043 = vand.u32 %v5410, 4294901760
        %v6044 = vsub.f32 %v5410, %v6043
        %v6045 = vand.u32 %v6044, 4294901760
        %6046 = vmatpush1.msra.mxu0 %v6045
        %6047 = vmatprep.subr.mxu0 0.0
        %6048 = vmatpush2.msra.mxu0 0.0
        %6049 = vmatprep.subr.mxu0 0.0
        %6050 = vmatpush2.msra.mxu0 0.0
        %6051 = vmatprep.subr.mxu0 0.0
        %6052 = vmatpush2.msra.mxu0 0.0
        %6053 = vmatprep.subr.mxu0 0.0
        %6054 = vmatpush2.msra.mxu0 0.0
        %6055 = vmatprep.subr.mxu0 0.0
        %6056 = vmatpush2.msra.mxu0 0.0
        %6057 = vmatprep.subr.mxu0 0.0
        %6058 = vmatpush2.msra.mxu0 0.0
        %6059 = vmatprep.subr.mxu0 0.0
        %6060 = vmatpush2.msra.mxu0 0.0
        %6061 = vmatprep.subr.mxu0 0.0
        %6062 = vmatpush2.msra.mxu0 0.0
        %6063 = vmatprep.subr.mxu0 0.0
        %6064 = vmatpush2.msra.mxu0 0.0
        %6065 = vmatprep.subr.mxu0 0.0
        %6066 = vmatpush2.msra.mxu0 0.0
        %6067 = vmatprep.subr.mxu0 0.0
        %6068 = vmatpush2.msra.mxu0 0.0
        %6069 = vmatprep.subr.mxu0 0.0
        %6070 = vmatpush2.msra.mxu0 0.0
        %6071 = vmatprep.subr.mxu0 0.0
        %6072 = vmatpush2.msra.mxu0 0.0
        %6073 = vmatprep.subr.mxu0 0.0
        %6074 = vmatpush2.msra.mxu0 0.0
        %6075 = vmatprep.subr.mxu0 0.0
        %6076 = vmatpush2.msra.mxu0 0.0
        %6077 = vmatprep.subr.mxu0 0.0
        %6078 = vmatpush2.msra.mxu0 0.0
        %6079 = vmatprep.mubr.f32.mxu0 0.0
        %v6080 = vand.u32 %v5443, 4294901760
        %6081 = vmatmul.mubr.f32.gmra.mxu0 %v6080
        %v6082 = vpop.f32.mrf.mxu0
        %v6083 = vadd.f32 %v5944, %v6082
        %v6084 = vpop.f32.mrf.mxu0
        %6085 = vmatprep.mubr.f32.mxu0 0.0
        %v6086 = vand.u32 %v5445, 4294901760
        %6087 = vmatmul.mubr.f32.gmra.mxu0 %v6086
        %v6088 = vpop.f32.mrf.mxu0
        %v6089 = vadd.f32 %v5952, %v6088
        %v6090 = vpop.f32.mrf.mxu0
        %6091 = vmatprep.mubr.f32.mxu0 0.0
        %v6092 = vand.u32 %v5447, 4294901760
        %6093 = vmatmul.mubr.f32.gmra.mxu0 %v6092
        %v6094 = vpop.f32.mrf.mxu0
        %v6095 = vadd.f32 %v5960, %v6094
        %v6096 = vpop.f32.mrf.mxu0
        %6097 = vmatprep.mubr.f32.mxu0 0.0
        %v6098 = vand.u32 %v5449, 4294901760
        %6099 = vmatmul.mubr.f32.gmra.mxu0 %v6098
        %v6100 = vpop.f32.mrf.mxu0
        %v6101 = vadd.f32 %v5968, %v6100
        %v6102 = vpop.f32.mrf.mxu0
        %6103 = vmatprep.mubr.f32.mxu0 0.0
        %v6104 = vand.u32 %v5451, 4294901760
        %6105 = vmatmul.mubr.f32.gmra.mxu0 %v6104
        %v6106 = vpop.f32.mrf.mxu0
        %v6107 = vadd.f32 %v5976, %v6106
        %v6108 = vpop.f32.mrf.mxu0
        %6109 = vmatprep.mubr.f32.mxu0 0.0
        %v6110 = vand.u32 %v5453, 4294901760
        %6111 = vmatmul.mubr.f32.gmra.mxu0 %v6110
        %v6112 = vpop.f32.mrf.mxu0
        %v6113 = vadd.f32 %v5984, %v6112
        %v6114 = vpop.f32.mrf.mxu0
        %6115 = vmatprep.mubr.f32.mxu0 0.0
        %v6116 = vand.u32 %v5455, 4294901760
        %6117 = vmatmul.mubr.f32.gmra.mxu0 %v6116
        %v6118 = vpop.f32.mrf.mxu0
        %v6119 = vadd.f32 %v5992, %v6118
        %v6120 = vpop.f32.mrf.mxu0
        %6121 = vmatprep.mubr.f32.mxu0 0.0
        %v6122 = vand.u32 %v5457, 4294901760
        %6123 = vmatmul.mubr.f32.gmra.mxu0 %v6122
        %v6124 = vpop.f32.mrf.mxu0
        %v6125 = vadd.f32 %v6000, %v6124
        %v6126 = vpop.f32.mrf.mxu0
        %6127 = vdwg.mxu0
        %6128 = vmatprep.subr.mxu0 0.0
        %6129 = vmatpush1.msra.mxu0 0.0
        %6130 = vmatprep.subr.mxu0 0.0
        %6131 = vmatpush1.msra.mxu0 0.0
        %6132 = vmatprep.subr.mxu0 0.0
        %6133 = vmatpush1.msra.mxu0 0.0
        %6134 = vmatprep.subr.mxu0 0.0
        %6135 = vmatpush1.msra.mxu0 0.0
        %6136 = vmatprep.subr.mxu0 0.0
        %6137 = vmatpush1.msra.mxu0 0.0
        %6138 = vmatprep.subr.mxu0 0.0
        %6139 = vmatpush1.msra.mxu0 0.0
        %6140 = vmatprep.subr.mxu0 0.0
        %6141 = vmatpush1.msra.mxu0 0.0
        %6142 = vmatprep.subr.mxu0 0.0
        %6143 = vmatpush1.msra.mxu0 0.0
        %6144 = vmatprep.subr.mxu0 0.0
        %6145 = vmatpush1.msra.mxu0 0.0
        %6146 = vmatprep.subr.mxu0 0.0
        %6147 = vmatpush1.msra.mxu0 0.0
        %6148 = vmatprep.subr.mxu0 0.0
        %6149 = vmatpush1.msra.mxu0 0.0
        %6150 = vmatprep.subr.mxu0 0.0
        %6151 = vmatpush1.msra.mxu0 0.0
        %6152 = vmatprep.subr.mxu0 0.0
        %v6153 = vand.u32 %v5413, 4294901760
        %6154 = vmatpush1.msra.mxu0 %v6153
        %6155 = vmatprep.subr.mxu0 0.0
        %v6156 = vand.u32 %v5412, 4294901760
        %6157 = vmatpush1.msra.mxu0 %v6156
        %6158 = vmatprep.subr.mxu0 0.0
        %v6159 = vand.u32 %v5411, 4294901760
        %6160 = vmatpush1.msra.mxu0 %v6159
        %6161 = vmatprep.subr.mxu0 0.0
        %v6162 = vand.u32 %v5410, 4294901760
        %6163 = vmatpush1.msra.mxu0 %v6162
        %6164 = vmatprep.subr.mxu0 0.0
        %6165 = vmatpush2.msra.mxu0 0.0
        %6166 = vmatprep.subr.mxu0 0.0
        %6167 = vmatpush2.msra.mxu0 0.0
        %6168 = vmatprep.subr.mxu0 0.0
        %6169 = vmatpush2.msra.mxu0 0.0
        %6170 = vmatprep.subr.mxu0 0.0
        %6171 = vmatpush2.msra.mxu0 0.0
        %6172 = vmatprep.subr.mxu0 0.0
        %6173 = vmatpush2.msra.mxu0 0.0
        %6174 = vmatprep.subr.mxu0 0.0
        %6175 = vmatpush2.msra.mxu0 0.0
        %6176 = vmatprep.subr.mxu0 0.0
        %6177 = vmatpush2.msra.mxu0 0.0
        %6178 = vmatprep.subr.mxu0 0.0
        %6179 = vmatpush2.msra.mxu0 0.0
        %6180 = vmatprep.subr.mxu0 0.0
        %6181 = vmatpush2.msra.mxu0 0.0
        %6182 = vmatprep.subr.mxu0 0.0
        %6183 = vmatpush2.msra.mxu0 0.0
        %6184 = vmatprep.subr.mxu0 0.0
        %6185 = vmatpush2.msra.mxu0 0.0
        %6186 = vmatprep.subr.mxu0 0.0
        %6187 = vmatpush2.msra.mxu0 0.0
        %6188 = vmatprep.subr.mxu0 0.0
        %6189 = vmatpush2.msra.mxu0 0.0
        %6190 = vmatprep.subr.mxu0 0.0
        %6191 = vmatpush2.msra.mxu0 0.0
        %6192 = vmatprep.subr.mxu0 0.0
        %6193 = vmatpush2.msra.mxu0 0.0
        %6194 = vmatprep.subr.mxu0 0.0
        %6195 = vmatpush2.msra.mxu0 0.0
        %6196 = vmatprep.mubr.f32.mxu0 0.0
        %v6197 = vand.u32 %v5443, 4294901760
        %6198 = vmatmul.mubr.f32.gmra.mxu0 %v6197
        %v6199 = vpop.f32.mrf.mxu0
        %v6200 = vadd.f32 %v6083, %v6199
        %v6201 = vpop.f32.mrf.mxu0
        %6202 = vmatprep.mubr.f32.mxu0 0.0
        %v6203 = vand.u32 %v5445, 4294901760
        %6204 = vmatmul.mubr.f32.gmra.mxu0 %v6203
        %v6205 = vpop.f32.mrf.mxu0
        %v6206 = vadd.f32 %v6089, %v6205
        %v6207 = vpop.f32.mrf.mxu0
        %6208 = vmatprep.mubr.f32.mxu0 0.0
        %v6209 = vand.u32 %v5447, 4294901760
        %6210 = vmatmul.mubr.f32.gmra.mxu0 %v6209
        %v6211 = vpop.f32.mrf.mxu0
        %v6212 = vadd.f32 %v6095, %v6211
        %v6213 = vpop.f32.mrf.mxu0
        %6214 = vmatprep.mubr.f32.mxu0 0.0
        %v6215 = vand.u32 %v5449, 4294901760
        %6216 = vmatmul.mubr.f32.gmra.mxu0 %v6215
        %v6217 = vpop.f32.mrf.mxu0
        %v6218 = vadd.f32 %v6101, %v6217
        %v6219 = vpop.f32.mrf.mxu0
        %6220 = vmatprep.mubr.f32.mxu0 0.0
        %v6221 = vand.u32 %v5451, 4294901760
        %6222 = vmatmul.mubr.f32.gmra.mxu0 %v6221
        %v6223 = vpop.f32.mrf.mxu0
        %v6224 = vadd.f32 %v6107, %v6223
        %v6225 = vpop.f32.mrf.mxu0
        %6226 = vmatprep.mubr.f32.mxu0 0.0
        %v6227 = vand.u32 %v5453, 4294901760
        %6228 = vmatmul.mubr.f32.gmra.mxu0 %v6227
        %v6229 = vpop.f32.mrf.mxu0
        %v6230 = vadd.f32 %v6113, %v6229
        %v6231 = vpop.f32.mrf.mxu0
        %6232 = vmatprep.mubr.f32.mxu0 0.0
        %v6233 = vand.u32 %v5455, 4294901760
        %6234 = vmatmul.mubr.f32.gmra.mxu0 %v6233
        %v6235 = vpop.f32.mrf.mxu0
        %v6236 = vadd.f32 %v6119, %v6235
        %v6237 = vpop.f32.mrf.mxu0
        %6238 = vmatprep.mubr.f32.mxu0 0.0
        %v6239 = vand.u32 %v5457, 4294901760
        %6240 = vmatmul.mubr.f32.gmra.mxu0 %v6239
        %v6241 = vpop.f32.mrf.mxu0
        %v6242 = vadd.f32 %v6125, %v6241
        %v6243 = vpop.f32.mrf.mxu0
        %6244 = vdwg.mxu0
        %v6245 = vmax.f32 %v6200, 0.0
        %v6246 = vmax.f32 %v6206, 0.0
        %v6247 = vmax.f32 %v6212, 0.0
        %v6248 = vmax.f32 %v6218, 0.0
        %v6249 = vmax.f32 %v6224, 0.0
        %v6250 = vmax.f32 %v6230, 0.0
        %v6251 = vmax.f32 %v6236, 0.0
        %v6252 = vmax.f32 %v6242, 0.0
        %v6253 = vmin.f32 %v6245, 1.0
        %v6254 = vmin.f32 %v6246, 1.0
        %v6255 = vmin.f32 %v6247, 1.0
        %v6256 = vmin.f32 %v6248, 1.0
        %v6257 = vmin.f32 %v6249, 1.0
        %v6258 = vmin.f32 %v6250, 1.0
        %v6259 = vmin.f32 %v6251, 1.0
        %v6260 = vmin.f32 %v6252, 1.0
        %6261 = vst [vmem:[%s152] sm:$0xff] %v6253
        %6262 = vst [vmem:[%s152 + $0x8] sm:$0xff] %v6254
        %6263 = vst [vmem:[%s152 + $0x10] sm:$0xff] %v6255
        %6264 = vst [vmem:[%s152 + $0x18] sm:$0xff] %v6256
        %6265 = vst [vmem:[%s152 + $0x20] sm:$0xff] %v6257
        %6266 = vst [vmem:[%s152 + $0x28] sm:$0xff] %v6258
        %6267 = vst [vmem:[%s152 + $0x30] sm:$0xff] %v6259
        %6268 = vst [vmem:[%s152 + $0x38] sm:$0xff] %v6260
        %s6269 = sand.u32 %s72, 1
        %s6270 = scalar_lea.sflag [#allocation4], %s6269
        %s6271 = sand.u32 %s72, 1
        %s6272 = smul.addr %s6271, 64
        %s6273 = scalar_lea.vmem [#allocation5], %s6272
        // Predicated region
        $region33: #{tpu_custom_call.1} parent=27 // pred_check
          %p6274 = pneg %p82
        $region34: #{tpu_custom_call.1} parent=27 // pred_check_branch
          %6276 = sbr.rel (%p6274) target = $region36
        $region35: #{tpu_custom_call.1} parent=27 // pred_region
          %s6277 = smul.u32 8, %s17
          %s6279 = ssub.s32 1024, 1024
          %6280 = vsyncadd %s6270, %s6279
          %s6281 = smul.addr %s6277, 128
          %s6282 = scalar_lea.hbm %s2, %s6281
          %s6283 = sshll.u32 %s6273, 4
          %s6284 = int_to_ptr.vmem [resolvable:$true] %s6283
          %6289 = dma.vmem_to_hbm [thread:$0]  %s6284, 1024, %s6282, %s6270, 128, 128, 8
        $region36: #{tpu_custom_call.1} parent=27 // pred_fallthru
          _
      $region28: #{tpu_custom_call.1} parent=5 // pred_fallthru
        _
      %p6290 = scmp.le.s32.totalorder 2, %s12
      // Predicated region
      $region37: #{tpu_custom_call.1} parent=5 // pred_check
        %p6291 = pneg %p6290
      $region38: #{tpu_custom_call.1} parent=5 // pred_check_branch
        %6293 = sbr.rel (%p6291) target = $region40
      $region39: #{tpu_custom_call.1} parent=5 // pred_region
        %s6294 = ssub.s32 %s12, 2
        // Predicated region
        $region41: #{tpu_custom_call.1} parent=39 // pred_check
          %p6295 = pneg %p88
        $region42: #{tpu_custom_call.1} parent=39 // pred_check_branch
          %6297 = sbr.rel (%p6295) target = $region44
        $region43: #{tpu_custom_call.1} parent=39 // pred_region
          %s6298 = sand.u32 %s73, 1
          %s6299 = scalar_lea.sflag [#allocation4], %s6298
          %s6300 = sand.u32 %s73, 1
          %s6301 = smul.addr %s6300, 64
          %s6302 = scalar_lea.vmem [#allocation5], %s6301
          %6303 = dma.done %s6299, 1024
        $region44: #{tpu_custom_call.1} parent=39 // pred_fallthru
          _
      $region40: #{tpu_custom_call.1} parent=5 // pred_fallthru
        _
    $region6: #{tpu_custom_call.1} parent=1 // loop_footer
      %s16 = sadd.s32 1, %s12
    $region7: #{tpu_custom_call.1} parent=1 // loop_footer_branch
      %11 = sbr.rel target = $region3
    $region8: #{tpu_custom_call.1} parent=1 // loop_exit
      _
    %6304 = vsyncpa [#allocation3], 1
    %s6305 = scalar_lea.sflag [#allocation3], 1
    %6306 = vsyncpa %s6305, 1
    %6307 = vsyncpa [#allocation4], 1
    %s6308 = scalar_lea.sflag [#allocation4], 1
    %6309 = vsyncpa %s6308, 1

</llo_original>
